<compile_context>
chip_gen: v6e
topology: v6e:2x2x1
jax: 0.10.0
libtpu: 0.0.40
codegen_flags: <defaults>
</compile_context>

<pallas_src>
import functools
import numpy as np

import jax
import jax.numpy as jnp
from jax.experimental import pallas as pl
from jax.experimental.pallas import tpu as pltpu

# ----------------------- small synthetic configuration -----------------------
B        = 2     # batch
N_MELS   = 16    # input_channels (original config: 100)
T_FRAMES = 16    # mel frames
DIM      = 128   # backbone dim (original: 512)
INTER    = 256   # ConvNeXt intermediate_dim (original: 1536)
N_LAYERS = 2     # ConvNeXt blocks (original: 8)
N_FFT    = 64    # head n_fft (original: 1024)
HOP      = 16    # head hop_length (original: 256)
KSIZE    = 7     # conv kernel size (fixed in Vocos)

N_FREQ   = N_FFT // 2 + 1
R_BLK    = N_FFT // HOP               # overlap factor (4 in the real config too)
PAD      = (N_FFT - HOP) // 2         # "same" padding of the ISTFT
T_BIAS   = 88                         # frames used by make_denoising_vector


# ------------------------------ kernel helpers -------------------------------
def _gelu(x):
    # tanh-approximate GELU: tanh runs on the EUP instead of a long VALU
    # polynomial chain (perf-review item; PyTorch nn.GELU() is erf-exact,
    # deviation is ~1e-3 in activation space).
    c = 0.7978845608028654  # sqrt(2/pi)
    return 0.5 * x * (1.0 + jnp.tanh(c * (x + 0.044715 * x * x * x)))


def _layernorm(x, w, b, eps=1e-6):
    mu = jnp.mean(x, axis=-1, keepdims=True)
    xc = x - mu
    var = jnp.mean(xc * xc, axis=-1, keepdims=True)
    return xc * jax.lax.rsqrt(var + eps) * w + b


# ------------------------------ backbone kernel ------------------------------
def _backbone_kernel(mel_ref, mask_ref, embw_ref, embb_ref, n0w_ref, n0b_ref,
                     dww_ref, dwb_ref, lnw_ref, lnb_ref,
                     p1w_ref, p1b_ref, p2w_ref, p2b_ref, gamma_ref,
                     nfw_ref, nfb_ref, out_ref, *, ksize):
    l = pl.program_id(0)
    n_layers = pl.num_programs(0)
    rows = out_ref.shape[0]
    half = (ksize - 1) // 2

    # ---- grid step 0: embed Conv1d(k=7) as a single im2col matmul + LN ----
    @pl.when(l == 0)
    def _():
        h = jnp.dot(mel_ref[...], embw_ref[...],
                    preferred_element_type=jnp.float32) + embb_ref[...]
        out_ref[...] = _layernorm(h, n0w_ref[...], n0b_ref[...])

    x = out_ref[...]                                      # (rows, dim) f32

    # ---- ConvNeXt block `l` (this layer's weights streamed into VMEM) ----
    # depthwise Conv1d(k=7, groups=dim, "same" padding) via sublane rolls on the
    # XLU; mask_ref zeroes taps that would cross a batch-element boundary.
    dw = dww_ref[0]                                       # (ksize, dim) f32
    y = x * dw[half:half + 1, :]
    for j in range(ksize):
        d = j - half
        if d == 0:
            continue
        shifted = pltpu.roll(x, (-d) % rows, 0)           # shifted[r] == x[r + d]
        y = y + shifted * mask_ref[:, j:j + 1] * dw[j:j + 1, :]
    y = y + dwb_ref[0]

    y = _layernorm(y, lnw_ref[0], lnb_ref[0])
    y = jnp.dot(y.astype(jnp.bfloat16), p1w_ref[0],
                preferred_element_type=jnp.float32) + p1b_ref[0]
    y = _gelu(y)
    y = jnp.dot(y.astype(jnp.bfloat16), p2w_ref[0],
                preferred_element_type=jnp.float32) + p2b_ref[0]
    x = x + gamma_ref[0] * y

    @pl.when(l < n_layers - 1)
    def _():
        out_ref[...] = x

    @pl.when(l == n_layers - 1)
    def _():
        out_ref[...] = _layernorm(x, nfw_ref[...], nfb_ref[...])


def _im2col_time(x, k):
    """x: (B, T, C) -> (B*T, k*C) with zero 'same' padding along time (layout glue)."""
    b, t, c = x.shape
    half = (k - 1) // 2
    xp = jnp.pad(x, ((0, 0), (half, half), (0, 0)))
    cols = [xp[:, j:j + t, :] for j in range(k)]
    return jnp.concatenate(cols, axis=-1).reshape(b * t, k * c)


def _dwconv_boundary_masks(n_batch, t, k):
    """(rows, k) float mask; 0 where tap j of row r crosses a batch-element edge."""
    rows = n_batch * t
    tt = np.arange(rows) % t
    half = (k - 1) // 2
    m = np.zeros((rows, k), np.float32)
    for j in range(k):
        d = j - half
        m[:, j] = ((tt + d >= 0) & (tt + d < t)).astype(np.float32)
    return jnp.asarray(m)


def backbone_forward(mel_tc, p):
    """mel_tc: (B, T, n_mels) f32 -> (B, T, DIM) f32."""
    b, t, c = mel_tc.shape
    rows = b * t

    im2col = _im2col_time(mel_tc, KSIZE).astype(jnp.bfloat16)   # (rows, K*C)
    masks = _dwconv_boundary_masks(b, t, KSIZE)                 # (rows, K)
    emb_w2d = p['emb_w'].reshape(KSIZE * c, DIM).astype(jnp.bfloat16)
    pw1_bf = p['pw1_w'].astype(jnp.bfloat16)
    pw2_bf = p['pw2_w'].astype(jnp.bfloat16)

    def cspec(shape):          # whole array, constant block index across layers
        nd = len(shape)
        return pl.BlockSpec(shape, lambda l: (0,) * nd)

    def lspec(shape):          # per-layer streamed block (one layer resident)
        nd = len(shape)
        return pl.BlockSpec(shape, lambda l: (l,) + (0,) * (nd - 1))

    kernel = functools.partial(_backbone_kernel, ksize=KSIZE)

    out = pl.pallas_call(
        kernel,
        out_shape=jax.ShapeDtypeStruct((rows, DIM), jnp.float32),
        grid=(N_LAYERS,),
        in_specs=[
            cspec((rows, KSIZE * c)),
            cspec((rows, KSIZE)),
            cspec((KSIZE * c, DIM)), cspec((1, DIM)),
            cspec((1, DIM)), cspec((1, DIM)),
            lspec((1, KSIZE, DIM)), lspec((1, 1, DIM)),
            lspec((1, 1, DIM)), lspec((1, 1, DIM)),
            lspec((1, DIM, INTER)), lspec((1, 1, INTER)),
            lspec((1, INTER, DIM)), lspec((1, 1, DIM)),
            lspec((1, 1, DIM)),
            cspec((1, DIM)), cspec((1, DIM)),
        ],
        out_specs=pl.BlockSpec((rows, DIM), lambda l: (0, 0)),
        compiler_params=pltpu.CompilerParams(
            dimension_semantics=("arbitrary",),      # layers are sequential
            vmem_limit_bytes=48 * 1024 * 1024),
    )(im2col, masks, emb_w2d, p['emb_b'], p['norm0_w'], p['norm0_b'],
      p['dw_w'], p['dw_b'], p['ln_w'], p['ln_b'],
      pw1_bf, p['pw1_b'], pw2_bf, p['pw2_b'], p['gamma'],
      p['normf_w'], p['normf_b'])
    return out.reshape(b, t, DIM)


# --------------------------- head + ISTFT kernel ------------------------------
def _istft_constants(t):
    """DFT-synthesis matrices (hann folded in) and reciprocal OLA envelope."""
    n = np.arange(N_FFT)
    k = np.arange(N_FREQ)
    ang = 2.0 * np.pi * np.outer(k, n) / N_FFT
    wsum = np.ones((N_FREQ, 1), np.float64)
    wsum[1:-1] = 2.0                                  # DC / Nyquist counted once
    cr = wsum * np.cos(ang) / N_FFT                   # irfft real part
    ci = -wsum * np.sin(ang) / N_FFT                  # irfft imag part (sin=0 at DC/Nyq)
    win = 0.5 * (1.0 - np.cos(2.0 * np.pi * n / N_FFT))   # periodic hann
    crw = cr * win[None, :]
    ciw = ci * win[None, :]
    l_full = (t + R_BLK - 1) * HOP                    # == (t-1)*HOP + N_FFT
    env = np.zeros(l_full)
    for f in range(t):
        env[f * HOP:f * HOP + N_FFT] += win ** 2
    # reciprocal envelope on the *uncropped* timeline; the only exact zero
    # (sample 0) is removed by the "same"-padding crop, so set its recip to 0.
    inv_env = np.where(env > 1e-11, 1.0 / np.maximum(env, 1e-11), 0.0)
    inv_env2d = inv_env.reshape(1, t + R_BLK - 1, HOP)
    return (jnp.asarray(crw, jnp.float32), jnp.asarray(ciw, jnp.float32),
            jnp.asarray(inv_env2d, jnp.float32))


def _head_istft_kernel(feat_ref, owm_ref, owp_ref, obm_ref, obp_ref, bias_ref,
                       crw_ref, ciw_ref, inv_env_ref, out_ref,
                       *, n_batch, n_frames):
    # head Linear (bf16 operands, f32 accumulation)
    f = feat_ref[...].astype(jnp.bfloat16)                       # (B*T, dim)
    mag = jnp.exp(jnp.dot(f, owm_ref[...],
                          preferred_element_type=jnp.float32) + obm_ref[...])
    ph = jnp.dot(f, owp_ref[...],
                 preferred_element_type=jnp.float32) + obp_ref[...]
    # exp -> subtract denoise*bias -> clamp(0, 100)   (matches reference order)
    mag = jnp.clip(mag - bias_ref[...], 0.0, 100.0)
    re = mag * jnp.cos(ph)
    im = mag * jnp.sin(ph)
    # irfft + hann window as one f32 DFT-synthesis matmul pair -> (B*T, N_FFT)
    frames = (jnp.dot(re, crw_ref[...], preferred_element_type=jnp.float32)
              + jnp.dot(im, ciw_ref[...], preferred_element_type=jnp.float32))
    # overlap-add: out is the (hop-slot, HOP) view of the timeline, so column
    # block c of frame t lands on full row (t + c).  Only B*(N_FFT/HOP) shifted
    # block adds instead of a T-long serial lane-misaligned RMW chain.
    out_ref[...] = jnp.zeros(out_ref.shape, jnp.float32)
    for b in range(n_batch):
        fb = frames[b * n_frames:(b + 1) * n_frames, :]          # (T, N_FFT)
        for c in range(R_BLK):
            out_ref[b, c:c + n_frames, :] = (
                out_ref[b, c:c + n_frames, :] + fb[:, c * HOP:(c + 1) * HOP])
    # window-envelope normalization via precomputed reciprocal (no divides)
    out_ref[...] = out_ref[...] * inv_env_ref[...]


def head_istft_forward(feats, p, bias_vec, denoise):
    """feats: (B, T, DIM) -> wave (B, T*HOP)."""
    b, t, _ = feats.shape
    crw, ciw, inv_env2d = _istft_constants(t)

    feats_flat = feats.reshape(b * t, DIM)
    ow_mag = p['out_w'][:, :N_FREQ].astype(jnp.bfloat16)
    ow_ph = p['out_w'][:, N_FREQ:].astype(jnp.bfloat16)
    ob_mag = p['out_b'][:, :N_FREQ]
    ob_ph = p['out_b'][:, N_FREQ:]
    bias_scaled = jnp.float32(denoise) * bias_vec          # fold denoise scale here

    kernel = functools.partial(_head_istft_kernel, n_batch=b, n_frames=t)
    raw = pl.pallas_call(
        kernel,
        out_shape=jax.ShapeDtypeStruct((b, t + R_BLK - 1, HOP), jnp.float32),
        compiler_params=pltpu.CompilerParams(vmem_limit_bytes=48 * 1024 * 1024),
    )(feats_flat, ow_mag, ow_ph, ob_mag, ob_ph, bias_scaled, crw, ciw, inv_env2d)

    # "same"-padding crop: pure layout glue (row-major (hop-slot, HOP) == timeline)
    l_full = (t + R_BLK - 1) * HOP
    return raw.reshape(b, l_full)[:, PAD:PAD + t * HOP]


# -------------------------- module-level wrappers -----------------------------
def init_params(key):
    ks = jax.random.split(key, 10)
    nrm = lambda k, s, sc: jax.random.normal(k, s, jnp.float32) * sc
    return dict(
        emb_w=nrm(ks[0], (KSIZE, N_MELS, DIM), 0.02),
        emb_b=nrm(ks[1], (1, DIM), 0.02),
        norm0_w=jnp.ones((1, DIM), jnp.float32),
        norm0_b=jnp.zeros((1, DIM), jnp.float32),
        dw_w=nrm(ks[2], (N_LAYERS, KSIZE, DIM), 0.05),
        dw_b=nrm(ks[3], (N_LAYERS, 1, DIM), 0.02),
        ln_w=jnp.ones((N_LAYERS, 1, DIM), jnp.float32),
        ln_b=jnp.zeros((N_LAYERS, 1, DIM), jnp.float32),
        pw1_w=nrm(ks[4], (N_LAYERS, DIM, INTER), 0.02),
        pw1_b=nrm(ks[5], (N_LAYERS, 1, INTER), 0.02),
        pw2_w=nrm(ks[6], (N_LAYERS, INTER, DIM), 0.02),
        pw2_b=nrm(ks[7], (N_LAYERS, 1, DIM), 0.02),
        gamma=jnp.full((N_LAYERS, 1, DIM), 1.0 / N_LAYERS, jnp.float32),
        normf_w=jnp.ones((1, DIM), jnp.float32),
        normf_b=jnp.zeros((1, DIM), jnp.float32),
        out_w=nrm(ks[8], (DIM, 2 * N_FREQ), 0.02),
        out_b=nrm(ks[9], (1, 2 * N_FREQ), 0.02),
    )


def make_denoising_vector(p):
    """MelVocos.make_denoising_vector: backbone(zeros) -> exp(mag) -> clip -> frame 0."""
    mel_zero = jnp.zeros((1, T_BIAS, N_MELS), jnp.float32)
    feats = backbone_forward(mel_zero, p)                      # Pallas backbone
    x0 = feats[0, 0:1, :] @ p['out_w'] + p['out_b']            # init-time glue, frame 0 only
    mag_bias = jnp.minimum(jnp.exp(x0[:, :N_FREQ]), 100.0)
    return mag_bias                                            # (1, N_FREQ)


def melvocos_forward(mel_spec, params, bias_vec, denoise=0.0):
    """mel_spec: (B, n_mels, T) PyTorch layout -> wave (B, T*HOP)."""
    mel_tc = jnp.transpose(mel_spec, (0, 2, 1))                # -> (B, T, n_mels)
    feats = backbone_forward(mel_tc, params)
    return head_istft_forward(feats, params, bias_vec, denoise)


# TODO(synk): feature_extractor (MelSpectrogramFeatures) is only used by
# `reconstruct`, not `forward`, so it is not implemented here.

if __name__ == "__main__":
    key = jax.random.PRNGKey(0)
    kp, kx = jax.random.split(key)
    params = init_params(kp)
    mel_spec = jax.random.normal(kx, (B, N_MELS, T_FRAMES), jnp.float32)

    bias_vec = make_denoising_vector(params)
    wave = melvocos_forward(mel_spec, params, bias_vec, denoise=0.5)
    wave = jax.block_until_ready(wave)

    assert wave.shape == (B, T_FRAMES * HOP), wave.shape
    assert bool(jnp.all(jnp.isfinite(wave)))
    print("KERNEL_OK")
</pallas_src>

<mosaic_0001>
module attributes {stable_mosaic.version = 11 : i64} {
  func.func @_backbone_kernel(%arg0: i32, %arg1: memref<88x112xbf16, #tpu.memory_space<vmem>>, %arg2: memref<88x7xf32, #tpu.memory_space<vmem>>, %arg3: memref<112x128xbf16, #tpu.memory_space<vmem>>, %arg4: memref<1x128xf32, #tpu.memory_space<vmem>>, %arg5: memref<1x128xf32, #tpu.memory_space<vmem>>, %arg6: memref<1x128xf32, #tpu.memory_space<vmem>>, %arg7: memref<1x7x128xf32, #tpu.memory_space<vmem>>, %arg8: memref<1x1x128xf32, #tpu.memory_space<vmem>>, %arg9: memref<1x1x128xf32, #tpu.memory_space<vmem>>, %arg10: memref<1x1x128xf32, #tpu.memory_space<vmem>>, %arg11: memref<1x128x256xbf16, #tpu.memory_space<vmem>>, %arg12: memref<1x1x256xf32, #tpu.memory_space<vmem>>, %arg13: memref<1x256x128xbf16, #tpu.memory_space<vmem>>, %arg14: memref<1x1x128xf32, #tpu.memory_space<vmem>>, %arg15: memref<1x1x128xf32, #tpu.memory_space<vmem>>, %arg16: memref<1x128xf32, #tpu.memory_space<vmem>>, %arg17: memref<1x128xf32, #tpu.memory_space<vmem>>, %arg18: memref<88x128xf32, #tpu.memory_space<vmem>>) attributes {dimension_semantics = [#tpu.dimension_semantics<arbitrary>], iteration_bounds = array<i64: 2>, scalar_prefetch = 0 : i64, scratch_operands = 0 : i64, tpu.core_type = #tpu.core_type<tc>, window_params = [{pipeline_mode = #tpu.pipeline_mode<synchronous>, transform_indices = @transform_0, window_bounds = array<i64: 88, 112>}, {pipeline_mode = #tpu.pipeline_mode<synchronous>, transform_indices = @transform_1, window_bounds = array<i64: 88, 7>}, {pipeline_mode = #tpu.pipeline_mode<synchronous>, transform_indices = @transform_2, window_bounds = array<i64: 112, 128>}, {pipeline_mode = #tpu.pipeline_mode<synchronous>, transform_indices = @transform_3, window_bounds = array<i64: 1, 128>}, {pipeline_mode = #tpu.pipeline_mode<synchronous>, transform_indices = @transform_4, window_bounds = array<i64: 1, 128>}, {pipeline_mode = #tpu.pipeline_mode<synchronous>, transform_indices = @transform_5, window_bounds = array<i64: 1, 128>}, {transform_indices = @transform_6, window_bounds = array<i64: 1, 7, 128>}, {transform_indices = @transform_7, window_bounds = array<i64: 1, 1, 128>}, {transform_indices = @transform_8, window_bounds = array<i64: 1, 1, 128>}, {transform_indices = @transform_9, window_bounds = array<i64: 1, 1, 128>}, {transform_indices = @transform_10, window_bounds = array<i64: 1, 128, 256>}, {transform_indices = @transform_11, window_bounds = array<i64: 1, 1, 256>}, {transform_indices = @transform_12, window_bounds = array<i64: 1, 256, 128>}, {transform_indices = @transform_13, window_bounds = array<i64: 1, 1, 128>}, {transform_indices = @transform_14, window_bounds = array<i64: 1, 1, 128>}, {pipeline_mode = #tpu.pipeline_mode<synchronous>, transform_indices = @transform_15, window_bounds = array<i64: 1, 128>}, {pipeline_mode = #tpu.pipeline_mode<synchronous>, transform_indices = @transform_16, window_bounds = array<i64: 1, 128>}, {pipeline_mode = #tpu.pipeline_mode<synchronous>, transform_indices = @transform_17, window_bounds = array<i64: 88, 128>}]} {
    %c0_i32 = arith.constant 0 : i32
    %0 = arith.cmpi eq, %arg0, %c0_i32 : i32
    %1 = arith.extui %0 : i1 to i32
    %c0_i32_0 = arith.constant 0 : i32
    %2 = arith.cmpi ne, %1, %c0_i32_0 : i32
    scf.if %2 {
      %c0_50 = arith.constant 0 : index
      %c0_51 = arith.constant 0 : index
      %125 = vector.load %arg1[%c0_50, %c0_51] : memref<88x112xbf16, #tpu.memory_space<vmem>>, vector<88x112xbf16>
      %c0_52 = arith.constant 0 : index
      %c0_53 = arith.constant 0 : index
      %126 = vector.load %arg3[%c0_52, %c0_53] : memref<112x128xbf16, #tpu.memory_space<vmem>>, vector<112x128xbf16>
      %cst_54 = arith.constant dense<0.000000e+00> : vector<88x128xf32>
      %127 = tpu.matmul %125, %126, %cst_54 {dimension_numbers = #tpu.dot_dimension_numbers<[1], [0], [0], [1], [0, 0, 1, 1], [], []>} : vector<88x112xbf16>, vector<112x128xbf16>, vector<88x128xf32> -> vector<88x128xf32>
      %c0_55 = arith.constant 0 : index
      %c0_56 = arith.constant 0 : index
      %128 = vector.load %arg4[%c0_55, %c0_56] : memref<1x128xf32, #tpu.memory_space<vmem>>, vector<1x128xf32>
      %129 = vector.broadcast %128 : vector<1x128xf32> to vector<88x128xf32>
      %130 = arith.addf %127, %129 : vector<88x128xf32>
      %c0_57 = arith.constant 0 : index
      %c0_58 = arith.constant 0 : index
      %131 = vector.load %arg5[%c0_57, %c0_58] : memref<1x128xf32, #tpu.memory_space<vmem>>, vector<1x128xf32>
      %c0_59 = arith.constant 0 : index
      %c0_60 = arith.constant 0 : index
      %132 = vector.load %arg6[%c0_59, %c0_60] : memref<1x128xf32, #tpu.memory_space<vmem>>, vector<1x128xf32>
      %cst_61 = arith.constant dense<0.000000e+00> : vector<88xf32>
      %133 = vector.multi_reduction <add>, %130, %cst_61 [1] : vector<88x128xf32> to vector<88xf32>
      %134 = vector.shape_cast %133 : vector<88xf32> to vector<88x1xf32>
      %cst_62 = arith.constant 1.280000e+02 : f32
      %135 = vector.broadcast %cst_62 : f32 to vector<88x1xf32>
      %136 = arith.divf %134, %135 : vector<88x1xf32>
      %137 = vector.broadcast %136 : vector<88x1xf32> to vector<88x128xf32>
      %138 = arith.subf %130, %137 : vector<88x128xf32>
      %139 = arith.mulf %138, %138 : vector<88x128xf32>
      %cst_63 = arith.constant dense<0.000000e+00> : vector<88xf32>
      %140 = vector.multi_reduction <add>, %139, %cst_63 [1] : vector<88x128xf32> to vector<88xf32>
      %141 = vector.shape_cast %140 : vector<88xf32> to vector<88x1xf32>
      %cst_64 = arith.constant 1.280000e+02 : f32
      %142 = vector.broadcast %cst_64 : f32 to vector<88x1xf32>
      %143 = arith.divf %141, %142 : vector<88x1xf32>
      %cst_65 = arith.constant 9.99999997E-7 : f32
      %144 = vector.broadcast %cst_65 : f32 to vector<88x1xf32>
      %145 = arith.addf %143, %144 : vector<88x1xf32>
      %146 = math.rsqrt %145 : vector<88x1xf32>
      %147 = vector.broadcast %146 : vector<88x1xf32> to vector<88x128xf32>
      %148 = arith.mulf %138, %147 : vector<88x128xf32>
      %149 = vector.broadcast %131 : vector<1x128xf32> to vector<88x128xf32>
      %150 = arith.mulf %148, %149 : vector<88x128xf32>
      %151 = vector.broadcast %132 : vector<1x128xf32> to vector<88x128xf32>
      %152 = arith.addf %150, %151 : vector<88x128xf32>
      %c0_66 = arith.constant 0 : index
      %c0_67 = arith.constant 0 : index
      %153 = vector.load %arg18[%c0_66, %c0_67] : memref<88x128xf32, #tpu.memory_space<vmem>>, vector<88x128xf32>
      tpu.vector_store %arg18[%c0_66, %c0_67], %152 {strides = array<i32>} : memref<88x128xf32, #tpu.memory_space<vmem>>, vector<88x128xf32>,
    } else {
    }
    %c0 = arith.constant 0 : index
    %c0_1 = arith.constant 0 : index
    %3 = vector.load %arg18[%c0, %c0_1] : memref<88x128xf32, #tpu.memory_space<vmem>>, vector<88x128xf32>
    %c0_2 = arith.constant 0 : index
    %c0_3 = arith.constant 0 : index
    %c0_4 = arith.constant 0 : index
    %4 = vector.load %arg7[%c0_2, %c0_3, %c0_4] : memref<1x7x128xf32, #tpu.memory_space<vmem>>, vector<1x7x128xf32>
    %5 = vector.shape_cast %4 : vector<1x7x128xf32> to vector<7x128xf32>
    %6 = vector.extract_strided_slice %5 {offsets = [3, 0], sizes = [1, 128], strides = [1, 1]} : vector<7x128xf32> to vector<1x128xf32>
    %7 = vector.broadcast %6 : vector<1x128xf32> to vector<88x128xf32>
    %8 = arith.mulf %3, %7 : vector<88x128xf32>
    %c3_i32 = arith.constant 3 : i32
    %9 = tpu.dynamic_rotate %3 by %c3_i32 dim 0 : vector<88x128xf32>, i32 -> vector<88x128xf32>
    %c0_5 = arith.constant 0 : index
    %c0_6 = arith.constant 0 : index
    %10 = vector.load %arg2[%c0_5, %c0_6] : memref<88x7xf32, #tpu.memory_space<vmem>>, vector<88x1xf32>
    %11 = vector.broadcast %10 : vector<88x1xf32> to vector<88x128xf32>
    %12 = arith.mulf %9, %11 : vector<88x128xf32>
    %13 = vector.extract_strided_slice %5 {offsets = [0, 0], sizes = [1, 128], strides = [1, 1]} : vector<7x128xf32> to vector<1x128xf32>
    %14 = vector.broadcast %13 : vector<1x128xf32> to vector<88x128xf32>
    %15 = arith.mulf %12, %14 : vector<88x128xf32>
    %16 = arith.addf %8, %15 : vector<88x128xf32>
    %c2_i32 = arith.constant 2 : i32
    %17 = tpu.dynamic_rotate %3 by %c2_i32 dim 0 : vector<88x128xf32>, i32 -> vector<88x128xf32>
    %c0_7 = arith.constant 0 : index
    %c1 = arith.constant 1 : index
    %18 = vector.load %arg2[%c0_7, %c1] : memref<88x7xf32, #tpu.memory_space<vmem>>, vector<88x1xf32>
    %19 = vector.broadcast %18 : vector<88x1xf32> to vector<88x128xf32>
    %20 = arith.mulf %17, %19 : vector<88x128xf32>
    %21 = vector.extract_strided_slice %5 {offsets = [1, 0], sizes = [1, 128], strides = [1, 1]} : vector<7x128xf32> to vector<1x128xf32>
    %22 = vector.broadcast %21 : vector<1x128xf32> to vector<88x128xf32>
    %23 = arith.mulf %20, %22 : vector<88x128xf32>
    %24 = arith.addf %16, %23 : vector<88x128xf32>
    %c1_i32 = arith.constant 1 : i32
    %25 = tpu.dynamic_rotate %3 by %c1_i32 dim 0 : vector<88x128xf32>, i32 -> vector<88x128xf32>
    %c0_8 = arith.constant 0 : index
    %c2 = arith.constant 2 : index
    %26 = vector.load %arg2[%c0_8, %c2] : memref<88x7xf32, #tpu.memory_space<vmem>>, vector<88x1xf32>
    %27 = vector.broadcast %26 : vector<88x1xf32> to vector<88x128xf32>
    %28 = arith.mulf %25, %27 : vector<88x128xf32>
    %29 = vector.extract_strided_slice %5 {offsets = [2, 0], sizes = [1, 128], strides = [1, 1]} : vector<7x128xf32> to vector<1x128xf32>
    %30 = vector.broadcast %29 : vector<1x128xf32> to vector<88x128xf32>
    %31 = arith.mulf %28, %30 : vector<88x128xf32>
    %32 = arith.addf %24, %31 : vector<88x128xf32>
    %c87_i32 = arith.constant 87 : i32
    %33 = tpu.dynamic_rotate %3 by %c87_i32 dim 0 : vector<88x128xf32>, i32 -> vector<88x128xf32>
    %c0_9 = arith.constant 0 : index
    %c4 = arith.constant 4 : index
    %34 = vector.load %arg2[%c0_9, %c4] : memref<88x7xf32, #tpu.memory_space<vmem>>, vector<88x1xf32>
    %35 = vector.broadcast %34 : vector<88x1xf32> to vector<88x128xf32>
    %36 = arith.mulf %33, %35 : vector<88x128xf32>
    %37 = vector.extract_strided_slice %5 {offsets = [4, 0], sizes = [1, 128], strides = [1, 1]} : vector<7x128xf32> to vector<1x128xf32>
    %38 = vector.broadcast %37 : vector<1x128xf32> to vector<88x128xf32>
    %39 = arith.mulf %36, %38 : vector<88x128xf32>
    %40 = arith.addf %32, %39 : vector<88x128xf32>
    %c86_i32 = arith.constant 86 : i32
    %41 = tpu.dynamic_rotate %3 by %c86_i32 dim 0 : vector<88x128xf32>, i32 -> vector<88x128xf32>
    %c0_10 = arith.constant 0 : index
    %c5 = arith.constant 5 : index
    %42 = vector.load %arg2[%c0_10, %c5] : memref<88x7xf32, #tpu.memory_space<vmem>>, vector<88x1xf32>
    %43 = vector.broadcast %42 : vector<88x1xf32> to vector<88x128xf32>
    %44 = arith.mulf %41, %43 : vector<88x128xf32>
    %45 = vector.extract_strided_slice %5 {offsets = [5, 0], sizes = [1, 128], strides = [1, 1]} : vector<7x128xf32> to vector<1x128xf32>
    %46 = vector.broadcast %45 : vector<1x128xf32> to vector<88x128xf32>
    %47 = arith.mulf %44, %46 : vector<88x128xf32>
    %48 = arith.addf %40, %47 : vector<88x128xf32>
    %c85_i32 = arith.constant 85 : i32
    %49 = tpu.dynamic_rotate %3 by %c85_i32 dim 0 : vector<88x128xf32>, i32 -> vector<88x128xf32>
    %c0_11 = arith.constant 0 : index
    %c6 = arith.constant 6 : index
    %50 = vector.load %arg2[%c0_11, %c6] : memref<88x7xf32, #tpu.memory_space<vmem>>, vector<88x1xf32>
    %51 = vector.broadcast %50 : vector<88x1xf32> to vector<88x128xf32>
    %52 = arith.mulf %49, %51 : vector<88x128xf32>
    %53 = vector.extract_strided_slice %5 {offsets = [6, 0], sizes = [1, 128], strides = [1, 1]} : vector<7x128xf32> to vector<1x128xf32>
    %54 = vector.broadcast %53 : vector<1x128xf32> to vector<88x128xf32>
    %55 = arith.mulf %52, %54 : vector<88x128xf32>
    %56 = arith.addf %48, %55 : vector<88x128xf32>
    %c0_12 = arith.constant 0 : index
    %c0_13 = arith.constant 0 : index
    %c0_14 = arith.constant 0 : index
    %57 = vector.load %arg8[%c0_12, %c0_13, %c0_14] : memref<1x1x128xf32, #tpu.memory_space<vmem>>, vector<1x1x128xf32>
    %58 = vector.shape_cast %57 : vector<1x1x128xf32> to vector<1x128xf32>
    %59 = vector.broadcast %58 : vector<1x128xf32> to vector<88x128xf32>
    %60 = arith.addf %56, %59 : vector<88x128xf32>
    %c0_15 = arith.constant 0 : index
    %c0_16 = arith.constant 0 : index
    %c0_17 = arith.constant 0 : index
    %61 = vector.load %arg9[%c0_15, %c0_16, %c0_17] : memref<1x1x128xf32, #tpu.memory_space<vmem>>, vector<1x1x128xf32>
    %62 = vector.shape_cast %61 : vector<1x1x128xf32> to vector<1x128xf32>
    %c0_18 = arith.constant 0 : index
    %c0_19 = arith.constant 0 : index
    %c0_20 = arith.constant 0 : index
    %63 = vector.load %arg10[%c0_18, %c0_19, %c0_20] : memref<1x1x128xf32, #tpu.memory_space<vmem>>, vector<1x1x128xf32>
    %64 = vector.shape_cast %63 : vector<1x1x128xf32> to vector<1x128xf32>
    %cst = arith.constant dense<0.000000e+00> : vector<88xf32>
    %65 = vector.multi_reduction <add>, %60, %cst [1] : vector<88x128xf32> to vector<88xf32>
    %66 = vector.shape_cast %65 : vector<88xf32> to vector<88x1xf32>
    %cst_21 = arith.constant 1.280000e+02 : f32
    %67 = vector.broadcast %cst_21 : f32 to vector<88x1xf32>
    %68 = arith.divf %66, %67 : vector<88x1xf32>
    %69 = vector.broadcast %68 : vector<88x1xf32> to vector<88x128xf32>
    %70 = arith.subf %60, %69 : vector<88x128xf32>
    %71 = arith.mulf %70, %70 : vector<88x128xf32>
    %cst_22 = arith.constant dense<0.000000e+00> : vector<88xf32>
    %72 = vector.multi_reduction <add>, %71, %cst_22 [1] : vector<88x128xf32> to vector<88xf32>
    %73 = vector.shape_cast %72 : vector<88xf32> to vector<88x1xf32>
    %cst_23 = arith.constant 1.280000e+02 : f32
    %74 = vector.broadcast %cst_23 : f32 to vector<88x1xf32>
    %75 = arith.divf %73, %74 : vector<88x1xf32>
    %cst_24 = arith.constant 9.99999997E-7 : f32
    %76 = vector.broadcast %cst_24 : f32 to vector<88x1xf32>
    %77 = arith.addf %75, %76 : vector<88x1xf32>
    %78 = math.rsqrt %77 : vector<88x1xf32>
    %79 = vector.broadcast %78 : vector<88x1xf32> to vector<88x128xf32>
    %80 = arith.mulf %70, %79 : vector<88x128xf32>
    %81 = vector.broadcast %62 : vector<1x128xf32> to vector<88x128xf32>
    %82 = arith.mulf %80, %81 : vector<88x128xf32>
    %83 = vector.broadcast %64 : vector<1x128xf32> to vector<88x128xf32>
    %84 = arith.addf %82, %83 : vector<88x128xf32>
    %85 = arith.truncf %84 : vector<88x128xf32> to vector<88x128xbf16>
    %c0_25 = arith.constant 0 : index
    %c0_26 = arith.constant 0 : index
    %c0_27 = arith.constant 0 : index
    %86 = vector.load %arg11[%c0_25, %c0_26, %c0_27] : memref<1x128x256xbf16, #tpu.memory_space<vmem>>, vector<1x128x256xbf16>
    %87 = vector.shape_cast %86 : vector<1x128x256xbf16> to vector<128x256xbf16>
    %cst_28 = arith.constant dense<0.000000e+00> : vector<88x256xf32>
    %88 = tpu.matmul %85, %87, %cst_28 {dimension_numbers = #tpu.dot_dimension_numbers<[1], [0], [0], [1], [0, 0, 1, 1], [], []>} : vector<88x128xbf16>, vector<128x256xbf16>, vector<88x256xf32> -> vector<88x256xf32>
    %c0_29 = arith.constant 0 : index
    %c0_30 = arith.constant 0 : index
    %c0_31 = arith.constant 0 : index
    %89 = vector.load %arg12[%c0_29, %c0_30, %c0_31] : memref<1x1x256xf32, #tpu.memory_space<vmem>>, vector<1x1x256xf32>
    %90 = vector.shape_cast %89 : vector<1x1x256xf32> to vector<1x256xf32>
    %91 = vector.broadcast %90 : vector<1x256xf32> to vector<88x256xf32>
    %92 = arith.addf %88, %91 : vector<88x256xf32>
    %cst_32 = arith.constant 5.000000e-01 : f32
    %93 = vector.broadcast %cst_32 : f32 to vector<88x256xf32>
    %94 = arith.mulf %93, %92 : vector<88x256xf32>
    %cst_33 = arith.constant 4.471500e-02 : f32
    %95 = vector.broadcast %cst_33 : f32 to vector<88x256xf32>
    %96 = arith.mulf %95, %92 : vector<88x256xf32>
    %97 = arith.mulf %96, %92 : vector<88x256xf32>
    %98 = arith.mulf %97, %92 : vector<88x256xf32>
    %99 = arith.addf %92, %98 : vector<88x256xf32>
    %cst_34 = arith.constant 0.797884583 : f32
    %100 = vector.broadcast %cst_34 : f32 to vector<88x256xf32>
    %101 = arith.mulf %100, %99 : vector<88x256xf32>
    %102 = math.tanh %101 : vector<88x256xf32>
    %cst_35 = arith.constant 1.000000e+00 : f32
    %103 = vector.broadcast %cst_35 : f32 to vector<88x256xf32>
    %104 = arith.addf %103, %102 : vector<88x256xf32>
    %105 = arith.mulf %94, %104 : vector<88x256xf32>
    %106 = arith.truncf %105 : vector<88x256xf32> to vector<88x256xbf16>
    %c0_36 = arith.constant 0 : index
    %c0_37 = arith.constant 0 : index
    %c0_38 = arith.constant 0 : index
    %107 = vector.load %arg13[%c0_36, %c0_37, %c0_38] : memref<1x256x128xbf16, #tpu.memory_space<vmem>>, vector<1x256x128xbf16>
    %108 = vector.shape_cast %107 : vector<1x256x128xbf16> to vector<256x128xbf16>
    %cst_39 = arith.constant dense<0.000000e+00> : vector<88x128xf32>
    %109 = tpu.matmul %106, %108, %cst_39 {dimension_numbers = #tpu.dot_dimension_numbers<[1], [0], [0], [1], [0, 0, 1, 1], [], []>} : vector<88x256xbf16>, vector<256x128xbf16>, vector<88x128xf32> -> vector<88x128xf32>
    %c0_40 = arith.constant 0 : index
    %c0_41 = arith.constant 0 : index
    %c0_42 = arith.constant 0 : index
    %110 = vector.load %arg14[%c0_40, %c0_41, %c0_42] : memref<1x1x128xf32, #tpu.memory_space<vmem>>, vector<1x1x128xf32>
    %111 = vector.shape_cast %110 : vector<1x1x128xf32> to vector<1x128xf32>
    %112 = vector.broadcast %111 : vector<1x128xf32> to vector<88x128xf32>
    %113 = arith.addf %109, %112 : vector<88x128xf32>
    %c0_43 = arith.constant 0 : index
    %c0_44 = arith.constant 0 : index
    %c0_45 = arith.constant 0 : index
    %114 = vector.load %arg15[%c0_43, %c0_44, %c0_45] : memref<1x1x128xf32, #tpu.memory_space<vmem>>, vector<1x1x128xf32>
    %115 = vector.shape_cast %114 : vector<1x1x128xf32> to vector<1x128xf32>
    %116 = vector.broadcast %115 : vector<1x128xf32> to vector<88x128xf32>
    %117 = arith.mulf %116, %113 : vector<88x128xf32>
    %118 = arith.addf %3, %117 : vector<88x128xf32>
    %c1_i32_46 = arith.constant 1 : i32
    %119 = arith.cmpi slt, %arg0, %c1_i32_46 : i32
    %120 = arith.extui %119 : i1 to i32
    %c0_i32_47 = arith.constant 0 : i32
    %121 = arith.cmpi ne, %120, %c0_i32_47 : i32
    scf.if %121 {
      %c0_50 = arith.constant 0 : index
      %c0_51 = arith.constant 0 : index
      %125 = vector.load %arg18[%c0_50, %c0_51] : memref<88x128xf32, #tpu.memory_space<vmem>>, vector<88x128xf32>
      tpu.vector_store %arg18[%c0_50, %c0_51], %118 {strides = array<i32>} : memref<88x128xf32, #tpu.memory_space<vmem>>, vector<88x128xf32>,
    } else {
    }
    %c1_i32_48 = arith.constant 1 : i32
    %122 = arith.cmpi eq, %arg0, %c1_i32_48 : i32
    %123 = arith.extui %122 : i1 to i32
    %c0_i32_49 = arith.constant 0 : i32
    %124 = arith.cmpi ne, %123, %c0_i32_49 : i32
    scf.if %124 {
      %c0_50 = arith.constant 0 : index
      %c0_51 = arith.constant 0 : index
      %125 = vector.load %arg16[%c0_50, %c0_51] : memref<1x128xf32, #tpu.memory_space<vmem>>, vector<1x128xf32>
      %c0_52 = arith.constant 0 : index
      %c0_53 = arith.constant 0 : index
      %126 = vector.load %arg17[%c0_52, %c0_53] : memref<1x128xf32, #tpu.memory_space<vmem>>, vector<1x128xf32>
      %cst_54 = arith.constant dense<0.000000e+00> : vector<88xf32>
      %127 = vector.multi_reduction <add>, %118, %cst_54 [1] : vector<88x128xf32> to vector<88xf32>
      %128 = vector.shape_cast %127 : vector<88xf32> to vector<88x1xf32>
      %cst_55 = arith.constant 1.280000e+02 : f32
      %129 = vector.broadcast %cst_55 : f32 to vector<88x1xf32>
      %130 = arith.divf %128, %129 : vector<88x1xf32>
      %131 = vector.broadcast %130 : vector<88x1xf32> to vector<88x128xf32>
      %132 = arith.subf %118, %131 : vector<88x128xf32>
      %133 = arith.mulf %132, %132 : vector<88x128xf32>
      %cst_56 = arith.constant dense<0.000000e+00> : vector<88xf32>
      %134 = vector.multi_reduction <add>, %133, %cst_56 [1] : vector<88x128xf32> to vector<88xf32>
      %135 = vector.shape_cast %134 : vector<88xf32> to vector<88x1xf32>
      %cst_57 = arith.constant 1.280000e+02 : f32
      %136 = vector.broadcast %cst_57 : f32 to vector<88x1xf32>
      %137 = arith.divf %135, %136 : vector<88x1xf32>
      %cst_58 = arith.constant 9.99999997E-7 : f32
      %138 = vector.broadcast %cst_58 : f32 to vector<88x1xf32>
      %139 = arith.addf %137, %138 : vector<88x1xf32>
      %140 = math.rsqrt %139 : vector<88x1xf32>
      %141 = vector.broadcast %140 : vector<88x1xf32> to vector<88x128xf32>
      %142 = arith.mulf %132, %141 : vector<88x128xf32>
      %143 = vector.broadcast %125 : vector<1x128xf32> to vector<88x128xf32>
      %144 = arith.mulf %142, %143 : vector<88x128xf32>
      %145 = vector.broadcast %126 : vector<1x128xf32> to vector<88x128xf32>
      %146 = arith.addf %144, %145 : vector<88x128xf32>
      %c0_59 = arith.constant 0 : index
      %c0_60 = arith.constant 0 : index
      %147 = vector.load %arg18[%c0_59, %c0_60] : memref<88x128xf32, #tpu.memory_space<vmem>>, vector<88x128xf32>
      tpu.vector_store %arg18[%c0_59, %c0_60], %146 {strides = array<i32>} : memref<88x128xf32, #tpu.memory_space<vmem>>, vector<88x128xf32>,
    } else {
    }
    return
  }
  func.func @transform_0(%arg0: i32) -> (i32, i32) {
    %c0_i32 = arith.constant 0 : i32
    %c0_i32_0 = arith.constant 0 : i32
    %c0_i32_1 = arith.constant 0 : i32
    return %c0_i32, %c0_i32_0 : i32, i32
  }
  func.func @transform_1(%arg0: i32) -> (i32, i32) {
    %c0_i32 = arith.constant 0 : i32
    %c0_i32_0 = arith.constant 0 : i32
    %c0_i32_1 = arith.constant 0 : i32
    return %c0_i32, %c0_i32_0 : i32, i32
  }
  func.func @transform_2(%arg0: i32) -> (i32, i32) {
    %c0_i32 = arith.constant 0 : i32
    %c0_i32_0 = arith.constant 0 : i32
    %c0_i32_1 = arith.constant 0 : i32
    return %c0_i32, %c0_i32_0 : i32, i32
  }
  func.func @transform_3(%arg0: i32) -> (i32, i32) {
    %c0_i32 = arith.constant 0 : i32
    %c0_i32_0 = arith.constant 0 : i32
    %c0_i32_1 = arith.constant 0 : i32
    return %c0_i32, %c0_i32_0 : i32, i32
  }
  func.func @transform_4(%arg0: i32) -> (i32, i32) {
    %c0_i32 = arith.constant 0 : i32
    %c0_i32_0 = arith.constant 0 : i32
    %c0_i32_1 = arith.constant 0 : i32
    return %c0_i32, %c0_i32_0 : i32, i32
  }
  func.func @transform_5(%arg0: i32) -> (i32, i32) {
    %c0_i32 = arith.constant 0 : i32
    %c0_i32_0 = arith.constant 0 : i32
    %c0_i32_1 = arith.constant 0 : i32
    return %c0_i32, %c0_i32_0 : i32, i32
  }
  func.func @transform_6(%arg0: i32) -> (i32, i32, i32) {
    %c0_i32 = arith.constant 0 : i32
    %c0_i32_0 = arith.constant 0 : i32
    %c0_i32_1 = arith.constant 0 : i32
    return %arg0, %c0_i32, %c0_i32_0 : i32, i32, i32
  }
  func.func @transform_7(%arg0: i32) -> (i32, i32, i32) {
    %c0_i32 = arith.constant 0 : i32
    %c0_i32_0 = arith.constant 0 : i32
    %c0_i32_1 = arith.constant 0 : i32
    return %arg0, %c0_i32, %c0_i32_0 : i32, i32, i32
  }
  func.func @transform_8(%arg0: i32) -> (i32, i32, i32) {
    %c0_i32 = arith.constant 0 : i32
    %c0_i32_0 = arith.constant 0 : i32
    %c0_i32_1 = arith.constant 0 : i32
    return %arg0, %c0_i32, %c0_i32_0 : i32, i32, i32
  }
  func.func @transform_9(%arg0: i32) -> (i32, i32, i32) {
    %c0_i32 = arith.constant 0 : i32
    %c0_i32_0 = arith.constant 0 : i32
    %c0_i32_1 = arith.constant 0 : i32
    return %arg0, %c0_i32, %c0_i32_0 : i32, i32, i32
  }
  func.func @transform_10(%arg0: i32) -> (i32, i32, i32) {
    %c0_i32 = arith.constant 0 : i32
    %c0_i32_0 = arith.constant 0 : i32
    %c0_i32_1 = arith.constant 0 : i32
    return %arg0, %c0_i32, %c0_i32_0 : i32, i32, i32
  }
  func.func @transform_11(%arg0: i32) -> (i32, i32, i32) {
    %c0_i32 = arith.constant 0 : i32
    %c0_i32_0 = arith.constant 0 : i32
    %c0_i32_1 = arith.constant 0 : i32
    return %arg0, %c0_i32, %c0_i32_0 : i32, i32, i32
  }
  func.func @transform_12(%arg0: i32) -> (i32, i32, i32) {
    %c0_i32 = arith.constant 0 : i32
    %c0_i32_0 = arith.constant 0 : i32
    %c0_i32_1 = arith.constant 0 : i32
    return %arg0, %c0_i32, %c0_i32_0 : i32, i32, i32
  }
  func.func @transform_13(%arg0: i32) -> (i32, i32, i32) {
    %c0_i32 = arith.constant 0 : i32
    %c0_i32_0 = arith.constant 0 : i32
    %c0_i32_1 = arith.constant 0 : i32
    return %arg0, %c0_i32, %c0_i32_0 : i32, i32, i32
  }
  func.func @transform_14(%arg0: i32) -> (i32, i32, i32) {
    %c0_i32 = arith.constant 0 : i32
    %c0_i32_0 = arith.constant 0 : i32
    %c0_i32_1 = arith.constant 0 : i32
    return %arg0, %c0_i32, %c0_i32_0 : i32, i32, i32
  }
  func.func @transform_15(%arg0: i32) -> (i32, i32) {
    %c0_i32 = arith.constant 0 : i32
    %c0_i32_0 = arith.constant 0 : i32
    %c0_i32_1 = arith.constant 0 : i32
    return %c0_i32, %c0_i32_0 : i32, i32
  }
  func.func @transform_16(%arg0: i32) -> (i32, i32) {
    %c0_i32 = arith.constant 0 : i32
    %c0_i32_0 = arith.constant 0 : i32
    %c0_i32_1 = arith.constant 0 : i32
    return %c0_i32, %c0_i32_0 : i32, i32
  }
  func.func @transform_17(%arg0: i32) -> (i32, i32) {
    %c0_i32 = arith.constant 0 : i32
    %c0_i32_0 = arith.constant 0 : i32
    %c0_i32_1 = arith.constant 0 : i32
    return %c0_i32, %c0_i32_0 : i32, i32
  }
}

</mosaic_0001>

<llo_original>
// kernel: tpu_custom_call.1
$region0: #{tpu_custom_call.1}
  #allocation0 [shape = 'u32[]', space=smem, size = 0x4, offset = 0x4, fixed_abs, tag = 'smem constant byte address 0x4 - core index']
  #allocation1 [shape = 'u32[144,128]{1,0:T(1,128)}', space=vmem, size = 0x12000, scoped, tag = 'internal scratch']
  %s0 = inlined_call_operand.vmem [shape: bf16[88,112], index: 0, kind: input, shape index: {}]
  %s1 = inlined_call_operand.vmem [shape: f32[88,7], index: 1, kind: input, shape index: {}]
  %s2 = inlined_call_operand.vmem [shape: bf16[112,128], index: 2, kind: input, shape index: {}]
  %s3 = inlined_call_operand.vmem [shape: f32[1,128], index: 3, kind: input, shape index: {}]
  %s4 = inlined_call_operand.vmem [shape: f32[1,128], index: 4, kind: input, shape index: {}]
  %s5 = inlined_call_operand.vmem [shape: f32[1,128], index: 5, kind: input, shape index: {}]
  %s6 = inlined_call_operand.vmem [shape: f32[2,7,128], index: 6, kind: input, shape index: {}]
  %s7 = inlined_call_operand.vmem [shape: f32[2,1,128], index: 7, kind: input, shape index: {}]
  %s8 = inlined_call_operand.vmem [shape: f32[2,1,128], index: 8, kind: input, shape index: {}]
  %s9 = inlined_call_operand.vmem [shape: f32[2,1,128], index: 9, kind: input, shape index: {}]
  %s10 = inlined_call_operand.hbm [shape: bf16[2,128,256], index: 10, kind: input, shape index: {}]
  %s11 = inlined_call_operand.vmem [shape: f32[2,1,256], index: 11, kind: input, shape index: {}]
  %s12 = inlined_call_operand.hbm [shape: bf16[2,256,128], index: 12, kind: input, shape index: {}]
  %s13 = inlined_call_operand.vmem [shape: f32[2,1,128], index: 13, kind: input, shape index: {}]
  %s14 = inlined_call_operand.vmem [shape: f32[2,1,128], index: 14, kind: input, shape index: {}]
  %s15 = inlined_call_operand.vmem [shape: f32[1,128], index: 15, kind: input, shape index: {}]
  %s16 = inlined_call_operand.vmem [shape: f32[1,128], index: 16, kind: input, shape index: {}]
  %s17 = inlined_call_operand.hbm [shape: f32[88,128], index: 17, kind: output, shape index: {}]
  %s18 = sld [smem:[#allocation0]]
  $region121: #{tpu_custom_call.1} parent=0
    _
  %s20 = ssub.s32 1, %s18
  %s21 = scalar_select 0, %s20, %s18
  $region1: #{tpu_custom_call.1} parent=0
    #allocation2 [shape = 'u8[131072]{0}', space=vmem, size = 0x20000, scoped, tag = 'input window, operand 10']
    #allocation3 [shape = 's32[2]{0}', space=sflag, size = 0x8, scoped, tag = 'scoped memory for tpu_custom_call.1']
    #allocation4 [shape = 's32[2]{0}', space=sflag, size = 0x8, scoped, tag = 'scoped memory for tpu_custom_call.1']
    #allocation5 [shape = 'u8[131072]{0}', space=vmem, size = 0x20000, scoped, tag = 'input window, operand 12']
    #allocation6 [shape = 's32[2]{0}', space=sflag, size = 0x8, scoped, tag = 'scoped memory for tpu_custom_call.1']
    #allocation7 [shape = 'u8[45056]{0}', space=vmem, size = 0xb000, scoped, tag = 'output window, operand 0, single buffered']
    %22 = vsyncpa [#allocation3], 0
    %s23 = scalar_lea.sflag [#allocation3], 1
    %24 = vsyncpa %s23, 0
    %25 = vsyncpa [#allocation6], 0
    %s26 = scalar_lea.sflag [#allocation6], 1
    %27 = vsyncpa %s26, 0
    %28 = vsyncpa [#allocation4], 0
    loop: start=0, step=1, limit=4
    $region2: #{tpu_custom_call.1} parent=1 // loop_pre_header
      _
    $region3: #{tpu_custom_call.1} parent=1 // loop_header
      %s30 = sphi 0, %s34
      %p31 = scmp.ge.s32.totalorder %s30, 4
      %s38 = sphi 0, %s38
      %s40 = sphi 0, %s38
      %s41 = sphi 0, %s40
      %s55 = sphi 0, %s41
      %s59 = sphi 0, %s59
      %s61 = sphi 0, %s59
      %s62 = sphi 0, %s61
      %s76 = sphi 0, %s62
      %s80 = sphi 0, %s80
      %s82 = sphi 0, %s80
      %s83 = sphi 0, %s82
      %s97 = sphi 0, %s83
      %s101 = sphi 0, %s101
      %s103 = sphi 0, %s101
      %s104 = sphi 0, %s103
      %s118 = sphi 0, %s104
      %s122 = sphi 0, %s122
      %s124 = sphi 0, %s122
      %s125 = sphi 0, %s124
      %s139 = sphi 0, %s125
      %s143 = sphi 0, %s143
      %s145 = sphi 0, %s143
      %s146 = sphi 0, %s145
      %s160 = sphi 0, %s146
      %s166 = sphi 0, %s168
      %s169 = sphi 0, %s166
      %s170 = sphi 0, %s169
      %s186 = sphi 0, %s170
      %s192 = sphi 0, %s194
      %s195 = sphi 0, %s192
      %s196 = sphi 0, %s195
      %s212 = sphi 0, %s196
      %s218 = sphi 0, %s220
      %s221 = sphi 0, %s218
      %s222 = sphi 0, %s221
      %s238 = sphi 0, %s222
      %s244 = sphi 0, %s246
      %s247 = sphi 0, %s244
      %s248 = sphi 0, %s247
      %s264 = sphi 0, %s248
      %s270 = sphi 0, %s272
      %s273 = sphi 0, %s270
      %s274 = sphi 0, %s273
      %s290 = sphi 0, %s274
      %s296 = sphi 0, %s298
      %s299 = sphi 0, %s296
      %s300 = sphi 0, %s299
      %s316 = sphi 0, %s300
      %s322 = sphi 0, %s324
      %s325 = sphi 0, %s322
      %s326 = sphi 0, %s325
      %s342 = sphi 0, %s326
      %s348 = sphi 0, %s350
      %s351 = sphi 0, %s348
      %s352 = sphi 0, %s351
      %s368 = sphi 0, %s352
      %s374 = sphi 0, %s376
      %s377 = sphi 0, %s374
      %s378 = sphi 0, %s377
      %s394 = sphi 0, %s378
      %s398 = sphi 0, %s398
      %s400 = sphi 0, %s398
      %s401 = sphi 0, %s400
      %s415 = sphi 0, %s401
      %s419 = sphi 0, %s419
      %s421 = sphi 0, %s419
      %s422 = sphi 0, %s421
      %s436 = sphi 0, %s422
      %s440 = sphi 0, %s440
      %s442 = sphi 0, %s440
      %s443 = sphi 0, %s442
      %s457 = sphi 0, %s443
    $region4: #{tpu_custom_call.1} parent=1 // loop_header_branch
      %33 = sbr.rel (%p31) target = $region8
    $region5: #{tpu_custom_call.1} parent=1 // loop_body
      %s35 = ssub.s32 %s30, 1
      %s36 = ssub.s32 %s30, 2
      %s37 = sadd.s32 %s30, 1
      %s39 = sadd.s32 %s38, 1
      %p42 = scmp.eq.s32.totalorder %s30, 1
      %p43 = scmp.ne.s32.totalorder %s38, %s40
      %p44 = scmp.eq.s32.totalorder %s30, 0
      %p45 = por %p43, %p44
      %p46 = scmp.ne.s32.totalorder %s38, %s40
      %p47 = scmp.eq.s32.totalorder %s35, 1
      %p48 = por %p46, %p47
      %p49 = scmp.ne.s32.totalorder %s40, %s41
      %p50 = scmp.eq.s32.totalorder %s35, 0
      %p51 = por %p49, %p50
      %p52 = scmp.ne.s32.totalorder %s40, %s41
      %p53 = scmp.eq.s32.totalorder %s36, 1
      %p54 = por %p52, %p53
      %p56 = scmp.ne.s32.totalorder %s41, %s55
      %p57 = scmp.eq.s32.totalorder %s36, 0
      %p58 = por %p56, %p57
      %s60 = sadd.s32 %s59, 1
      %p63 = scmp.eq.s32.totalorder %s30, 1
      %p64 = scmp.ne.s32.totalorder %s59, %s61
      %p65 = scmp.eq.s32.totalorder %s30, 0
      %p66 = por %p64, %p65
      %p67 = scmp.ne.s32.totalorder %s59, %s61
      %p68 = scmp.eq.s32.totalorder %s35, 1
      %p69 = por %p67, %p68
      %p70 = scmp.ne.s32.totalorder %s61, %s62
      %p71 = scmp.eq.s32.totalorder %s35, 0
      %p72 = por %p70, %p71
      %p73 = scmp.ne.s32.totalorder %s61, %s62
      %p74 = scmp.eq.s32.totalorder %s36, 1
      %p75 = por %p73, %p74
      %p77 = scmp.ne.s32.totalorder %s62, %s76
      %p78 = scmp.eq.s32.totalorder %s36, 0
      %p79 = por %p77, %p78
      %s81 = sadd.s32 %s80, 1
      %p84 = scmp.eq.s32.totalorder %s30, 1
      %p85 = scmp.ne.s32.totalorder %s80, %s82
      %p86 = scmp.eq.s32.totalorder %s30, 0
      %p87 = por %p85, %p86
      %p88 = scmp.ne.s32.totalorder %s80, %s82
      %p89 = scmp.eq.s32.totalorder %s35, 1
      %p90 = por %p88, %p89
      %p91 = scmp.ne.s32.totalorder %s82, %s83
      %p92 = scmp.eq.s32.totalorder %s35, 0
      %p93 = por %p91, %p92
      %p94 = scmp.ne.s32.totalorder %s82, %s83
      %p95 = scmp.eq.s32.totalorder %s36, 1
      %p96 = por %p94, %p95
      %p98 = scmp.ne.s32.totalorder %s83, %s97
      %p99 = scmp.eq.s32.totalorder %s36, 0
      %p100 = por %p98, %p99
      %s102 = sadd.s32 %s101, 1
      %p105 = scmp.eq.s32.totalorder %s30, 1
      %p106 = scmp.ne.s32.totalorder %s101, %s103
      %p107 = scmp.eq.s32.totalorder %s30, 0
      %p108 = por %p106, %p107
      %p109 = scmp.ne.s32.totalorder %s101, %s103
      %p110 = scmp.eq.s32.totalorder %s35, 1
      %p111 = por %p109, %p110
      %p112 = scmp.ne.s32.totalorder %s103, %s104
      %p113 = scmp.eq.s32.totalorder %s35, 0
      %p114 = por %p112, %p113
      %p115 = scmp.ne.s32.totalorder %s103, %s104
      %p116 = scmp.eq.s32.totalorder %s36, 1
      %p117 = por %p115, %p116
      %p119 = scmp.ne.s32.totalorder %s104, %s118
      %p120 = scmp.eq.s32.totalorder %s36, 0
      %p121 = por %p119, %p120
      %s123 = sadd.s32 %s122, 1
      %p126 = scmp.eq.s32.totalorder %s30, 1
      %p127 = scmp.ne.s32.totalorder %s122, %s124
      %p128 = scmp.eq.s32.totalorder %s30, 0
      %p129 = por %p127, %p128
      %p130 = scmp.ne.s32.totalorder %s122, %s124
      %p131 = scmp.eq.s32.totalorder %s35, 1
      %p132 = por %p130, %p131
      %p133 = scmp.ne.s32.totalorder %s124, %s125
      %p134 = scmp.eq.s32.totalorder %s35, 0
      %p135 = por %p133, %p134
      %p136 = scmp.ne.s32.totalorder %s124, %s125
      %p137 = scmp.eq.s32.totalorder %s36, 1
      %p138 = por %p136, %p137
      %p140 = scmp.ne.s32.totalorder %s125, %s139
      %p141 = scmp.eq.s32.totalorder %s36, 0
      %p142 = por %p140, %p141
      %s144 = sadd.s32 %s143, 1
      %p147 = scmp.eq.s32.totalorder %s30, 1
      %p148 = scmp.ne.s32.totalorder %s143, %s145
      %p149 = scmp.eq.s32.totalorder %s30, 0
      %p150 = por %p148, %p149
      %p151 = scmp.ne.s32.totalorder %s143, %s145
      %p152 = scmp.eq.s32.totalorder %s35, 1
      %p153 = por %p151, %p152
      %p154 = scmp.ne.s32.totalorder %s145, %s146
      %p155 = scmp.eq.s32.totalorder %s35, 0
      %p156 = por %p154, %p155
      %p157 = scmp.ne.s32.totalorder %s145, %s146
      %p158 = scmp.eq.s32.totalorder %s36, 1
      %p159 = por %p157, %p158
      %p161 = scmp.ne.s32.totalorder %s146, %s160
      %p162 = scmp.eq.s32.totalorder %s36, 0
      %p163 = por %p161, %p162
      %s164 = ssub.s32 %s30, %s37
      %p165 = scmp.eq.s32.totalorder %s164, 0
      %s167 = sadd.s32 %s166, 1
      %s168 = scalar_select %p165, %s166, %s167
      %p171 = pneg %p165
      %p172 = scmp.eq.s32.totalorder %s30, 1
      %p173 = por %p171, %p172
      %p174 = scmp.ne.s32.totalorder %s166, %s169
      %p175 = scmp.eq.s32.totalorder %s30, 0
      %p176 = por %p174, %p175
      %p177 = scmp.ne.s32.totalorder %s166, %s169
      %p178 = scmp.eq.s32.totalorder %s35, 1
      %p179 = por %p177, %p178
      %p180 = scmp.ne.s32.totalorder %s169, %s170
      %p181 = scmp.eq.s32.totalorder %s35, 0
      %p182 = por %p180, %p181
      %p183 = scmp.ne.s32.totalorder %s169, %s170
      %p184 = scmp.eq.s32.totalorder %s36, 1
      %p185 = por %p183, %p184
      %p187 = scmp.ne.s32.totalorder %s170, %s186
      %p188 = scmp.eq.s32.totalorder %s36, 0
      %p189 = por %p187, %p188
      %s190 = ssub.s32 %s30, %s37
      %p191 = scmp.eq.s32.totalorder %s190, 0
      %s193 = sadd.s32 %s192, 1
      %s194 = scalar_select %p191, %s192, %s193
      %p197 = pneg %p191
      %p198 = scmp.eq.s32.totalorder %s30, 1
      %p199 = por %p197, %p198
      %p200 = scmp.ne.s32.totalorder %s192, %s195
      %p201 = scmp.eq.s32.totalorder %s30, 0
      %p202 = por %p200, %p201
      %p203 = scmp.ne.s32.totalorder %s192, %s195
      %p204 = scmp.eq.s32.totalorder %s35, 1
      %p205 = por %p203, %p204
      %p206 = scmp.ne.s32.totalorder %s195, %s196
      %p207 = scmp.eq.s32.totalorder %s35, 0
      %p208 = por %p206, %p207
      %p209 = scmp.ne.s32.totalorder %s195, %s196
      %p210 = scmp.eq.s32.totalorder %s36, 1
      %p211 = por %p209, %p210
      %p213 = scmp.ne.s32.totalorder %s196, %s212
      %p214 = scmp.eq.s32.totalorder %s36, 0
      %p215 = por %p213, %p214
      %s216 = ssub.s32 %s30, %s37
      %p217 = scmp.eq.s32.totalorder %s216, 0
      %s219 = sadd.s32 %s218, 1
      %s220 = scalar_select %p217, %s218, %s219
      %p223 = pneg %p217
      %p224 = scmp.eq.s32.totalorder %s30, 1
      %p225 = por %p223, %p224
      %p226 = scmp.ne.s32.totalorder %s218, %s221
      %p227 = scmp.eq.s32.totalorder %s30, 0
      %p228 = por %p226, %p227
      %p229 = scmp.ne.s32.totalorder %s218, %s221
      %p230 = scmp.eq.s32.totalorder %s35, 1
      %p231 = por %p229, %p230
      %p232 = scmp.ne.s32.totalorder %s221, %s222
      %p233 = scmp.eq.s32.totalorder %s35, 0
      %p234 = por %p232, %p233
      %p235 = scmp.ne.s32.totalorder %s221, %s222
      %p236 = scmp.eq.s32.totalorder %s36, 1
      %p237 = por %p235, %p236
      %p239 = scmp.ne.s32.totalorder %s222, %s238
      %p240 = scmp.eq.s32.totalorder %s36, 0
      %p241 = por %p239, %p240
      %s242 = ssub.s32 %s30, %s37
      %p243 = scmp.eq.s32.totalorder %s242, 0
      %s245 = sadd.s32 %s244, 1
      %s246 = scalar_select %p243, %s244, %s245
      %p249 = pneg %p243
      %p250 = scmp.eq.s32.totalorder %s30, 1
      %p251 = por %p249, %p250
      %p252 = scmp.ne.s32.totalorder %s244, %s247
      %p253 = scmp.eq.s32.totalorder %s30, 0
      %p254 = por %p252, %p253
      %p255 = scmp.ne.s32.totalorder %s244, %s247
      %p256 = scmp.eq.s32.totalorder %s35, 1
      %p257 = por %p255, %p256
      %p258 = scmp.ne.s32.totalorder %s247, %s248
      %p259 = scmp.eq.s32.totalorder %s35, 0
      %p260 = por %p258, %p259
      %p261 = scmp.ne.s32.totalorder %s247, %s248
      %p262 = scmp.eq.s32.totalorder %s36, 1
      %p263 = por %p261, %p262
      %p265 = scmp.ne.s32.totalorder %s248, %s264
      %p266 = scmp.eq.s32.totalorder %s36, 0
      %p267 = por %p265, %p266
      %s268 = ssub.s32 %s30, %s37
      %p269 = scmp.eq.s32.totalorder %s268, 0
      %s271 = sadd.s32 %s270, 1
      %s272 = scalar_select %p269, %s270, %s271
      %p275 = pneg %p269
      %p276 = scmp.eq.s32.totalorder %s30, 1
      %p277 = por %p275, %p276
      %p278 = scmp.ne.s32.totalorder %s270, %s273
      %p279 = scmp.eq.s32.totalorder %s30, 0
      %p280 = por %p278, %p279
      %p281 = scmp.ne.s32.totalorder %s270, %s273
      %p282 = scmp.eq.s32.totalorder %s35, 1
      %p283 = por %p281, %p282
      %p284 = scmp.ne.s32.totalorder %s273, %s274
      %p285 = scmp.eq.s32.totalorder %s35, 0
      %p286 = por %p284, %p285
      %p287 = scmp.ne.s32.totalorder %s273, %s274
      %p288 = scmp.eq.s32.totalorder %s36, 1
      %p289 = por %p287, %p288
      %p291 = scmp.ne.s32.totalorder %s274, %s290
      %p292 = scmp.eq.s32.totalorder %s36, 0
      %p293 = por %p291, %p292
      %s294 = ssub.s32 %s30, %s37
      %p295 = scmp.eq.s32.totalorder %s294, 0
      %s297 = sadd.s32 %s296, 1
      %s298 = scalar_select %p295, %s296, %s297
      %p301 = pneg %p295
      %p302 = scmp.eq.s32.totalorder %s30, 1
      %p303 = por %p301, %p302
      %p304 = scmp.ne.s32.totalorder %s296, %s299
      %p305 = scmp.eq.s32.totalorder %s30, 0
      %p306 = por %p304, %p305
      %p307 = scmp.ne.s32.totalorder %s296, %s299
      %p308 = scmp.eq.s32.totalorder %s35, 1
      %p309 = por %p307, %p308
      %p310 = scmp.ne.s32.totalorder %s299, %s300
      %p311 = scmp.eq.s32.totalorder %s35, 0
      %p312 = por %p310, %p311
      %p313 = scmp.ne.s32.totalorder %s299, %s300
      %p314 = scmp.eq.s32.totalorder %s36, 1
      %p315 = por %p313, %p314
      %p317 = scmp.ne.s32.totalorder %s300, %s316
      %p318 = scmp.eq.s32.totalorder %s36, 0
      %p319 = por %p317, %p318
      %s320 = ssub.s32 %s30, %s37
      %p321 = scmp.eq.s32.totalorder %s320, 0
      %s323 = sadd.s32 %s322, 1
      %s324 = scalar_select %p321, %s322, %s323
      %p327 = pneg %p321
      %p328 = scmp.eq.s32.totalorder %s30, 1
      %p329 = por %p327, %p328
      %p330 = scmp.ne.s32.totalorder %s322, %s325
      %p331 = scmp.eq.s32.totalorder %s30, 0
      %p332 = por %p330, %p331
      %p333 = scmp.ne.s32.totalorder %s322, %s325
      %p334 = scmp.eq.s32.totalorder %s35, 1
      %p335 = por %p333, %p334
      %p336 = scmp.ne.s32.totalorder %s325, %s326
      %p337 = scmp.eq.s32.totalorder %s35, 0
      %p338 = por %p336, %p337
      %p339 = scmp.ne.s32.totalorder %s325, %s326
      %p340 = scmp.eq.s32.totalorder %s36, 1
      %p341 = por %p339, %p340
      %p343 = scmp.ne.s32.totalorder %s326, %s342
      %p344 = scmp.eq.s32.totalorder %s36, 0
      %p345 = por %p343, %p344
      %s346 = ssub.s32 %s30, %s37
      %p347 = scmp.eq.s32.totalorder %s346, 0
      %s349 = sadd.s32 %s348, 1
      %s350 = scalar_select %p347, %s348, %s349
      %p353 = pneg %p347
      %p354 = scmp.eq.s32.totalorder %s30, 1
      %p355 = por %p353, %p354
      %p356 = scmp.ne.s32.totalorder %s348, %s351
      %p357 = scmp.eq.s32.totalorder %s30, 0
      %p358 = por %p356, %p357
      %p359 = scmp.ne.s32.totalorder %s348, %s351
      %p360 = scmp.eq.s32.totalorder %s35, 1
      %p361 = por %p359, %p360
      %p362 = scmp.ne.s32.totalorder %s351, %s352
      %p363 = scmp.eq.s32.totalorder %s35, 0
      %p364 = por %p362, %p363
      %p365 = scmp.ne.s32.totalorder %s351, %s352
      %p366 = scmp.eq.s32.totalorder %s36, 1
      %p367 = por %p365, %p366
      %p369 = scmp.ne.s32.totalorder %s352, %s368
      %p370 = scmp.eq.s32.totalorder %s36, 0
      %p371 = por %p369, %p370
      %s372 = ssub.s32 %s30, %s37
      %p373 = scmp.eq.s32.totalorder %s372, 0
      %s375 = sadd.s32 %s374, 1
      %s376 = scalar_select %p373, %s374, %s375
      %p379 = pneg %p373
      %p380 = scmp.eq.s32.totalorder %s30, 1
      %p381 = por %p379, %p380
      %p382 = scmp.ne.s32.totalorder %s374, %s377
      %p383 = scmp.eq.s32.totalorder %s30, 0
      %p384 = por %p382, %p383
      %p385 = scmp.ne.s32.totalorder %s374, %s377
      %p386 = scmp.eq.s32.totalorder %s35, 1
      %p387 = por %p385, %p386
      %p388 = scmp.ne.s32.totalorder %s377, %s378
      %p389 = scmp.eq.s32.totalorder %s35, 0
      %p390 = por %p388, %p389
      %p391 = scmp.ne.s32.totalorder %s377, %s378
      %p392 = scmp.eq.s32.totalorder %s36, 1
      %p393 = por %p391, %p392
      %p395 = scmp.ne.s32.totalorder %s378, %s394
      %p396 = scmp.eq.s32.totalorder %s36, 0
      %p397 = por %p395, %p396
      %s399 = sadd.s32 %s398, 1
      %p402 = scmp.eq.s32.totalorder %s30, 1
      %p403 = scmp.ne.s32.totalorder %s398, %s400
      %p404 = scmp.eq.s32.totalorder %s30, 0
      %p405 = por %p403, %p404
      %p406 = scmp.ne.s32.totalorder %s398, %s400
      %p407 = scmp.eq.s32.totalorder %s35, 1
      %p408 = por %p406, %p407
      %p409 = scmp.ne.s32.totalorder %s400, %s401
      %p410 = scmp.eq.s32.totalorder %s35, 0
      %p411 = por %p409, %p410
      %p412 = scmp.ne.s32.totalorder %s400, %s401
      %p413 = scmp.eq.s32.totalorder %s36, 1
      %p414 = por %p412, %p413
      %p416 = scmp.ne.s32.totalorder %s401, %s415
      %p417 = scmp.eq.s32.totalorder %s36, 0
      %p418 = por %p416, %p417
      %s420 = sadd.s32 %s419, 1
      %p423 = scmp.eq.s32.totalorder %s30, 1
      %p424 = scmp.ne.s32.totalorder %s419, %s421
      %p425 = scmp.eq.s32.totalorder %s30, 0
      %p426 = por %p424, %p425
      %p427 = scmp.ne.s32.totalorder %s419, %s421
      %p428 = scmp.eq.s32.totalorder %s35, 1
      %p429 = por %p427, %p428
      %p430 = scmp.ne.s32.totalorder %s421, %s422
      %p431 = scmp.eq.s32.totalorder %s35, 0
      %p432 = por %p430, %p431
      %p433 = scmp.ne.s32.totalorder %s421, %s422
      %p434 = scmp.eq.s32.totalorder %s36, 1
      %p435 = por %p433, %p434
      %p437 = scmp.ne.s32.totalorder %s422, %s436
      %p438 = scmp.eq.s32.totalorder %s36, 0
      %p439 = por %p437, %p438
      %s441 = sadd.s32 %s440, 1
      %p444 = scmp.eq.s32.totalorder %s30, 1
      %p445 = scmp.ne.s32.totalorder %s440, %s442
      %p446 = scmp.eq.s32.totalorder %s30, 0
      %p447 = por %p445, %p446
      %p448 = scmp.ne.s32.totalorder %s440, %s442
      %p449 = scmp.eq.s32.totalorder %s35, 1
      %p450 = por %p448, %p449
      %p451 = scmp.ne.s32.totalorder %s442, %s443
      %p452 = scmp.eq.s32.totalorder %s35, 0
      %p453 = por %p451, %p452
      %p454 = scmp.ne.s32.totalorder %s442, %s443
      %p455 = scmp.eq.s32.totalorder %s36, 1
      %p456 = por %p454, %p455
      %p458 = scmp.ne.s32.totalorder %s443, %s457
      %p459 = scmp.eq.s32.totalorder %s36, 0
      %p460 = por %p458, %p459
      %p461 = scmp.le.s32.totalorder 1, %s30
      %p462 = scmp.lt.s32.totalorder %s30, 3
      %p463 = pnand %p461, %p462
      %p464 = pneg %p463
      // Predicated region
      $region9: #{tpu_custom_call.1} parent=5 // pred_check
        _
      $region10: #{tpu_custom_call.1} parent=5 // pred_check_branch
        %466 = sbr.rel (%p463) target = $region12
      $region11: #{tpu_custom_call.1} parent=5 // pred_region
        %s467 = ssub.s32 %s30, 1
        // Predicated region
        $region13: #{tpu_custom_call.1} parent=11 // pred_check
          %p468 = pneg %p51
        $region14: #{tpu_custom_call.1} parent=11 // pred_check_branch
          %470 = sbr.rel (%p468) target = $region16
        $region15: #{tpu_custom_call.1} parent=11 // pred_region
          _
        $region16: #{tpu_custom_call.1} parent=11 // pred_fallthru
          _
        // Predicated region
        $region17: #{tpu_custom_call.1} parent=11 // pred_check
          %p471 = pneg %p72
        $region18: #{tpu_custom_call.1} parent=11 // pred_check_branch
          %473 = sbr.rel (%p471) target = $region20
        $region19: #{tpu_custom_call.1} parent=11 // pred_region
          _
        $region20: #{tpu_custom_call.1} parent=11 // pred_fallthru
          _
        // Predicated region
        $region21: #{tpu_custom_call.1} parent=11 // pred_check
          %p474 = pneg %p93
        $region22: #{tpu_custom_call.1} parent=11 // pred_check_branch
          %476 = sbr.rel (%p474) target = $region24
        $region23: #{tpu_custom_call.1} parent=11 // pred_region
          _
        $region24: #{tpu_custom_call.1} parent=11 // pred_fallthru
          _
        // Predicated region
        $region25: #{tpu_custom_call.1} parent=11 // pred_check
          %p477 = pneg %p114
        $region26: #{tpu_custom_call.1} parent=11 // pred_check_branch
          %479 = sbr.rel (%p477) target = $region28
        $region27: #{tpu_custom_call.1} parent=11 // pred_region
          _
        $region28: #{tpu_custom_call.1} parent=11 // pred_fallthru
          _
        // Predicated region
        $region29: #{tpu_custom_call.1} parent=11 // pred_check
          %p480 = pneg %p135
        $region30: #{tpu_custom_call.1} parent=11 // pred_check_branch
          %482 = sbr.rel (%p480) target = $region32
        $region31: #{tpu_custom_call.1} parent=11 // pred_region
          _
        $region32: #{tpu_custom_call.1} parent=11 // pred_fallthru
          _
        // Predicated region
        $region33: #{tpu_custom_call.1} parent=11 // pred_check
          %p483 = pneg %p156
        $region34: #{tpu_custom_call.1} parent=11 // pred_check_branch
          %485 = sbr.rel (%p483) target = $region36
        $region35: #{tpu_custom_call.1} parent=11 // pred_region
          _
        $region36: #{tpu_custom_call.1} parent=11 // pred_fallthru
          _
        // Predicated region
        $region37: #{tpu_custom_call.1} parent=11 // pred_check
          %p486 = pneg %p411
        $region38: #{tpu_custom_call.1} parent=11 // pred_check_branch
          %488 = sbr.rel (%p486) target = $region40
        $region39: #{tpu_custom_call.1} parent=11 // pred_region
          _
        $region40: #{tpu_custom_call.1} parent=11 // pred_fallthru
          _
        // Predicated region
        $region41: #{tpu_custom_call.1} parent=11 // pred_check
          %p489 = pneg %p432
        $region42: #{tpu_custom_call.1} parent=11 // pred_check_branch
          %491 = sbr.rel (%p489) target = $region44
        $region43: #{tpu_custom_call.1} parent=11 // pred_region
          _
        $region44: #{tpu_custom_call.1} parent=11 // pred_fallthru
          _
      $region12: #{tpu_custom_call.1} parent=5 // pred_fallthru
        _
      %p492 = scmp.lt.s32.totalorder %s30, 2
      // Predicated region
      $region45: #{tpu_custom_call.1} parent=5 // pred_check
        %p493 = pneg %p492
      $region46: #{tpu_custom_call.1} parent=5 // pred_check_branch
        %495 = sbr.rel (%p493) target = $region48
      $region47: #{tpu_custom_call.1} parent=5 // pred_region
        // Predicated region
        $region49: #{tpu_custom_call.1} parent=47 // pred_check
          %p496 = pneg %p176
        $region50: #{tpu_custom_call.1} parent=47 // pred_check_branch
          %498 = sbr.rel (%p496) target = $region52
        $region51: #{tpu_custom_call.1} parent=47 // pred_region
          %p499 = scmp.lt.s32.totalorder %s30, 1
          %s500 = scalar_select %p499, %s30, 1
          %s501 = smul.addr %s500, 8
          %s502 = scalar_lea.vmem %s6, %s501
        $region52: #{tpu_custom_call.1} parent=47 // pred_fallthru
          _
        // Predicated region
        $region53: #{tpu_custom_call.1} parent=47 // pred_check
          %p503 = pneg %p202
        $region54: #{tpu_custom_call.1} parent=47 // pred_check_branch
          %505 = sbr.rel (%p503) target = $region56
        $region55: #{tpu_custom_call.1} parent=47 // pred_region
          %p506 = scmp.lt.s32.totalorder %s30, 1
          %s507 = scalar_select %p506, %s30, 1
          %s508 = scalar_lea.vmem %s7, %s507
        $region56: #{tpu_custom_call.1} parent=47 // pred_fallthru
          _
        // Predicated region
        $region57: #{tpu_custom_call.1} parent=47 // pred_check
          %p509 = pneg %p228
        $region58: #{tpu_custom_call.1} parent=47 // pred_check_branch
          %511 = sbr.rel (%p509) target = $region60
        $region59: #{tpu_custom_call.1} parent=47 // pred_region
          %p512 = scmp.lt.s32.totalorder %s30, 1
          %s513 = scalar_select %p512, %s30, 1
          %s514 = scalar_lea.vmem %s8, %s513
        $region60: #{tpu_custom_call.1} parent=47 // pred_fallthru
          _
        // Predicated region
        $region61: #{tpu_custom_call.1} parent=47 // pred_check
          %p515 = pneg %p254
        $region62: #{tpu_custom_call.1} parent=47 // pred_check_branch
          %517 = sbr.rel (%p515) target = $region64
        $region63: #{tpu_custom_call.1} parent=47 // pred_region
          %p518 = scmp.lt.s32.totalorder %s30, 1
          %s519 = scalar_select %p518, %s30, 1
          %s520 = scalar_lea.vmem %s9, %s519
        $region64: #{tpu_custom_call.1} parent=47 // pred_fallthru
          _
        // Predicated region
        $region65: #{tpu_custom_call.1} parent=47 // pred_check
          %p521 = pneg %p280
        $region66: #{tpu_custom_call.1} parent=47 // pred_check_branch
          %523 = sbr.rel (%p521) target = $region68
        $region67: #{tpu_custom_call.1} parent=47 // pred_region
          %s524 = sand.u32 %s270, 1
          %s525 = scalar_lea.sflag [#allocation3], %s524
          %s526 = sand.u32 %s270, 1
          %s527 = smul.addr %s526, 128
          %s528 = scalar_lea.vmem [#allocation2], %s527
          %s530 = ssub.s32 2048, 2048
          %531 = vsyncadd %s525, %s530
          %s532 = smul.addr %s30, 32
          %s533 = smul.addr %s532, 64
          %s534 = scalar_lea.hbm %s10, %s533
          %s535 = sshll.u32 %s528, 4
          %s536 = int_to_ptr.vmem [resolvable:$true] %s535
          %541 = dma.hbm_to_vmem [thread:$0]  %s534, 2048, %s536, %s525, 128, 128, 8
        $region68: #{tpu_custom_call.1} parent=47 // pred_fallthru
          _
        // Predicated region
        $region69: #{tpu_custom_call.1} parent=47 // pred_check
          %p542 = pneg %p306
        $region70: #{tpu_custom_call.1} parent=47 // pred_check_branch
          %544 = sbr.rel (%p542) target = $region72
        $region71: #{tpu_custom_call.1} parent=47 // pred_region
          %p545 = scmp.lt.s32.totalorder %s30, 1
          %s546 = scalar_select %p545, %s30, 1
          %s547 = smul.addr %s546, 2
          %s548 = scalar_lea.vmem %s11, %s547
        $region72: #{tpu_custom_call.1} parent=47 // pred_fallthru
          _
        // Predicated region
        $region73: #{tpu_custom_call.1} parent=47 // pred_check
          %p549 = pneg %p332
        $region74: #{tpu_custom_call.1} parent=47 // pred_check_branch
          %551 = sbr.rel (%p549) target = $region76
        $region75: #{tpu_custom_call.1} parent=47 // pred_region
          %s552 = sand.u32 %s322, 1
          %s553 = scalar_lea.sflag [#allocation6], %s552
          %s554 = sand.u32 %s322, 1
          %s555 = smul.addr %s554, 128
          %s556 = scalar_lea.vmem [#allocation5], %s555
          %s558 = ssub.s32 2048, 2048
          %559 = vsyncadd %s553, %s558
          %s560 = smul.addr %s30, 32
          %s561 = smul.addr %s560, 64
          %s562 = scalar_lea.hbm %s12, %s561
          %s563 = sshll.u32 %s556, 4
          %s564 = int_to_ptr.vmem [resolvable:$true] %s563
          %569 = dma.hbm_to_vmem [thread:$0]  %s562, 2048, %s564, %s553, 64, 64, 4
        $region76: #{tpu_custom_call.1} parent=47 // pred_fallthru
          _
        // Predicated region
        $region77: #{tpu_custom_call.1} parent=47 // pred_check
          %p570 = pneg %p358
        $region78: #{tpu_custom_call.1} parent=47 // pred_check_branch
          %572 = sbr.rel (%p570) target = $region80
        $region79: #{tpu_custom_call.1} parent=47 // pred_region
          %p573 = scmp.lt.s32.totalorder %s30, 1
          %s574 = scalar_select %p573, %s30, 1
          %s575 = scalar_lea.vmem %s13, %s574
        $region80: #{tpu_custom_call.1} parent=47 // pred_fallthru
          _
        // Predicated region
        $region81: #{tpu_custom_call.1} parent=47 // pred_check
          %p576 = pneg %p384
        $region82: #{tpu_custom_call.1} parent=47 // pred_check_branch
          %578 = sbr.rel (%p576) target = $region84
        $region83: #{tpu_custom_call.1} parent=47 // pred_region
          %p579 = scmp.lt.s32.totalorder %s30, 1
          %s580 = scalar_select %p579, %s30, 1
          %s581 = scalar_lea.vmem %s14, %s580
        $region84: #{tpu_custom_call.1} parent=47 // pred_fallthru
          _
      $region48: #{tpu_custom_call.1} parent=5 // pred_fallthru
        _
      %p582 = scmp.le.s32.totalorder 1, %s30
      %p583 = scmp.lt.s32.totalorder %s30, 3
      %p584 = pnand %p582, %p583
      %p585 = pneg %p584
      // Predicated region
      $region85: #{tpu_custom_call.1} parent=5 // pred_check
        _
      $region86: #{tpu_custom_call.1} parent=5 // pred_check_branch
        %587 = sbr.rel (%p584) target = $region88
      $region87: #{tpu_custom_call.1} parent=5 // pred_region
        %s588 = ssub.s32 %s30, 1
        %s589 = sand.u32 %s273, 1
        %s590 = scalar_lea.sflag [#allocation3], %s589
        %s591 = sand.u32 %s273, 1
        %s592 = smul.addr %s591, 128
        %s593 = scalar_lea.vmem [#allocation2], %s592
        // Predicated region
        $region89: #{tpu_custom_call.1} parent=87 // pred_check
          %p594 = pneg %p286
        $region90: #{tpu_custom_call.1} parent=87 // pred_check_branch
          %596 = sbr.rel (%p594) target = $region92
        $region91: #{tpu_custom_call.1} parent=87 // pred_region
          %597 = dma.done %s590, 2048
        $region92: #{tpu_custom_call.1} parent=87 // pred_fallthru
          _
        %s598 = sand.u32 %s325, 1
        %s599 = scalar_lea.sflag [#allocation6], %s598
        %s600 = sand.u32 %s325, 1
        %s601 = smul.addr %s600, 128
        %s602 = scalar_lea.vmem [#allocation5], %s601
        // Predicated region
        $region93: #{tpu_custom_call.1} parent=87 // pred_check
          %p603 = pneg %p338
        $region94: #{tpu_custom_call.1} parent=87 // pred_check_branch
          %605 = sbr.rel (%p603) target = $region96
        $region95: #{tpu_custom_call.1} parent=87 // pred_region
          %606 = dma.done %s599, 2048
        $region96: #{tpu_custom_call.1} parent=87 // pred_fallthru
          _
        %p607 = pneg %p51
        %p608 = pneg %p48
        %p609 = pneg %p72
        %p610 = pneg %p69
        %p611 = pneg %p93
        %p612 = pneg %p90
        %p613 = pneg %p114
        %p614 = pneg %p111
        %p615 = pneg %p135
        %p616 = pneg %p132
        %p617 = pneg %p156
        %p618 = pneg %p153
        %p619 = scmp.lt.s32.totalorder %s35, 1
        %s620 = scalar_select %p619, %s35, 1
        %s621 = smul.addr %s620, 8
        %s622 = scalar_lea.vmem %s6, %s621
        %p623 = pneg %p182
        %p624 = pneg %p179
        %p625 = scmp.lt.s32.totalorder %s35, 1
        %s626 = scalar_select %p625, %s35, 1
        %s627 = scalar_lea.vmem %s7, %s626
        %p628 = pneg %p208
        %p629 = pneg %p205
        %p630 = scmp.lt.s32.totalorder %s35, 1
        %s631 = scalar_select %p630, %s35, 1
        %s632 = scalar_lea.vmem %s8, %s631
        %p633 = pneg %p234
        %p634 = pneg %p231
        %p635 = scmp.lt.s32.totalorder %s35, 1
        %s636 = scalar_select %p635, %s35, 1
        %s637 = scalar_lea.vmem %s9, %s636
        %p638 = pneg %p260
        %p639 = pneg %p257
        %s640 = sand.u32 %s273, 1
        %s641 = scalar_lea.sflag [#allocation3], %s640
        %s642 = sand.u32 %s273, 1
        %s643 = smul.addr %s642, 128
        %s644 = scalar_lea.vmem [#allocation2], %s643
        %p645 = pneg %p286
        %p646 = pneg %p283
        %p647 = scmp.lt.s32.totalorder %s35, 1
        %s648 = scalar_select %p647, %s35, 1
        %s649 = smul.addr %s648, 2
        %s650 = scalar_lea.vmem %s11, %s649
        %p651 = pneg %p312
        %p652 = pneg %p309
        %s653 = sand.u32 %s325, 1
        %s654 = scalar_lea.sflag [#allocation6], %s653
        %s655 = sand.u32 %s325, 1
        %s656 = smul.addr %s655, 128
        %s657 = scalar_lea.vmem [#allocation5], %s656
        %p658 = pneg %p338
        %p659 = pneg %p335
        %p660 = scmp.lt.s32.totalorder %s35, 1
        %s661 = scalar_select %p660, %s35, 1
        %s662 = scalar_lea.vmem %s13, %s661
        %p663 = pneg %p364
        %p664 = pneg %p361
        %p665 = scmp.lt.s32.totalorder %s35, 1
        %s666 = scalar_select %p665, %s35, 1
        %s667 = scalar_lea.vmem %s14, %s666
        %p668 = pneg %p390
        %p669 = pneg %p387
        %p670 = pneg %p411
        %p671 = pneg %p408
        %p672 = pneg %p432
        %p673 = pneg %p429
        %p674 = pneg %p453
        %p675 = pneg %p450
        %p676 = scmp.lt.s32.totalorder %s35, 1
        %s677 = scalar_select %p676, %s35, 1
        %s678 = smul.addr %s677, 8
        %s679 = scalar_lea.vmem %s6, %s678
        %p680 = scmp.lt.s32.totalorder %s35, 1
        %s681 = scalar_select %p680, %s35, 1
        %s682 = scalar_lea.vmem %s7, %s681
        %p683 = scmp.lt.s32.totalorder %s35, 1
        %s684 = scalar_select %p683, %s35, 1
        %s685 = scalar_lea.vmem %s8, %s684
        %p686 = scmp.lt.s32.totalorder %s35, 1
        %s687 = scalar_select %p686, %s35, 1
        %s688 = scalar_lea.vmem %s9, %s687
        %p689 = scmp.lt.s32.totalorder %s35, 1
        %s690 = scalar_select %p689, %s35, 1
        %s691 = smul.addr %s690, 2
        %s692 = scalar_lea.vmem %s11, %s691
        %p693 = scmp.lt.s32.totalorder %s35, 1
        %s694 = scalar_select %p693, %s35, 1
        %s695 = scalar_lea.vmem %s13, %s694
        %p696 = scmp.lt.s32.totalorder %s35, 1
        %s697 = scalar_select %p696, %s35, 1
        %s698 = scalar_lea.vmem %s14, %s697
        %p700 = scmp.eq.s32.totalorder %s35, 0
        // Predicated region
        $region97: #{tpu_custom_call.1} parent=87 // pred_check
          %p701 = pneg %p700
        $region98: #{tpu_custom_call.1} parent=87 // pred_check_branch
          %703 = sbr.rel (%p701) target = $region100
        $region99: #{tpu_custom_call.1} parent=87 // pred_region
          %v704 = vld [vmem:[%s0] sm:$0xf]
          %v705 = vld [vmem:[%s0 + $0x4] sm:$0xf]
          %v706 = vld [vmem:[%s0 + $0x8] sm:$0xf]
          %v707 = vld [vmem:[%s0 + $0xc] sm:$0xf]
          %v708 = vld [vmem:[%s0 + $0x10] sm:$0xf]
          %v709 = vld [vmem:[%s0 + $0x14] sm:$0xf]
          %v710 = vld [vmem:[%s0 + $0x18] sm:$0xf]
          %v711 = vld [vmem:[%s0 + $0x1c] sm:$0xf]
          %v712 = vld [vmem:[%s0 + $0x20] sm:$0xf]
          %v713 = vld [vmem:[%s0 + $0x24] sm:$0xf]
          %v714 = vld [vmem:[%s0 + $0x28] sm:$0xf]
          %v715 = vld [vmem:[%s2] sm:$0xf]
          %v716 = vld [vmem:[%s2 + $0x4] sm:$0xf]
          %v717 = vld [vmem:[%s2 + $0x8] sm:$0xf]
          %v718 = vld [vmem:[%s2 + $0xc] sm:$0xf]
          %v719 = vld [vmem:[%s2 + $0x10] sm:$0xf]
          %v720 = vld [vmem:[%s2 + $0x14] sm:$0xf]
          %v721 = vld [vmem:[%s2 + $0x18] sm:$0xf]
          %v722 = vld [vmem:[%s2 + $0x1c] sm:$0xf]
          %v723 = vld [vmem:[%s2 + $0x20] sm:$0xf]
          %v724 = vld [vmem:[%s2 + $0x24] sm:$0xf]
          %v725 = vld [vmem:[%s2 + $0x28] sm:$0xf]
          %v726 = vld [vmem:[%s2 + $0x2c] sm:$0xf]
          %v727 = vld [vmem:[%s2 + $0x30] sm:$0xf]
          %v728 = vld [vmem:[%s2 + $0x34] sm:$0xf]
          %v729 = vld [vmem:[%s3] sm:$0x1]
          %v731 = vlaneseq
          %v732 = vshrl.u32 %v731, 7
          %v733 = vsub.s32 0, %v732
          %v734 = vrot.slane %v729, %v733
          %v747 = vunpack.c.l.b16 %v704
          %v748 = vunpack.c.l.b16 %v705
          %v749 = vunpack.c.l.b16 %v706
          %v750 = vunpack.c.l.b16 %v707
          %v751 = vunpack.c.l.b16 %v708
          %v752 = vunpack.c.l.b16 %v709
          %v753 = vunpack.c.l.b16 %v710
          %v754 = vunpack.c.l.b16 %v711
          %v755 = vunpack.c.l.b16 %v712
          %v756 = vunpack.c.l.b16 %v713
          %v757 = vunpack.c.l.b16 %v714
          %v758 = vpack.c.b16 %v748, %v747
          %v759 = vpack.c.b16 %v750, %v749
          %v760 = vpack.c.b16 %v752, %v751
          %v761 = vpack.c.b16 %v754, %v753
          %v762 = vpack.c.b16 %v756, %v755
          %v763 = vpack.c.b16 %v757, %v757
          %v778 = vunpack.c.l.b16 %v715
          %v779 = vunpack.c.l.b16 %v716
          %v780 = vunpack.c.l.b16 %v717
          %v781 = vunpack.c.l.b16 %v718
          %v782 = vunpack.c.l.b16 %v719
          %v783 = vunpack.c.l.b16 %v720
          %v784 = vunpack.c.l.b16 %v721
          %v785 = vunpack.c.l.b16 %v722
          %v786 = vunpack.c.l.b16 %v723
          %v787 = vunpack.c.l.b16 %v724
          %v788 = vunpack.c.l.b16 %v725
          %v789 = vunpack.c.l.b16 %v726
          %v790 = vunpack.c.l.b16 %v727
          %v791 = vunpack.c.l.b16 %v728
          %v792 = vpack.c.b16 %v779, %v778
          %v793 = vpack.c.b16 %v781, %v780
          %v794 = vpack.c.b16 %v783, %v782
          %v795 = vpack.c.b16 %v785, %v784
          %v796 = vpack.c.b16 %v787, %v786
          %v797 = vpack.c.b16 %v789, %v788
          %v798 = vpack.c.b16 %v791, %v790
          %vm806 = vcmask 916480
          %v808 = vsel %vm806, %v758, 0
          %v811 = vsel %vm806, %v759, 0
          %v814 = vsel %vm806, %v760, 0
          %v817 = vsel %vm806, %v761, 0
          %v820 = vsel %vm806, %v762, 0
          %v823 = vsel %vm806, %v763, 0
          %825 = vmatprep.subr.bf16.mxu0 0
          %826 = vmatpush1.bf16.msra.mxu0 0
          %827 = vmatprep.subr.bf16.mxu0 0
          %828 = vmatpush1.bf16.msra.mxu0 %v798
          %829 = vmatprep.subr.bf16.mxu0 0
          %830 = vmatpush1.bf16.msra.mxu0 %v797
          %831 = vmatprep.subr.bf16.mxu0 0
          %832 = vmatpush1.bf16.msra.mxu0 %v796
          %833 = vmatprep.subr.bf16.mxu0 0
          %834 = vmatpush1.bf16.msra.mxu0 %v795
          %835 = vmatprep.subr.bf16.mxu0 0
          %836 = vmatpush1.bf16.msra.mxu0 %v794
          %837 = vmatprep.subr.bf16.mxu0 0
          %838 = vmatpush1.bf16.msra.mxu0 %v793
          %839 = vmatprep.subr.bf16.mxu0 0
          %840 = vmatpush1.bf16.msra.mxu0 %v792
          %841 = vmatprep.subr.bf16.mxu0 0
          %842 = vmatpush2.bf16.msra.mxu0 0
          %843 = vmatprep.subr.bf16.mxu0 0
          %844 = vmatpush2.bf16.msra.mxu0 0
          %845 = vmatprep.subr.bf16.mxu0 0
          %846 = vmatpush2.bf16.msra.mxu0 0
          %847 = vmatprep.subr.bf16.mxu0 0
          %848 = vmatpush2.bf16.msra.mxu0 0
          %849 = vmatprep.subr.bf16.mxu0 0
          %850 = vmatpush2.bf16.msra.mxu0 0
          %851 = vmatprep.subr.bf16.mxu0 0
          %852 = vmatpush2.bf16.msra.mxu0 0
          %853 = vmatprep.subr.bf16.mxu0 0
          %854 = vmatpush2.bf16.msra.mxu0 0
          %855 = vmatprep.subr.bf16.mxu0 0
          %856 = vmatpush2.bf16.msra.mxu0 0
          %857 = vmatprep.mubr.bf16.mxu0 0
          %858 = vmatmul.mubr.bf16.gmra.mxu0 %v808
          %v859 = vpop.f32.mrf.mxu0
          %v860 = vadd.f32 %v734, %v859
          %v861 = vpop.f32.mrf.mxu0
          %v862 = vpop.f32.mrf.mxu0
          %v863 = vadd.f32 %v734, %v862
          %v864 = vpop.f32.mrf.mxu0
          %865 = vmatprep.mubr.bf16.mxu0 0
          %866 = vmatmul.mubr.bf16.gmra.mxu0 %v811
          %v867 = vpop.f32.mrf.mxu0
          %v868 = vadd.f32 %v734, %v867
          %v869 = vpop.f32.mrf.mxu0
          %v870 = vpop.f32.mrf.mxu0
          %v871 = vadd.f32 %v734, %v870
          %v872 = vpop.f32.mrf.mxu0
          %873 = vmatprep.mubr.bf16.mxu0 0
          %874 = vmatmul.mubr.bf16.gmra.mxu0 %v814
          %v875 = vpop.f32.mrf.mxu0
          %v876 = vadd.f32 %v734, %v875
          %v877 = vpop.f32.mrf.mxu0
          %v878 = vpop.f32.mrf.mxu0
          %v879 = vadd.f32 %v734, %v878
          %v880 = vpop.f32.mrf.mxu0
          %881 = vmatprep.mubr.bf16.mxu0 0
          %882 = vmatmul.mubr.bf16.gmra.mxu0 %v817
          %v883 = vpop.f32.mrf.mxu0
          %v884 = vadd.f32 %v734, %v883
          %v885 = vpop.f32.mrf.mxu0
          %v886 = vpop.f32.mrf.mxu0
          %v887 = vadd.f32 %v734, %v886
          %v888 = vpop.f32.mrf.mxu0
          %889 = vmatprep.mubr.bf16.mxu0 0
          %890 = vmatmul.mubr.bf16.gmra.mxu0 %v820
          %v891 = vpop.f32.mrf.mxu0
          %v892 = vadd.f32 %v734, %v891
          %v893 = vpop.f32.mrf.mxu0
          %v894 = vpop.f32.mrf.mxu0
          %v895 = vadd.f32 %v734, %v894
          %v896 = vpop.f32.mrf.mxu0
          %897 = vmatprep.mubr.bf16.mxu0 0
          %898 = vmatmul.mubr.bf16.gmra.mxu0 %v823
          %v899 = vpop.f32.mrf.mxu0
          %v900 = vadd.f32 %v734, %v899
          %v901 = vpop.f32.mrf.mxu0
          %v902 = vpop.f32.mrf.mxu0
          %v903 = vpop.f32.mrf.mxu0
          %904 = vdwg.mxu0
          %v905 = vld [vmem:[%s4] sm:$0x1]
          %v906 = vld [vmem:[%s5] sm:$0x1]
          %907 = vadd.xlane.f32.xlu0 %v860
          %v908 = vpop.xlane.xlu0 %907
          %909 = vadd.xlane.f32.xlu0 %v863
          %v910 = vpop.xlane.xlu0 %909
          %911 = vadd.xlane.f32.xlu0 %v868
          %v912 = vpop.xlane.xlu0 %911
          %913 = vadd.xlane.f32.xlu0 %v871
          %v914 = vpop.xlane.xlu0 %913
          %915 = vadd.xlane.f32.xlu0 %v876
          %v916 = vpop.xlane.xlu0 %915
          %917 = vadd.xlane.f32.xlu0 %v879
          %v918 = vpop.xlane.xlu0 %917
          %919 = vadd.xlane.f32.xlu0 %v884
          %v920 = vpop.xlane.xlu0 %919
          %921 = vadd.xlane.f32.xlu0 %v887
          %v922 = vpop.xlane.xlu0 %921
          %923 = vadd.xlane.f32.xlu0 %v892
          %v924 = vpop.xlane.xlu0 %923
          %925 = vadd.xlane.f32.xlu0 %v895
          %v926 = vpop.xlane.xlu0 %925
          %927 = vadd.xlane.f32.xlu0 %v900
          %v928 = vpop.xlane.xlu0 %927
          %v929 = vrcp.pop 128.0
          %v930 = vmul.f32 %v908, %v929
          %v931 = vmul.f32 %v910, %v929
          %v932 = vmul.f32 %v912, %v929
          %v933 = vmul.f32 %v914, %v929
          %v934 = vmul.f32 %v916, %v929
          %v935 = vmul.f32 %v918, %v929
          %v936 = vmul.f32 %v920, %v929
          %v937 = vmul.f32 %v922, %v929
          %v938 = vmul.f32 %v924, %v929
          %v939 = vmul.f32 %v926, %v929
          %v940 = vmul.f32 %v928, %v929
          %v941 = vsub.f32 %v860, %v930
          %v942 = vsub.f32 %v863, %v931
          %v943 = vsub.f32 %v868, %v932
          %v944 = vsub.f32 %v871, %v933
          %v945 = vsub.f32 %v876, %v934
          %v946 = vsub.f32 %v879, %v935
          %v947 = vsub.f32 %v884, %v936
          %v948 = vsub.f32 %v887, %v937
          %v949 = vsub.f32 %v892, %v938
          %v950 = vsub.f32 %v895, %v939
          %v951 = vsub.f32 %v900, %v940
          %v952 = vmul.f32 %v941, %v941
          %v953 = vmul.f32 %v942, %v942
          %v954 = vmul.f32 %v943, %v943
          %v955 = vmul.f32 %v944, %v944
          %v956 = vmul.f32 %v945, %v945
          %v957 = vmul.f32 %v946, %v946
          %v958 = vmul.f32 %v947, %v947
          %v959 = vmul.f32 %v948, %v948
          %v960 = vmul.f32 %v949, %v949
          %v961 = vmul.f32 %v950, %v950
          %v962 = vmul.f32 %v951, %v951
          %963 = vadd.xlane.f32.xlu0 %v952
          %v964 = vpop.xlane.xlu0 %963
          %965 = vadd.xlane.f32.xlu0 %v953
          %v966 = vpop.xlane.xlu0 %965
          %967 = vadd.xlane.f32.xlu0 %v954
          %v968 = vpop.xlane.xlu0 %967
          %969 = vadd.xlane.f32.xlu0 %v955
          %v970 = vpop.xlane.xlu0 %969
          %971 = vadd.xlane.f32.xlu0 %v956
          %v972 = vpop.xlane.xlu0 %971
          %973 = vadd.xlane.f32.xlu0 %v957
          %v974 = vpop.xlane.xlu0 %973
          %975 = vadd.xlane.f32.xlu0 %v958
          %v976 = vpop.xlane.xlu0 %975
          %977 = vadd.xlane.f32.xlu0 %v959
          %v978 = vpop.xlane.xlu0 %977
          %979 = vadd.xlane.f32.xlu0 %v960
          %v980 = vpop.xlane.xlu0 %979
          %981 = vadd.xlane.f32.xlu0 %v961
          %v982 = vpop.xlane.xlu0 %981
          %983 = vadd.xlane.f32.xlu0 %v962
          %v984 = vpop.xlane.xlu0 %983
          %v985 = vmul.f32 %v964, %v929
          %v986 = vmul.f32 %v966, %v929
          %v987 = vmul.f32 %v968, %v929
          %v988 = vmul.f32 %v970, %v929
          %v989 = vmul.f32 %v972, %v929
          %v990 = vmul.f32 %v974, %v929
          %v991 = vmul.f32 %v976, %v929
          %v992 = vmul.f32 %v978, %v929
          %v993 = vmul.f32 %v980, %v929
          %v994 = vmul.f32 %v982, %v929
          %v995 = vmul.f32 %v984, %v929
          %v996 = vadd.f32 %v985, 1e-06
          %v997 = vadd.f32 %v986, 1e-06
          %v998 = vadd.f32 %v987, 1e-06
          %v999 = vadd.f32 %v988, 1e-06
          %v1000 = vadd.f32 %v989, 1e-06
          %v1001 = vadd.f32 %v990, 1e-06
          %v1002 = vadd.f32 %v991, 1e-06
          %v1003 = vadd.f32 %v992, 1e-06
          %v1004 = vadd.f32 %v993, 1e-06
          %v1005 = vadd.f32 %v994, 1e-06
          %v1006 = vadd.f32 %v995, 1e-06
          %v1007 = vrsqrt.pop %v996
          %v1008 = vrsqrt.pop %v997
          %v1009 = vrsqrt.pop %v998
          %v1010 = vrsqrt.pop %v999
          %v1011 = vrsqrt.pop %v1000
          %v1012 = vrsqrt.pop %v1001
          %v1013 = vrsqrt.pop %v1002
          %v1014 = vrsqrt.pop %v1003
          %v1015 = vrsqrt.pop %v1004
          %v1016 = vrsqrt.pop %v1005
          %v1017 = vrsqrt.pop %v1006
          %v1018 = vmul.f32 %v941, %v1007
          %v1019 = vmul.f32 %v942, %v1008
          %v1020 = vmul.f32 %v943, %v1009
          %v1021 = vmul.f32 %v944, %v1010
          %v1022 = vmul.f32 %v945, %v1011
          %v1023 = vmul.f32 %v946, %v1012
          %v1024 = vmul.f32 %v947, %v1013
          %v1025 = vmul.f32 %v948, %v1014
          %v1026 = vmul.f32 %v949, %v1015
          %v1027 = vmul.f32 %v950, %v1016
          %v1028 = vmul.f32 %v951, %v1017
          %v1030 = vlaneseq
          %v1031 = vshrl.u32 %v1030, 7
          %v1032 = vsub.s32 0, %v1031
          %v1033 = vrot.slane %v905, %v1032
          %v1035 = vmul.f32 %v1018, %v1033
          %v1036 = vmul.f32 %v1019, %v1033
          %v1037 = vmul.f32 %v1020, %v1033
          %v1038 = vmul.f32 %v1021, %v1033
          %v1039 = vmul.f32 %v1022, %v1033
          %v1040 = vmul.f32 %v1023, %v1033
          %v1041 = vmul.f32 %v1024, %v1033
          %v1042 = vmul.f32 %v1025, %v1033
          %v1043 = vmul.f32 %v1026, %v1033
          %v1044 = vmul.f32 %v1027, %v1033
          %v1045 = vmul.f32 %v1028, %v1033
          %v1047 = vlaneseq
          %v1048 = vshrl.u32 %v1047, 7
          %v1049 = vsub.s32 0, %v1048
          %v1050 = vrot.slane %v906, %v1049
          %v1052 = vadd.f32 %v1035, %v1050
          %v1053 = vadd.f32 %v1036, %v1050
          %v1054 = vadd.f32 %v1037, %v1050
          %v1055 = vadd.f32 %v1038, %v1050
          %v1056 = vadd.f32 %v1039, %v1050
          %v1057 = vadd.f32 %v1040, %v1050
          %v1058 = vadd.f32 %v1041, %v1050
          %v1059 = vadd.f32 %v1042, %v1050
          %v1060 = vadd.f32 %v1043, %v1050
          %v1061 = vadd.f32 %v1044, %v1050
          %v1062 = vadd.f32 %v1045, %v1050
          %1063 = vst [vmem:[#allocation7] sm:$0xff] %v1052
          %1064 = vst [vmem:[#allocation7 + $0x8] sm:$0xff] %v1053
          %1065 = vst [vmem:[#allocation7 + $0x10] sm:$0xff] %v1054
          %1066 = vst [vmem:[#allocation7 + $0x18] sm:$0xff] %v1055
          %1067 = vst [vmem:[#allocation7 + $0x20] sm:$0xff] %v1056
          %1068 = vst [vmem:[#allocation7 + $0x28] sm:$0xff] %v1057
          %1069 = vst [vmem:[#allocation7 + $0x30] sm:$0xff] %v1058
          %1070 = vst [vmem:[#allocation7 + $0x38] sm:$0xff] %v1059
          %1071 = vst [vmem:[#allocation7 + $0x40] sm:$0xff] %v1060
          %1072 = vst [vmem:[#allocation7 + $0x48] sm:$0xff] %v1061
          %1073 = vst [vmem:[#allocation7 + $0x50] sm:$0xff] %v1062
        $region100: #{tpu_custom_call.1} parent=87 // pred_fallthru
          _
        %v1074 = vld [vmem:[#allocation7] sm:$0xff]
        %v1075 = vld [vmem:[#allocation7 + $0x8] sm:$0xff]
        %v1076 = vld [vmem:[#allocation7 + $0x10] sm:$0xff]
        %v1077 = vld [vmem:[#allocation7 + $0x18] sm:$0xff]
        %v1078 = vld [vmem:[#allocation7 + $0x20] sm:$0xff]
        %v1079 = vld [vmem:[#allocation7 + $0x28] sm:$0xff]
        %v1080 = vld [vmem:[#allocation7 + $0x30] sm:$0xff]
        %v1081 = vld [vmem:[#allocation7 + $0x38] sm:$0xff]
        %v1082 = vld [vmem:[#allocation7 + $0x40] sm:$0xff]
        %v1083 = vld [vmem:[#allocation7 + $0x48] sm:$0xff]
        %v1084 = vld [vmem:[#allocation7 + $0x50] sm:$0xff]
        %v1085 = vld [vmem:[%s679] sm:$0x7f]
        %v1086 = vlaneseq
        %v1087 = vshrl.u32 %v1086, 7
        %v1088 = vsub.s32 3, %v1087
        %v1089 = vrot.slane %v1085, %v1088
        %v1090 = vmul.f32 %v1074, %v1089
        %v1091 = vmul.f32 %v1075, %v1089
        %v1092 = vmul.f32 %v1076, %v1089
        %v1093 = vmul.f32 %v1077, %v1089
        %v1094 = vmul.f32 %v1078, %v1089
        %v1095 = vmul.f32 %v1079, %v1089
        %v1096 = vmul.f32 %v1080, %v1089
        %v1097 = vmul.f32 %v1081, %v1089
        %v1098 = vmul.f32 %v1082, %v1089
        %v1099 = vmul.f32 %v1083, %v1089
        %v1100 = vmul.f32 %v1084, %v1089
        %v1101 = vrot.slane %v1074, 5
        %v1102 = vrot.slane %v1075, 5
        %v1103 = vrot.slane %v1076, 5
        %v1104 = vrot.slane %v1077, 5
        %v1105 = vrot.slane %v1078, 5
        %v1106 = vrot.slane %v1079, 5
        %v1107 = vrot.slane %v1080, 5
        %v1108 = vrot.slane %v1081, 5
        %v1109 = vrot.slane %v1082, 5
        %v1110 = vrot.slane %v1083, 5
        %v1111 = vrot.slane %v1084, 5
        %v1112 = vlaneseq
        %v1113 = vshrl.u32 %v1112, 7
        %vm1114 = vcmp.lt.s32.totalorder %v1113, 3
        %v1115 = vsel %vm1114, %v1110, %v1111
        %v1116 = vsel %vm1114, %v1109, %v1110
        %v1117 = vsel %vm1114, %v1108, %v1109
        %v1118 = vsel %vm1114, %v1107, %v1108
        %v1119 = vsel %vm1114, %v1106, %v1107
        %v1120 = vsel %vm1114, %v1105, %v1106
        %v1121 = vsel %vm1114, %v1104, %v1105
        %v1122 = vsel %vm1114, %v1103, %v1104
        %v1123 = vsel %vm1114, %v1102, %v1103
        %v1124 = vsel %vm1114, %v1101, %v1102
        %v1125 = vsel %vm1114, %v1111, %v1101
        %v1126 = vld [vmem:[%s1] sm:$0xff]
        %v1127 = vld [vmem:[%s1 + $0x8] sm:$0xff]
        %v1128 = vld [vmem:[%s1 + $0x10] sm:$0xff]
        %v1129 = vld [vmem:[%s1 + $0x18] sm:$0xff]
        %v1130 = vld [vmem:[%s1 + $0x20] sm:$0xff]
        %v1131 = vld [vmem:[%s1 + $0x28] sm:$0xff]
        %v1132 = vld [vmem:[%s1 + $0x30] sm:$0xff]
        %v1133 = vld [vmem:[%s1 + $0x38] sm:$0xff]
        %v1134 = vld [vmem:[%s1 + $0x40] sm:$0xff]
        %v1135 = vld [vmem:[%s1 + $0x48] sm:$0xff]
        %v1136 = vld [vmem:[%s1 + $0x50] sm:$0xff]
        %1138 = vset.pattern.permute.xlu0 0
        %1139 = vperm.xlu0 %1138, %v1126
        %v1140 = vpop.permute.xlu0 %1139
        %1143 = vset.pattern.permute.xlu0 0
        %1144 = vperm.xlu0 %1143, %v1127
        %v1145 = vpop.permute.xlu0 %1144
        %1148 = vset.pattern.permute.xlu0 0
        %1149 = vperm.xlu0 %1148, %v1128
        %v1150 = vpop.permute.xlu0 %1149
        %1153 = vset.pattern.permute.xlu0 0
        %1154 = vperm.xlu0 %1153, %v1129
        %v1155 = vpop.permute.xlu0 %1154
        %1158 = vset.pattern.permute.xlu0 0
        %1159 = vperm.xlu0 %1158, %v1130
        %v1160 = vpop.permute.xlu0 %1159
        %1163 = vset.pattern.permute.xlu0 0
        %1164 = vperm.xlu0 %1163, %v1131
        %v1165 = vpop.permute.xlu0 %1164
        %1168 = vset.pattern.permute.xlu0 0
        %1169 = vperm.xlu0 %1168, %v1132
        %v1170 = vpop.permute.xlu0 %1169
        %1173 = vset.pattern.permute.xlu0 0
        %1174 = vperm.xlu0 %1173, %v1133
        %v1175 = vpop.permute.xlu0 %1174
        %1178 = vset.pattern.permute.xlu0 0
        %1179 = vperm.xlu0 %1178, %v1134
        %v1180 = vpop.permute.xlu0 %1179
        %1183 = vset.pattern.permute.xlu0 0
        %1184 = vperm.xlu0 %1183, %v1135
        %v1185 = vpop.permute.xlu0 %1184
        %1188 = vset.pattern.permute.xlu0 0
        %1189 = vperm.xlu0 %1188, %v1136
        %v1190 = vpop.permute.xlu0 %1189
        %v1192 = vmul.f32 %v1125, %v1140
        %v1193 = vmul.f32 %v1124, %v1145
        %v1194 = vmul.f32 %v1123, %v1150
        %v1195 = vmul.f32 %v1122, %v1155
        %v1196 = vmul.f32 %v1121, %v1160
        %v1197 = vmul.f32 %v1120, %v1165
        %v1198 = vmul.f32 %v1119, %v1170
        %v1199 = vmul.f32 %v1118, %v1175
        %v1200 = vmul.f32 %v1117, %v1180
        %v1201 = vmul.f32 %v1116, %v1185
        %v1202 = vmul.f32 %v1115, %v1190
        %v1203 = vlaneseq
        %v1204 = vshrl.u32 %v1203, 7
        %v1205 = vsub.s32 0, %v1204
        %v1206 = vrot.slane %v1085, %v1205
        %v1207 = vmul.f32 %v1192, %v1206
        %v1208 = vmul.f32 %v1193, %v1206
        %v1209 = vmul.f32 %v1194, %v1206
        %v1210 = vmul.f32 %v1195, %v1206
        %v1211 = vmul.f32 %v1196, %v1206
        %v1212 = vmul.f32 %v1197, %v1206
        %v1213 = vmul.f32 %v1198, %v1206
        %v1214 = vmul.f32 %v1199, %v1206
        %v1215 = vmul.f32 %v1200, %v1206
        %v1216 = vmul.f32 %v1201, %v1206
        %v1217 = vmul.f32 %v1202, %v1206
        %v1218 = vadd.f32 %v1090, %v1207
        %v1219 = vadd.f32 %v1091, %v1208
        %v1220 = vadd.f32 %v1092, %v1209
        %v1221 = vadd.f32 %v1093, %v1210
        %v1222 = vadd.f32 %v1094, %v1211
        %v1223 = vadd.f32 %v1095, %v1212
        %v1224 = vadd.f32 %v1096, %v1213
        %v1225 = vadd.f32 %v1097, %v1214
        %v1226 = vadd.f32 %v1098, %v1215
        %v1227 = vadd.f32 %v1099, %v1216
        %v1228 = vadd.f32 %v1100, %v1217
        %v1229 = vrot.slane %v1074, 6
        %v1230 = vrot.slane %v1075, 6
        %v1231 = vrot.slane %v1076, 6
        %v1232 = vrot.slane %v1077, 6
        %v1233 = vrot.slane %v1078, 6
        %v1234 = vrot.slane %v1079, 6
        %v1235 = vrot.slane %v1080, 6
        %v1236 = vrot.slane %v1081, 6
        %v1237 = vrot.slane %v1082, 6
        %v1238 = vrot.slane %v1083, 6
        %v1239 = vrot.slane %v1084, 6
        %vm1240 = vcmp.lt.s32.totalorder %v1113, 2
        %v1241 = vsel %vm1240, %v1238, %v1239
        %v1242 = vsel %vm1240, %v1237, %v1238
        %v1243 = vsel %vm1240, %v1236, %v1237
        %v1244 = vsel %vm1240, %v1235, %v1236
        %v1245 = vsel %vm1240, %v1234, %v1235
        %v1246 = vsel %vm1240, %v1233, %v1234
        %v1247 = vsel %vm1240, %v1232, %v1233
        %v1248 = vsel %vm1240, %v1231, %v1232
        %v1249 = vsel %vm1240, %v1230, %v1231
        %v1250 = vsel %vm1240, %v1229, %v1230
        %v1251 = vsel %vm1240, %v1239, %v1229
        %1252 = vset.pattern.permute.xlu0 1
        %1253 = vperm.xlu0 %1252, %v1126
        %v1254 = vpop.permute.xlu0 %1253
        %1256 = vset.pattern.permute.xlu0 1
        %1257 = vperm.xlu0 %1256, %v1127
        %v1258 = vpop.permute.xlu0 %1257
        %1260 = vset.pattern.permute.xlu0 1
        %1261 = vperm.xlu0 %1260, %v1128
        %v1262 = vpop.permute.xlu0 %1261
        %1264 = vset.pattern.permute.xlu0 1
        %1265 = vperm.xlu0 %1264, %v1129
        %v1266 = vpop.permute.xlu0 %1265
        %1268 = vset.pattern.permute.xlu0 1
        %1269 = vperm.xlu0 %1268, %v1130
        %v1270 = vpop.permute.xlu0 %1269
        %1272 = vset.pattern.permute.xlu0 1
        %1273 = vperm.xlu0 %1272, %v1131
        %v1274 = vpop.permute.xlu0 %1273
        %1276 = vset.pattern.permute.xlu0 1
        %1277 = vperm.xlu0 %1276, %v1132
        %v1278 = vpop.permute.xlu0 %1277
        %1280 = vset.pattern.permute.xlu0 1
        %1281 = vperm.xlu0 %1280, %v1133
        %v1282 = vpop.permute.xlu0 %1281
        %1284 = vset.pattern.permute.xlu0 1
        %1285 = vperm.xlu0 %1284, %v1134
        %v1286 = vpop.permute.xlu0 %1285
        %1288 = vset.pattern.permute.xlu0 1
        %1289 = vperm.xlu0 %1288, %v1135
        %v1290 = vpop.permute.xlu0 %1289
        %1292 = vset.pattern.permute.xlu0 1
        %1293 = vperm.xlu0 %1292, %v1136
        %v1294 = vpop.permute.xlu0 %1293
        %v1296 = vmul.f32 %v1251, %v1254
        %v1297 = vmul.f32 %v1250, %v1258
        %v1298 = vmul.f32 %v1249, %v1262
        %v1299 = vmul.f32 %v1248, %v1266
        %v1300 = vmul.f32 %v1247, %v1270
        %v1301 = vmul.f32 %v1246, %v1274
        %v1302 = vmul.f32 %v1245, %v1278
        %v1303 = vmul.f32 %v1244, %v1282
        %v1304 = vmul.f32 %v1243, %v1286
        %v1305 = vmul.f32 %v1242, %v1290
        %v1306 = vmul.f32 %v1241, %v1294
        %v1307 = vlaneseq
        %v1308 = vshrl.u32 %v1307, 7
        %v1309 = vsub.s32 1, %v1308
        %v1310 = vrot.slane %v1085, %v1309
        %v1311 = vmul.f32 %v1296, %v1310
        %v1312 = vmul.f32 %v1297, %v1310
        %v1313 = vmul.f32 %v1298, %v1310
        %v1314 = vmul.f32 %v1299, %v1310
        %v1315 = vmul.f32 %v1300, %v1310
        %v1316 = vmul.f32 %v1301, %v1310
        %v1317 = vmul.f32 %v1302, %v1310
        %v1318 = vmul.f32 %v1303, %v1310
        %v1319 = vmul.f32 %v1304, %v1310
        %v1320 = vmul.f32 %v1305, %v1310
        %v1321 = vmul.f32 %v1306, %v1310
        %v1322 = vadd.f32 %v1218, %v1311
        %v1323 = vadd.f32 %v1219, %v1312
        %v1324 = vadd.f32 %v1220, %v1313
        %v1325 = vadd.f32 %v1221, %v1314
        %v1326 = vadd.f32 %v1222, %v1315
        %v1327 = vadd.f32 %v1223, %v1316
        %v1328 = vadd.f32 %v1224, %v1317
        %v1329 = vadd.f32 %v1225, %v1318
        %v1330 = vadd.f32 %v1226, %v1319
        %v1331 = vadd.f32 %v1227, %v1320
        %v1332 = vadd.f32 %v1228, %v1321
        %v1333 = vrot.slane %v1074, 7
        %v1334 = vrot.slane %v1075, 7
        %v1335 = vrot.slane %v1076, 7
        %v1336 = vrot.slane %v1077, 7
        %v1337 = vrot.slane %v1078, 7
        %v1338 = vrot.slane %v1079, 7
        %v1339 = vrot.slane %v1080, 7
        %v1340 = vrot.slane %v1081, 7
        %v1341 = vrot.slane %v1082, 7
        %v1342 = vrot.slane %v1083, 7
        %v1343 = vrot.slane %v1084, 7
        %vm1344 = vcmp.lt.s32.totalorder %v1113, 1
        %v1345 = vsel %vm1344, %v1342, %v1343
        %v1346 = vsel %vm1344, %v1341, %v1342
        %v1347 = vsel %vm1344, %v1340, %v1341
        %v1348 = vsel %vm1344, %v1339, %v1340
        %v1349 = vsel %vm1344, %v1338, %v1339
        %v1350 = vsel %vm1344, %v1337, %v1338
        %v1351 = vsel %vm1344, %v1336, %v1337
        %v1352 = vsel %vm1344, %v1335, %v1336
        %v1353 = vsel %vm1344, %v1334, %v1335
        %v1354 = vsel %vm1344, %v1333, %v1334
        %v1355 = vsel %vm1344, %v1343, %v1333
        %1356 = vset.pattern.permute.xlu0 2
        %1357 = vperm.xlu0 %1356, %v1126
        %v1358 = vpop.permute.xlu0 %1357
        %1360 = vset.pattern.permute.xlu0 2
        %1361 = vperm.xlu0 %1360, %v1127
        %v1362 = vpop.permute.xlu0 %1361
        %1364 = vset.pattern.permute.xlu0 2
        %1365 = vperm.xlu0 %1364, %v1128
        %v1366 = vpop.permute.xlu0 %1365
        %1368 = vset.pattern.permute.xlu0 2
        %1369 = vperm.xlu0 %1368, %v1129
        %v1370 = vpop.permute.xlu0 %1369
        %1372 = vset.pattern.permute.xlu0 2
        %1373 = vperm.xlu0 %1372, %v1130
        %v1374 = vpop.permute.xlu0 %1373
        %1376 = vset.pattern.permute.xlu0 2
        %1377 = vperm.xlu0 %1376, %v1131
        %v1378 = vpop.permute.xlu0 %1377
        %1380 = vset.pattern.permute.xlu0 2
        %1381 = vperm.xlu0 %1380, %v1132
        %v1382 = vpop.permute.xlu0 %1381
        %1384 = vset.pattern.permute.xlu0 2
        %1385 = vperm.xlu0 %1384, %v1133
        %v1386 = vpop.permute.xlu0 %1385
        %1388 = vset.pattern.permute.xlu0 2
        %1389 = vperm.xlu0 %1388, %v1134
        %v1390 = vpop.permute.xlu0 %1389
        %1392 = vset.pattern.permute.xlu0 2
        %1393 = vperm.xlu0 %1392, %v1135
        %v1394 = vpop.permute.xlu0 %1393
        %1396 = vset.pattern.permute.xlu0 2
        %1397 = vperm.xlu0 %1396, %v1136
        %v1398 = vpop.permute.xlu0 %1397
        %v1400 = vmul.f32 %v1355, %v1358
        %v1401 = vmul.f32 %v1354, %v1362
        %v1402 = vmul.f32 %v1353, %v1366
        %v1403 = vmul.f32 %v1352, %v1370
        %v1404 = vmul.f32 %v1351, %v1374
        %v1405 = vmul.f32 %v1350, %v1378
        %v1406 = vmul.f32 %v1349, %v1382
        %v1407 = vmul.f32 %v1348, %v1386
        %v1408 = vmul.f32 %v1347, %v1390
        %v1409 = vmul.f32 %v1346, %v1394
        %v1410 = vmul.f32 %v1345, %v1398
        %v1411 = vlaneseq
        %v1412 = vshrl.u32 %v1411, 7
        %v1413 = vsub.s32 2, %v1412
        %v1414 = vrot.slane %v1085, %v1413
        %v1415 = vmul.f32 %v1400, %v1414
        %v1416 = vmul.f32 %v1401, %v1414
        %v1417 = vmul.f32 %v1402, %v1414
        %v1418 = vmul.f32 %v1403, %v1414
        %v1419 = vmul.f32 %v1404, %v1414
        %v1420 = vmul.f32 %v1405, %v1414
        %v1421 = vmul.f32 %v1406, %v1414
        %v1422 = vmul.f32 %v1407, %v1414
        %v1423 = vmul.f32 %v1408, %v1414
        %v1424 = vmul.f32 %v1409, %v1414
        %v1425 = vmul.f32 %v1410, %v1414
        %v1426 = vadd.f32 %v1322, %v1415
        %v1427 = vadd.f32 %v1323, %v1416
        %v1428 = vadd.f32 %v1324, %v1417
        %v1429 = vadd.f32 %v1325, %v1418
        %v1430 = vadd.f32 %v1326, %v1419
        %v1431 = vadd.f32 %v1327, %v1420
        %v1432 = vadd.f32 %v1328, %v1421
        %v1433 = vadd.f32 %v1329, %v1422
        %v1434 = vadd.f32 %v1330, %v1423
        %v1435 = vadd.f32 %v1331, %v1424
        %v1436 = vadd.f32 %v1332, %v1425
        %v1437 = vrot.slane %v1074, 1
        %v1438 = vrot.slane %v1075, 1
        %v1439 = vrot.slane %v1076, 1
        %v1440 = vrot.slane %v1077, 1
        %v1441 = vrot.slane %v1078, 1
        %v1442 = vrot.slane %v1079, 1
        %v1443 = vrot.slane %v1080, 1
        %v1444 = vrot.slane %v1081, 1
        %v1445 = vrot.slane %v1082, 1
        %v1446 = vrot.slane %v1083, 1
        %v1447 = vrot.slane %v1084, 1
        %vm1448 = vcmp.lt.s32.totalorder %v1113, 7
        %v1449 = vsel %vm1448, %v1446, %v1447
        %v1450 = vsel %vm1448, %v1445, %v1446
        %v1451 = vsel %vm1448, %v1444, %v1445
        %v1452 = vsel %vm1448, %v1443, %v1444
        %v1453 = vsel %vm1448, %v1442, %v1443
        %v1454 = vsel %vm1448, %v1441, %v1442
        %v1455 = vsel %vm1448, %v1440, %v1441
        %v1456 = vsel %vm1448, %v1439, %v1440
        %v1457 = vsel %vm1448, %v1438, %v1439
        %v1458 = vsel %vm1448, %v1437, %v1438
        %v1459 = vsel %vm1448, %v1447, %v1437
        %1460 = vset.pattern.permute.xlu0 4
        %1461 = vperm.xlu0 %1460, %v1126
        %v1462 = vpop.permute.xlu0 %1461
        %1464 = vset.pattern.permute.xlu0 4
        %1465 = vperm.xlu0 %1464, %v1127
        %v1466 = vpop.permute.xlu0 %1465
        %1468 = vset.pattern.permute.xlu0 4
        %1469 = vperm.xlu0 %1468, %v1128
        %v1470 = vpop.permute.xlu0 %1469
        %1472 = vset.pattern.permute.xlu0 4
        %1473 = vperm.xlu0 %1472, %v1129
        %v1474 = vpop.permute.xlu0 %1473
        %1476 = vset.pattern.permute.xlu0 4
        %1477 = vperm.xlu0 %1476, %v1130
        %v1478 = vpop.permute.xlu0 %1477
        %1480 = vset.pattern.permute.xlu0 4
        %1481 = vperm.xlu0 %1480, %v1131
        %v1482 = vpop.permute.xlu0 %1481
        %1484 = vset.pattern.permute.xlu0 4
        %1485 = vperm.xlu0 %1484, %v1132
        %v1486 = vpop.permute.xlu0 %1485
        %1488 = vset.pattern.permute.xlu0 4
        %1489 = vperm.xlu0 %1488, %v1133
        %v1490 = vpop.permute.xlu0 %1489
        %1492 = vset.pattern.permute.xlu0 4
        %1493 = vperm.xlu0 %1492, %v1134
        %v1494 = vpop.permute.xlu0 %1493
        %1496 = vset.pattern.permute.xlu0 4
        %1497 = vperm.xlu0 %1496, %v1135
        %v1498 = vpop.permute.xlu0 %1497
        %1500 = vset.pattern.permute.xlu0 4
        %1501 = vperm.xlu0 %1500, %v1136
        %v1502 = vpop.permute.xlu0 %1501
        %v1504 = vmul.f32 %v1458, %v1462
        %v1505 = vmul.f32 %v1457, %v1466
        %v1506 = vmul.f32 %v1456, %v1470
        %v1507 = vmul.f32 %v1455, %v1474
        %v1508 = vmul.f32 %v1454, %v1478
        %v1509 = vmul.f32 %v1453, %v1482
        %v1510 = vmul.f32 %v1452, %v1486
        %v1511 = vmul.f32 %v1451, %v1490
        %v1512 = vmul.f32 %v1450, %v1494
        %v1513 = vmul.f32 %v1449, %v1498
        %v1514 = vmul.f32 %v1459, %v1502
        %v1515 = vlaneseq
        %v1516 = vshrl.u32 %v1515, 7
        %v1517 = vsub.s32 4, %v1516
        %v1518 = vrot.slane %v1085, %v1517
        %v1519 = vmul.f32 %v1504, %v1518
        %v1520 = vmul.f32 %v1505, %v1518
        %v1521 = vmul.f32 %v1506, %v1518
        %v1522 = vmul.f32 %v1507, %v1518
        %v1523 = vmul.f32 %v1508, %v1518
        %v1524 = vmul.f32 %v1509, %v1518
        %v1525 = vmul.f32 %v1510, %v1518
        %v1526 = vmul.f32 %v1511, %v1518
        %v1527 = vmul.f32 %v1512, %v1518
        %v1528 = vmul.f32 %v1513, %v1518
        %v1529 = vmul.f32 %v1514, %v1518
        %v1530 = vadd.f32 %v1426, %v1519
        %v1531 = vadd.f32 %v1427, %v1520
        %v1532 = vadd.f32 %v1428, %v1521
        %v1533 = vadd.f32 %v1429, %v1522
        %v1534 = vadd.f32 %v1430, %v1523
        %v1535 = vadd.f32 %v1431, %v1524
        %v1536 = vadd.f32 %v1432, %v1525
        %v1537 = vadd.f32 %v1433, %v1526
        %v1538 = vadd.f32 %v1434, %v1527
        %v1539 = vadd.f32 %v1435, %v1528
        %v1540 = vadd.f32 %v1436, %v1529
        %v1541 = vrot.slane %v1074, 2
        %v1542 = vrot.slane %v1075, 2
        %v1543 = vrot.slane %v1076, 2
        %v1544 = vrot.slane %v1077, 2
        %v1545 = vrot.slane %v1078, 2
        %v1546 = vrot.slane %v1079, 2
        %v1547 = vrot.slane %v1080, 2
        %v1548 = vrot.slane %v1081, 2
        %v1549 = vrot.slane %v1082, 2
        %v1550 = vrot.slane %v1083, 2
        %v1551 = vrot.slane %v1084, 2
        %vm1552 = vcmp.lt.s32.totalorder %v1113, 6
        %v1553 = vsel %vm1552, %v1550, %v1551
        %v1554 = vsel %vm1552, %v1549, %v1550
        %v1555 = vsel %vm1552, %v1548, %v1549
        %v1556 = vsel %vm1552, %v1547, %v1548
        %v1557 = vsel %vm1552, %v1546, %v1547
        %v1558 = vsel %vm1552, %v1545, %v1546
        %v1559 = vsel %vm1552, %v1544, %v1545
        %v1560 = vsel %vm1552, %v1543, %v1544
        %v1561 = vsel %vm1552, %v1542, %v1543
        %v1562 = vsel %vm1552, %v1541, %v1542
        %v1563 = vsel %vm1552, %v1551, %v1541
        %1564 = vset.pattern.permute.xlu0 5
        %1565 = vperm.xlu0 %1564, %v1126
        %v1566 = vpop.permute.xlu0 %1565
        %1568 = vset.pattern.permute.xlu0 5
        %1569 = vperm.xlu0 %1568, %v1127
        %v1570 = vpop.permute.xlu0 %1569
        %1572 = vset.pattern.permute.xlu0 5
        %1573 = vperm.xlu0 %1572, %v1128
        %v1574 = vpop.permute.xlu0 %1573
        %1576 = vset.pattern.permute.xlu0 5
        %1577 = vperm.xlu0 %1576, %v1129
        %v1578 = vpop.permute.xlu0 %1577
        %1580 = vset.pattern.permute.xlu0 5
        %1581 = vperm.xlu0 %1580, %v1130
        %v1582 = vpop.permute.xlu0 %1581
        %1584 = vset.pattern.permute.xlu0 5
        %1585 = vperm.xlu0 %1584, %v1131
        %v1586 = vpop.permute.xlu0 %1585
        %1588 = vset.pattern.permute.xlu0 5
        %1589 = vperm.xlu0 %1588, %v1132
        %v1590 = vpop.permute.xlu0 %1589
        %1592 = vset.pattern.permute.xlu0 5
        %1593 = vperm.xlu0 %1592, %v1133
        %v1594 = vpop.permute.xlu0 %1593
        %1596 = vset.pattern.permute.xlu0 5
        %1597 = vperm.xlu0 %1596, %v1134
        %v1598 = vpop.permute.xlu0 %1597
        %1600 = vset.pattern.permute.xlu0 5
        %1601 = vperm.xlu0 %1600, %v1135
        %v1602 = vpop.permute.xlu0 %1601
        %1604 = vset.pattern.permute.xlu0 5
        %1605 = vperm.xlu0 %1604, %v1136
        %v1606 = vpop.permute.xlu0 %1605
        %v1608 = vmul.f32 %v1562, %v1566
        %v1609 = vmul.f32 %v1561, %v1570
        %v1610 = vmul.f32 %v1560, %v1574
        %v1611 = vmul.f32 %v1559, %v1578
        %v1612 = vmul.f32 %v1558, %v1582
        %v1613 = vmul.f32 %v1557, %v1586
        %v1614 = vmul.f32 %v1556, %v1590
        %v1615 = vmul.f32 %v1555, %v1594
        %v1616 = vmul.f32 %v1554, %v1598
        %v1617 = vmul.f32 %v1553, %v1602
        %v1618 = vmul.f32 %v1563, %v1606
        %v1619 = vlaneseq
        %v1620 = vshrl.u32 %v1619, 7
        %v1621 = vsub.s32 5, %v1620
        %v1622 = vrot.slane %v1085, %v1621
        %v1623 = vmul.f32 %v1608, %v1622
        %v1624 = vmul.f32 %v1609, %v1622
        %v1625 = vmul.f32 %v1610, %v1622
        %v1626 = vmul.f32 %v1611, %v1622
        %v1627 = vmul.f32 %v1612, %v1622
        %v1628 = vmul.f32 %v1613, %v1622
        %v1629 = vmul.f32 %v1614, %v1622
        %v1630 = vmul.f32 %v1615, %v1622
        %v1631 = vmul.f32 %v1616, %v1622
        %v1632 = vmul.f32 %v1617, %v1622
        %v1633 = vmul.f32 %v1618, %v1622
        %v1634 = vadd.f32 %v1530, %v1623
        %v1635 = vadd.f32 %v1531, %v1624
        %v1636 = vadd.f32 %v1532, %v1625
        %v1637 = vadd.f32 %v1533, %v1626
        %v1638 = vadd.f32 %v1534, %v1627
        %v1639 = vadd.f32 %v1535, %v1628
        %v1640 = vadd.f32 %v1536, %v1629
        %v1641 = vadd.f32 %v1537, %v1630
        %v1642 = vadd.f32 %v1538, %v1631
        %v1643 = vadd.f32 %v1539, %v1632
        %v1644 = vadd.f32 %v1540, %v1633
        %v1645 = vrot.slane %v1074, 3
        %v1646 = vrot.slane %v1075, 3
        %v1647 = vrot.slane %v1076, 3
        %v1648 = vrot.slane %v1077, 3
        %v1649 = vrot.slane %v1078, 3
        %v1650 = vrot.slane %v1079, 3
        %v1651 = vrot.slane %v1080, 3
        %v1652 = vrot.slane %v1081, 3
        %v1653 = vrot.slane %v1082, 3
        %v1654 = vrot.slane %v1083, 3
        %v1655 = vrot.slane %v1084, 3
        %vm1656 = vcmp.lt.s32.totalorder %v1113, 5
        %v1657 = vsel %vm1656, %v1654, %v1655
        %v1658 = vsel %vm1656, %v1653, %v1654
        %v1659 = vsel %vm1656, %v1652, %v1653
        %v1660 = vsel %vm1656, %v1651, %v1652
        %v1661 = vsel %vm1656, %v1650, %v1651
        %v1662 = vsel %vm1656, %v1649, %v1650
        %v1663 = vsel %vm1656, %v1648, %v1649
        %v1664 = vsel %vm1656, %v1647, %v1648
        %v1665 = vsel %vm1656, %v1646, %v1647
        %v1666 = vsel %vm1656, %v1645, %v1646
        %v1667 = vsel %vm1656, %v1655, %v1645
        %1668 = vset.pattern.permute.xlu0 6
        %1669 = vperm.xlu0 %1668, %v1126
        %v1670 = vpop.permute.xlu0 %1669
        %1672 = vset.pattern.permute.xlu0 6
        %1673 = vperm.xlu0 %1672, %v1127
        %v1674 = vpop.permute.xlu0 %1673
        %1676 = vset.pattern.permute.xlu0 6
        %1677 = vperm.xlu0 %1676, %v1128
        %v1678 = vpop.permute.xlu0 %1677
        %1680 = vset.pattern.permute.xlu0 6
        %1681 = vperm.xlu0 %1680, %v1129
        %v1682 = vpop.permute.xlu0 %1681
        %1684 = vset.pattern.permute.xlu0 6
        %1685 = vperm.xlu0 %1684, %v1130
        %v1686 = vpop.permute.xlu0 %1685
        %1688 = vset.pattern.permute.xlu0 6
        %1689 = vperm.xlu0 %1688, %v1131
        %v1690 = vpop.permute.xlu0 %1689
        %1692 = vset.pattern.permute.xlu0 6
        %1693 = vperm.xlu0 %1692, %v1132
        %v1694 = vpop.permute.xlu0 %1693
        %1696 = vset.pattern.permute.xlu0 6
        %1697 = vperm.xlu0 %1696, %v1133
        %v1698 = vpop.permute.xlu0 %1697
        %1700 = vset.pattern.permute.xlu0 6
        %1701 = vperm.xlu0 %1700, %v1134
        %v1702 = vpop.permute.xlu0 %1701
        %1704 = vset.pattern.permute.xlu0 6
        %1705 = vperm.xlu0 %1704, %v1135
        %v1706 = vpop.permute.xlu0 %1705
        %1708 = vset.pattern.permute.xlu0 6
        %1709 = vperm.xlu0 %1708, %v1136
        %v1710 = vpop.permute.xlu0 %1709
        %v1712 = vmul.f32 %v1666, %v1670
        %v1713 = vmul.f32 %v1665, %v1674
        %v1714 = vmul.f32 %v1664, %v1678
        %v1715 = vmul.f32 %v1663, %v1682
        %v1716 = vmul.f32 %v1662, %v1686
        %v1717 = vmul.f32 %v1661, %v1690
        %v1718 = vmul.f32 %v1660, %v1694
        %v1719 = vmul.f32 %v1659, %v1698
        %v1720 = vmul.f32 %v1658, %v1702
        %v1721 = vmul.f32 %v1657, %v1706
        %v1722 = vmul.f32 %v1667, %v1710
        %v1723 = vlaneseq
        %v1724 = vshrl.u32 %v1723, 7
        %v1725 = vsub.s32 6, %v1724
        %v1726 = vrot.slane %v1085, %v1725
        %v1727 = vmul.f32 %v1712, %v1726
        %v1728 = vmul.f32 %v1713, %v1726
        %v1729 = vmul.f32 %v1714, %v1726
        %v1730 = vmul.f32 %v1715, %v1726
        %v1731 = vmul.f32 %v1716, %v1726
        %v1732 = vmul.f32 %v1717, %v1726
        %v1733 = vmul.f32 %v1718, %v1726
        %v1734 = vmul.f32 %v1719, %v1726
        %v1735 = vmul.f32 %v1720, %v1726
        %v1736 = vmul.f32 %v1721, %v1726
        %v1737 = vmul.f32 %v1722, %v1726
        %v1738 = vadd.f32 %v1634, %v1727
        %v1739 = vadd.f32 %v1635, %v1728
        %v1740 = vadd.f32 %v1636, %v1729
        %v1741 = vadd.f32 %v1637, %v1730
        %v1742 = vadd.f32 %v1638, %v1731
        %v1743 = vadd.f32 %v1639, %v1732
        %v1744 = vadd.f32 %v1640, %v1733
        %v1745 = vadd.f32 %v1641, %v1734
        %v1746 = vadd.f32 %v1642, %v1735
        %v1747 = vadd.f32 %v1643, %v1736
        %v1748 = vadd.f32 %v1644, %v1737
        %v1749 = vld [vmem:[%s682] sm:$0x1]
        %v1751 = vlaneseq
        %v1752 = vshrl.u32 %v1751, 7
        %v1753 = vsub.s32 0, %v1752
        %v1754 = vrot.slane %v1749, %v1753
        %v1756 = vadd.f32 %v1738, %v1754
        %v1757 = vadd.f32 %v1739, %v1754
        %v1758 = vadd.f32 %v1740, %v1754
        %v1759 = vadd.f32 %v1741, %v1754
        %v1760 = vadd.f32 %v1742, %v1754
        %v1761 = vadd.f32 %v1743, %v1754
        %v1762 = vadd.f32 %v1744, %v1754
        %v1763 = vadd.f32 %v1745, %v1754
        %v1764 = vadd.f32 %v1746, %v1754
        %v1765 = vadd.f32 %v1747, %v1754
        %v1766 = vadd.f32 %v1748, %v1754
        %v1767 = vld [vmem:[%s685] sm:$0x1]
        %v1768 = vld [vmem:[%s688] sm:$0x1]
        %1769 = vadd.xlane.f32.xlu0 %v1756
        %v1770 = vpop.xlane.xlu0 %1769
        %1771 = vadd.xlane.f32.xlu0 %v1757
        %v1772 = vpop.xlane.xlu0 %1771
        %1773 = vadd.xlane.f32.xlu0 %v1758
        %v1774 = vpop.xlane.xlu0 %1773
        %1775 = vadd.xlane.f32.xlu0 %v1759
        %v1776 = vpop.xlane.xlu0 %1775
        %1777 = vadd.xlane.f32.xlu0 %v1760
        %v1778 = vpop.xlane.xlu0 %1777
        %1779 = vadd.xlane.f32.xlu0 %v1761
        %v1780 = vpop.xlane.xlu0 %1779
        %1781 = vadd.xlane.f32.xlu0 %v1762
        %v1782 = vpop.xlane.xlu0 %1781
        %1783 = vadd.xlane.f32.xlu0 %v1763
        %v1784 = vpop.xlane.xlu0 %1783
        %1785 = vadd.xlane.f32.xlu0 %v1764
        %v1786 = vpop.xlane.xlu0 %1785
        %1787 = vadd.xlane.f32.xlu0 %v1765
        %v1788 = vpop.xlane.xlu0 %1787
        %1789 = vadd.xlane.f32.xlu0 %v1766
        %v1790 = vpop.xlane.xlu0 %1789
        %v1791 = vrcp.pop 128.0
        %v1792 = vmul.f32 %v1770, %v1791
        %v1793 = vmul.f32 %v1772, %v1791
        %v1794 = vmul.f32 %v1774, %v1791
        %v1795 = vmul.f32 %v1776, %v1791
        %v1796 = vmul.f32 %v1778, %v1791
        %v1797 = vmul.f32 %v1780, %v1791
        %v1798 = vmul.f32 %v1782, %v1791
        %v1799 = vmul.f32 %v1784, %v1791
        %v1800 = vmul.f32 %v1786, %v1791
        %v1801 = vmul.f32 %v1788, %v1791
        %v1802 = vmul.f32 %v1790, %v1791
        %v1803 = vsub.f32 %v1756, %v1792
        %v1804 = vsub.f32 %v1757, %v1793
        %v1805 = vsub.f32 %v1758, %v1794
        %v1806 = vsub.f32 %v1759, %v1795
        %v1807 = vsub.f32 %v1760, %v1796
        %v1808 = vsub.f32 %v1761, %v1797
        %v1809 = vsub.f32 %v1762, %v1798
        %v1810 = vsub.f32 %v1763, %v1799
        %v1811 = vsub.f32 %v1764, %v1800
        %v1812 = vsub.f32 %v1765, %v1801
        %v1813 = vsub.f32 %v1766, %v1802
        %v1814 = vmul.f32 %v1803, %v1803
        %v1815 = vmul.f32 %v1804, %v1804
        %v1816 = vmul.f32 %v1805, %v1805
        %v1817 = vmul.f32 %v1806, %v1806
        %v1818 = vmul.f32 %v1807, %v1807
        %v1819 = vmul.f32 %v1808, %v1808
        %v1820 = vmul.f32 %v1809, %v1809
        %v1821 = vmul.f32 %v1810, %v1810
        %v1822 = vmul.f32 %v1811, %v1811
        %v1823 = vmul.f32 %v1812, %v1812
        %v1824 = vmul.f32 %v1813, %v1813
        %1825 = vadd.xlane.f32.xlu0 %v1814
        %v1826 = vpop.xlane.xlu0 %1825
        %1827 = vadd.xlane.f32.xlu0 %v1815
        %v1828 = vpop.xlane.xlu0 %1827
        %1829 = vadd.xlane.f32.xlu0 %v1816
        %v1830 = vpop.xlane.xlu0 %1829
        %1831 = vadd.xlane.f32.xlu0 %v1817
        %v1832 = vpop.xlane.xlu0 %1831
        %1833 = vadd.xlane.f32.xlu0 %v1818
        %v1834 = vpop.xlane.xlu0 %1833
        %1835 = vadd.xlane.f32.xlu0 %v1819
        %v1836 = vpop.xlane.xlu0 %1835
        %1837 = vadd.xlane.f32.xlu0 %v1820
        %v1838 = vpop.xlane.xlu0 %1837
        %1839 = vadd.xlane.f32.xlu0 %v1821
        %v1840 = vpop.xlane.xlu0 %1839
        %1841 = vadd.xlane.f32.xlu0 %v1822
        %v1842 = vpop.xlane.xlu0 %1841
        %1843 = vadd.xlane.f32.xlu0 %v1823
        %v1844 = vpop.xlane.xlu0 %1843
        %1845 = vadd.xlane.f32.xlu0 %v1824
        %v1846 = vpop.xlane.xlu0 %1845
        %v1847 = vmul.f32 %v1826, %v1791
        %v1848 = vmul.f32 %v1828, %v1791
        %v1849 = vmul.f32 %v1830, %v1791
        %v1850 = vmul.f32 %v1832, %v1791
        %v1851 = vmul.f32 %v1834, %v1791
        %v1852 = vmul.f32 %v1836, %v1791
        %v1853 = vmul.f32 %v1838, %v1791
        %v1854 = vmul.f32 %v1840, %v1791
        %v1855 = vmul.f32 %v1842, %v1791
        %v1856 = vmul.f32 %v1844, %v1791
        %v1857 = vmul.f32 %v1846, %v1791
        %v1858 = vadd.f32 %v1847, 1e-06
        %v1859 = vadd.f32 %v1848, 1e-06
        %v1860 = vadd.f32 %v1849, 1e-06
        %v1861 = vadd.f32 %v1850, 1e-06
        %v1862 = vadd.f32 %v1851, 1e-06
        %v1863 = vadd.f32 %v1852, 1e-06
        %v1864 = vadd.f32 %v1853, 1e-06
        %v1865 = vadd.f32 %v1854, 1e-06
        %v1866 = vadd.f32 %v1855, 1e-06
        %v1867 = vadd.f32 %v1856, 1e-06
        %v1868 = vadd.f32 %v1857, 1e-06
        %v1869 = vrsqrt.pop %v1858
        %v1870 = vrsqrt.pop %v1859
        %v1871 = vrsqrt.pop %v1860
        %v1872 = vrsqrt.pop %v1861
        %v1873 = vrsqrt.pop %v1862
        %v1874 = vrsqrt.pop %v1863
        %v1875 = vrsqrt.pop %v1864
        %v1876 = vrsqrt.pop %v1865
        %v1877 = vrsqrt.pop %v1866
        %v1878 = vrsqrt.pop %v1867
        %v1879 = vrsqrt.pop %v1868
        %v1880 = vmul.f32 %v1803, %v1869
        %v1881 = vmul.f32 %v1804, %v1870
        %v1882 = vmul.f32 %v1805, %v1871
        %v1883 = vmul.f32 %v1806, %v1872
        %v1884 = vmul.f32 %v1807, %v1873
        %v1885 = vmul.f32 %v1808, %v1874
        %v1886 = vmul.f32 %v1809, %v1875
        %v1887 = vmul.f32 %v1810, %v1876
        %v1888 = vmul.f32 %v1811, %v1877
        %v1889 = vmul.f32 %v1812, %v1878
        %v1890 = vmul.f32 %v1813, %v1879
        %v1892 = vlaneseq
        %v1893 = vshrl.u32 %v1892, 7
        %v1894 = vsub.s32 0, %v1893
        %v1895 = vrot.slane %v1767, %v1894
        %v1897 = vmul.f32 %v1880, %v1895
        %v1898 = vmul.f32 %v1881, %v1895
        %v1899 = vmul.f32 %v1882, %v1895
        %v1900 = vmul.f32 %v1883, %v1895
        %v1901 = vmul.f32 %v1884, %v1895
        %v1902 = vmul.f32 %v1885, %v1895
        %v1903 = vmul.f32 %v1886, %v1895
        %v1904 = vmul.f32 %v1887, %v1895
        %v1905 = vmul.f32 %v1888, %v1895
        %v1906 = vmul.f32 %v1889, %v1895
        %v1907 = vmul.f32 %v1890, %v1895
        %v1909 = vlaneseq
        %v1910 = vshrl.u32 %v1909, 7
        %v1911 = vsub.s32 0, %v1910
        %v1912 = vrot.slane %v1768, %v1911
        %v1914 = vadd.f32 %v1897, %v1912
        %v1915 = vadd.f32 %v1898, %v1912
        %v1916 = vadd.f32 %v1899, %v1912
        %v1917 = vadd.f32 %v1900, %v1912
        %v1918 = vadd.f32 %v1901, %v1912
        %v1919 = vadd.f32 %v1902, %v1912
        %v1920 = vadd.f32 %v1903, %v1912
        %v1921 = vadd.f32 %v1904, %v1912
        %v1922 = vadd.f32 %v1905, %v1912
        %v1923 = vadd.f32 %v1906, %v1912
        %v1924 = vadd.f32 %v1907, %v1912
        %v1925 = vpack.c.bf16 %v1915, %v1914
        %v1926 = vpack.c.bf16 %v1917, %v1916
        %v1927 = vpack.c.bf16 %v1919, %v1918
        %v1928 = vpack.c.bf16 %v1921, %v1920
        %v1929 = vpack.c.bf16 %v1923, %v1922
        %v1930 = vpack.c.bf16 %v1924, %v1924
        %v1931 = vld [vmem:[%s593] sm:$0xff]
        %v1932 = vld [vmem:[%s593 + $0x8] sm:$0xff]
        %v1933 = vld [vmem:[%s593 + $0x10] sm:$0xff]
        %v1934 = vld [vmem:[%s593 + $0x18] sm:$0xff]
        %v1935 = vld [vmem:[%s593 + $0x20] sm:$0xff]
        %v1936 = vld [vmem:[%s593 + $0x28] sm:$0xff]
        %v1937 = vld [vmem:[%s593 + $0x30] sm:$0xff]
        %v1938 = vld [vmem:[%s593 + $0x38] sm:$0xff]
        %v1939 = vld [vmem:[%s593 + $0x40] sm:$0xff]
        %v1940 = vld [vmem:[%s593 + $0x48] sm:$0xff]
        %v1941 = vld [vmem:[%s593 + $0x50] sm:$0xff]
        %v1942 = vld [vmem:[%s593 + $0x58] sm:$0xff]
        %v1943 = vld [vmem:[%s593 + $0x60] sm:$0xff]
        %v1944 = vld [vmem:[%s593 + $0x68] sm:$0xff]
        %v1945 = vld [vmem:[%s593 + $0x70] sm:$0xff]
        %v1946 = vld [vmem:[%s593 + $0x78] sm:$0xff]
        %v1947 = vld [vmem:[%s692] sm:$0x3]
        %v1949 = vlaneseq
        %v1950 = vshrl.u32 %v1949, 7
        %v1951 = vsub.s32 0, %v1950
        %v1952 = vrot.slane %v1947, %v1951
        %v1953 = vlaneseq
        %v1954 = vshrl.u32 %v1953, 7
        %v1955 = vsub.s32 1, %v1954
        %v1956 = vrot.slane %v1947, %v1955
        %v1975 = vunpack.c.l.b16 %v1931
        %v1976 = vunpack.c.h.b16 %v1931
        %v1977 = vunpack.c.l.b16 %v1932
        %v1978 = vunpack.c.h.b16 %v1932
        %v1979 = vunpack.c.l.b16 %v1933
        %v1980 = vunpack.c.h.b16 %v1933
        %v1981 = vunpack.c.l.b16 %v1934
        %v1982 = vunpack.c.h.b16 %v1934
        %v1983 = vunpack.c.l.b16 %v1935
        %v1984 = vunpack.c.h.b16 %v1935
        %v1985 = vunpack.c.l.b16 %v1936
        %v1986 = vunpack.c.h.b16 %v1936
        %v1987 = vunpack.c.l.b16 %v1937
        %v1988 = vunpack.c.h.b16 %v1937
        %v1989 = vunpack.c.l.b16 %v1938
        %v1990 = vunpack.c.h.b16 %v1938
        %v1991 = vunpack.c.l.b16 %v1939
        %v1992 = vunpack.c.h.b16 %v1939
        %v1993 = vunpack.c.l.b16 %v1940
        %v1994 = vunpack.c.h.b16 %v1940
        %v1995 = vunpack.c.l.b16 %v1941
        %v1996 = vunpack.c.h.b16 %v1941
        %v1997 = vunpack.c.l.b16 %v1942
        %v1998 = vunpack.c.h.b16 %v1942
        %v1999 = vunpack.c.l.b16 %v1943
        %v2000 = vunpack.c.h.b16 %v1943
        %v2001 = vunpack.c.l.b16 %v1944
        %v2002 = vunpack.c.h.b16 %v1944
        %v2003 = vunpack.c.l.b16 %v1945
        %v2004 = vunpack.c.h.b16 %v1945
        %v2005 = vunpack.c.l.b16 %v1946
        %v2006 = vunpack.c.h.b16 %v1946
        %v2007 = vpack.c.b16 %v1977, %v1975
        %v2008 = vpack.c.b16 %v1978, %v1976
        %v2009 = vpack.c.b16 %v1981, %v1979
        %v2010 = vpack.c.b16 %v1982, %v1980
        %v2011 = vpack.c.b16 %v1985, %v1983
        %v2012 = vpack.c.b16 %v1986, %v1984
        %v2013 = vpack.c.b16 %v1989, %v1987
        %v2014 = vpack.c.b16 %v1990, %v1988
        %v2015 = vpack.c.b16 %v1993, %v1991
        %v2016 = vpack.c.b16 %v1994, %v1992
        %v2017 = vpack.c.b16 %v1997, %v1995
        %v2018 = vpack.c.b16 %v1998, %v1996
        %v2019 = vpack.c.b16 %v2001, %v1999
        %v2020 = vpack.c.b16 %v2002, %v2000
        %v2021 = vpack.c.b16 %v2005, %v2003
        %v2022 = vpack.c.b16 %v2006, %v2004
        %2039 = vmatprep.subr.bf16.mxu0 %v2022
        %2040 = vmatpush1.bf16.msra.mxu0 %v2021
        %2041 = vmatprep.subr.bf16.mxu0 %v2020
        %2042 = vmatpush1.bf16.msra.mxu0 %v2019
        %2043 = vmatprep.subr.bf16.mxu0 %v2018
        %2044 = vmatpush1.bf16.msra.mxu0 %v2017
        %2045 = vmatprep.subr.bf16.mxu0 %v2016
        %2046 = vmatpush1.bf16.msra.mxu0 %v2015
        %2047 = vmatprep.subr.bf16.mxu0 %v2014
        %2048 = vmatpush1.bf16.msra.mxu0 %v2013
        %2049 = vmatprep.subr.bf16.mxu0 %v2012
        %2050 = vmatpush1.bf16.msra.mxu0 %v2011
        %2051 = vmatprep.subr.bf16.mxu0 %v2010
        %2052 = vmatpush1.bf16.msra.mxu0 %v2009
        %2053 = vmatprep.subr.bf16.mxu0 %v2008
        %2054 = vmatpush1.bf16.msra.mxu0 %v2007
        %2055 = vmatprep.subr.bf16.mxu0 0
        %2056 = vmatpush2.bf16.msra.mxu0 0
        %2057 = vmatprep.subr.bf16.mxu0 0
        %2058 = vmatpush2.bf16.msra.mxu0 0
        %2059 = vmatprep.subr.bf16.mxu0 0
        %2060 = vmatpush2.bf16.msra.mxu0 0
        %2061 = vmatprep.subr.bf16.mxu0 0
        %2062 = vmatpush2.bf16.msra.mxu0 0
        %2063 = vmatprep.subr.bf16.mxu0 0
        %2064 = vmatpush2.bf16.msra.mxu0 0
        %2065 = vmatprep.subr.bf16.mxu0 0
        %2066 = vmatpush2.bf16.msra.mxu0 0
        %2067 = vmatprep.subr.bf16.mxu0 0
        %2068 = vmatpush2.bf16.msra.mxu0 0
        %2069 = vmatprep.subr.bf16.mxu0 0
        %2070 = vmatpush2.bf16.msra.mxu0 0
        %2071 = vmatprep.mubr.bf16.mxu0 0
        %2072 = vmatmul.mubr.bf16.gmra.mxu0 %v1925
        %v2073 = vpop.f32.mrf.mxu0
        %v2074 = vadd.f32 %v1952, %v2073
        %v2075 = vpop.f32.mrf.mxu0
        %v2076 = vadd.f32 %v1956, %v2075
        %v2077 = vpop.f32.mrf.mxu0
        %v2078 = vadd.f32 %v1952, %v2077
        %v2079 = vpop.f32.mrf.mxu0
        %v2080 = vadd.f32 %v1956, %v2079
        %2081 = vmatprep.mubr.bf16.mxu0 0
        %2082 = vmatmul.mubr.bf16.gmra.mxu0 %v1926
        %v2083 = vpop.f32.mrf.mxu0
        %v2084 = vadd.f32 %v1952, %v2083
        %v2085 = vpop.f32.mrf.mxu0
        %v2086 = vadd.f32 %v1956, %v2085
        %v2087 = vpop.f32.mrf.mxu0
        %v2088 = vadd.f32 %v1952, %v2087
        %v2089 = vpop.f32.mrf.mxu0
        %v2090 = vadd.f32 %v1956, %v2089
        %2091 = vmatprep.mubr.bf16.mxu0 0
        %2092 = vmatmul.mubr.bf16.gmra.mxu0 %v1927
        %v2093 = vpop.f32.mrf.mxu0
        %v2094 = vadd.f32 %v1952, %v2093
        %v2095 = vpop.f32.mrf.mxu0
        %v2096 = vadd.f32 %v1956, %v2095
        %v2097 = vpop.f32.mrf.mxu0
        %v2098 = vadd.f32 %v1952, %v2097
        %v2099 = vpop.f32.mrf.mxu0
        %v2100 = vadd.f32 %v1956, %v2099
        %2101 = vmatprep.mubr.bf16.mxu0 0
        %2102 = vmatmul.mubr.bf16.gmra.mxu0 %v1928
        %v2103 = vpop.f32.mrf.mxu0
        %v2104 = vadd.f32 %v1952, %v2103
        %v2105 = vpop.f32.mrf.mxu0
        %v2106 = vadd.f32 %v1956, %v2105
        %v2107 = vpop.f32.mrf.mxu0
        %v2108 = vadd.f32 %v1952, %v2107
        %v2109 = vpop.f32.mrf.mxu0
        %v2110 = vadd.f32 %v1956, %v2109
        %2111 = vmatprep.mubr.bf16.mxu0 0
        %2112 = vmatmul.mubr.bf16.gmra.mxu0 %v1929
        %v2113 = vpop.f32.mrf.mxu0
        %v2114 = vadd.f32 %v1952, %v2113
        %v2115 = vpop.f32.mrf.mxu0
        %v2116 = vadd.f32 %v1956, %v2115
        %v2117 = vpop.f32.mrf.mxu0
        %v2118 = vadd.f32 %v1952, %v2117
        %v2119 = vpop.f32.mrf.mxu0
        %v2120 = vadd.f32 %v1956, %v2119
        %2121 = vmatprep.mubr.bf16.mxu0 0
        %2122 = vmatmul.mubr.bf16.gmra.mxu0 %v1930
        %v2123 = vpop.f32.mrf.mxu0
        %v2124 = vadd.f32 %v1952, %v2123
        %v2125 = vpop.f32.mrf.mxu0
        %v2126 = vadd.f32 %v1956, %v2125
        %v2127 = vpop.f32.mrf.mxu0
        %v2128 = vpop.f32.mrf.mxu0
        %2129 = vdwg.mxu0
        %v2130 = vmul.f32 %v2074, 0.5
        %v2131 = vmul.f32 %v2076, 0.5
        %v2132 = vmul.f32 %v2078, 0.5
        %v2133 = vmul.f32 %v2080, 0.5
        %v2134 = vmul.f32 %v2084, 0.5
        %v2135 = vmul.f32 %v2086, 0.5
        %v2136 = vmul.f32 %v2088, 0.5
        %v2137 = vmul.f32 %v2090, 0.5
        %v2138 = vmul.f32 %v2094, 0.5
        %v2139 = vmul.f32 %v2096, 0.5
        %v2140 = vmul.f32 %v2098, 0.5
        %v2141 = vmul.f32 %v2100, 0.5
        %v2142 = vmul.f32 %v2104, 0.5
        %v2143 = vmul.f32 %v2106, 0.5
        %v2144 = vmul.f32 %v2108, 0.5
        %v2145 = vmul.f32 %v2110, 0.5
        %v2146 = vmul.f32 %v2114, 0.5
        %v2147 = vmul.f32 %v2116, 0.5
        %v2148 = vmul.f32 %v2118, 0.5
        %v2149 = vmul.f32 %v2120, 0.5
        %v2150 = vmul.f32 %v2124, 0.5
        %v2151 = vmul.f32 %v2126, 0.5
        %v2152 = vmul.f32 %v2074, 0.044715
        %v2153 = vmul.f32 %v2076, 0.044715
        %v2154 = vmul.f32 %v2078, 0.044715
        %v2155 = vmul.f32 %v2080, 0.044715
        %v2156 = vmul.f32 %v2084, 0.044715
        %v2157 = vmul.f32 %v2086, 0.044715
        %v2158 = vmul.f32 %v2088, 0.044715
        %v2159 = vmul.f32 %v2090, 0.044715
        %v2160 = vmul.f32 %v2094, 0.044715
        %v2161 = vmul.f32 %v2096, 0.044715
        %v2162 = vmul.f32 %v2098, 0.044715
        %v2163 = vmul.f32 %v2100, 0.044715
        %v2164 = vmul.f32 %v2104, 0.044715
        %v2165 = vmul.f32 %v2106, 0.044715
        %v2166 = vmul.f32 %v2108, 0.044715
        %v2167 = vmul.f32 %v2110, 0.044715
        %v2168 = vmul.f32 %v2114, 0.044715
        %v2169 = vmul.f32 %v2116, 0.044715
        %v2170 = vmul.f32 %v2118, 0.044715
        %v2171 = vmul.f32 %v2120, 0.044715
        %v2172 = vmul.f32 %v2124, 0.044715
        %v2173 = vmul.f32 %v2126, 0.044715
        %v2174 = vmul.f32 %v2152, %v2074
        %v2175 = vmul.f32 %v2153, %v2076
        %v2176 = vmul.f32 %v2154, %v2078
        %v2177 = vmul.f32 %v2155, %v2080
        %v2178 = vmul.f32 %v2156, %v2084
        %v2179 = vmul.f32 %v2157, %v2086
        %v2180 = vmul.f32 %v2158, %v2088
        %v2181 = vmul.f32 %v2159, %v2090
        %v2182 = vmul.f32 %v2160, %v2094
        %v2183 = vmul.f32 %v2161, %v2096
        %v2184 = vmul.f32 %v2162, %v2098
        %v2185 = vmul.f32 %v2163, %v2100
        %v2186 = vmul.f32 %v2164, %v2104
        %v2187 = vmul.f32 %v2165, %v2106
        %v2188 = vmul.f32 %v2166, %v2108
        %v2189 = vmul.f32 %v2167, %v2110
        %v2190 = vmul.f32 %v2168, %v2114
        %v2191 = vmul.f32 %v2169, %v2116
        %v2192 = vmul.f32 %v2170, %v2118
        %v2193 = vmul.f32 %v2171, %v2120
        %v2194 = vmul.f32 %v2172, %v2124
        %v2195 = vmul.f32 %v2173, %v2126
        %v2196 = vmul.f32 %v2174, %v2074
        %v2197 = vmul.f32 %v2175, %v2076
        %v2198 = vmul.f32 %v2176, %v2078
        %v2199 = vmul.f32 %v2177, %v2080
        %v2200 = vmul.f32 %v2178, %v2084
        %v2201 = vmul.f32 %v2179, %v2086
        %v2202 = vmul.f32 %v2180, %v2088
        %v2203 = vmul.f32 %v2181, %v2090
        %v2204 = vmul.f32 %v2182, %v2094
        %v2205 = vmul.f32 %v2183, %v2096
        %v2206 = vmul.f32 %v2184, %v2098
        %v2207 = vmul.f32 %v2185, %v2100
        %v2208 = vmul.f32 %v2186, %v2104
        %v2209 = vmul.f32 %v2187, %v2106
        %v2210 = vmul.f32 %v2188, %v2108
        %v2211 = vmul.f32 %v2189, %v2110
        %v2212 = vmul.f32 %v2190, %v2114
        %v2213 = vmul.f32 %v2191, %v2116
        %v2214 = vmul.f32 %v2192, %v2118
        %v2215 = vmul.f32 %v2193, %v2120
        %v2216 = vmul.f32 %v2194, %v2124
        %v2217 = vmul.f32 %v2195, %v2126
        %v2218 = vadd.f32 %v2074, %v2196
        %v2219 = vadd.f32 %v2076, %v2197
        %v2220 = vadd.f32 %v2078, %v2198
        %v2221 = vadd.f32 %v2080, %v2199
        %v2222 = vadd.f32 %v2084, %v2200
        %v2223 = vadd.f32 %v2086, %v2201
        %v2224 = vadd.f32 %v2088, %v2202
        %v2225 = vadd.f32 %v2090, %v2203
        %v2226 = vadd.f32 %v2094, %v2204
        %v2227 = vadd.f32 %v2096, %v2205
        %v2228 = vadd.f32 %v2098, %v2206
        %v2229 = vadd.f32 %v2100, %v2207
        %v2230 = vadd.f32 %v2104, %v2208
        %v2231 = vadd.f32 %v2106, %v2209
        %v2232 = vadd.f32 %v2108, %v2210
        %v2233 = vadd.f32 %v2110, %v2211
        %v2234 = vadd.f32 %v2114, %v2212
        %v2235 = vadd.f32 %v2116, %v2213
        %v2236 = vadd.f32 %v2118, %v2214
        %v2237 = vadd.f32 %v2120, %v2215
        %v2238 = vadd.f32 %v2124, %v2216
        %v2239 = vadd.f32 %v2126, %v2217
        %v2240 = vmul.f32 %v2218, 0.7978846
        %v2241 = vmul.f32 %v2219, 0.7978846
        %v2242 = vmul.f32 %v2220, 0.7978846
        %v2243 = vmul.f32 %v2221, 0.7978846
        %v2244 = vmul.f32 %v2222, 0.7978846
        %v2245 = vmul.f32 %v2223, 0.7978846
        %v2246 = vmul.f32 %v2224, 0.7978846
        %v2247 = vmul.f32 %v2225, 0.7978846
        %v2248 = vmul.f32 %v2226, 0.7978846
        %v2249 = vmul.f32 %v2227, 0.7978846
        %v2250 = vmul.f32 %v2228, 0.7978846
        %v2251 = vmul.f32 %v2229, 0.7978846
        %v2252 = vmul.f32 %v2230, 0.7978846
        %v2253 = vmul.f32 %v2231, 0.7978846
        %v2254 = vmul.f32 %v2232, 0.7978846
        %v2255 = vmul.f32 %v2233, 0.7978846
        %v2256 = vmul.f32 %v2234, 0.7978846
        %v2257 = vmul.f32 %v2235, 0.7978846
        %v2258 = vmul.f32 %v2236, 0.7978846
        %v2259 = vmul.f32 %v2237, 0.7978846
        %v2260 = vmul.f32 %v2238, 0.7978846
        %v2261 = vmul.f32 %v2239, 0.7978846
        %v2262 = vtanh.pop %v2240
        %v2263 = vtanh.pop %v2241
        %v2264 = vtanh.pop %v2242
        %v2265 = vtanh.pop %v2243
        %v2266 = vtanh.pop %v2244
        %v2267 = vtanh.pop %v2245
        %v2268 = vtanh.pop %v2246
        %v2269 = vtanh.pop %v2247
        %v2270 = vtanh.pop %v2248
        %v2271 = vtanh.pop %v2249
        %v2272 = vtanh.pop %v2250
        %v2273 = vtanh.pop %v2251
        %v2274 = vtanh.pop %v2252
        %v2275 = vtanh.pop %v2253
        %v2276 = vtanh.pop %v2254
        %v2277 = vtanh.pop %v2255
        %v2278 = vtanh.pop %v2256
        %v2279 = vtanh.pop %v2257
        %v2280 = vtanh.pop %v2258
        %v2281 = vtanh.pop %v2259
        %v2282 = vtanh.pop %v2260
        %v2283 = vtanh.pop %v2261
        %v2284 = vadd.f32 %v2262, 1.0
        %v2285 = vadd.f32 %v2263, 1.0
        %v2286 = vadd.f32 %v2264, 1.0
        %v2287 = vadd.f32 %v2265, 1.0
        %v2288 = vadd.f32 %v2266, 1.0
        %v2289 = vadd.f32 %v2267, 1.0
        %v2290 = vadd.f32 %v2268, 1.0
        %v2291 = vadd.f32 %v2269, 1.0
        %v2292 = vadd.f32 %v2270, 1.0
        %v2293 = vadd.f32 %v2271, 1.0
        %v2294 = vadd.f32 %v2272, 1.0
        %v2295 = vadd.f32 %v2273, 1.0
        %v2296 = vadd.f32 %v2274, 1.0
        %v2297 = vadd.f32 %v2275, 1.0
        %v2298 = vadd.f32 %v2276, 1.0
        %v2299 = vadd.f32 %v2277, 1.0
        %v2300 = vadd.f32 %v2278, 1.0
        %v2301 = vadd.f32 %v2279, 1.0
        %v2302 = vadd.f32 %v2280, 1.0
        %v2303 = vadd.f32 %v2281, 1.0
        %v2304 = vadd.f32 %v2282, 1.0
        %v2305 = vadd.f32 %v2283, 1.0
        %v2306 = vmul.f32 %v2130, %v2284
        %v2307 = vmul.f32 %v2131, %v2285
        %v2308 = vmul.f32 %v2132, %v2286
        %v2309 = vmul.f32 %v2133, %v2287
        %v2310 = vmul.f32 %v2134, %v2288
        %v2311 = vmul.f32 %v2135, %v2289
        %v2312 = vmul.f32 %v2136, %v2290
        %v2313 = vmul.f32 %v2137, %v2291
        %v2314 = vmul.f32 %v2138, %v2292
        %v2315 = vmul.f32 %v2139, %v2293
        %v2316 = vmul.f32 %v2140, %v2294
        %v2317 = vmul.f32 %v2141, %v2295
        %v2318 = vmul.f32 %v2142, %v2296
        %v2319 = vmul.f32 %v2143, %v2297
        %v2320 = vmul.f32 %v2144, %v2298
        %v2321 = vmul.f32 %v2145, %v2299
        %v2322 = vmul.f32 %v2146, %v2300
        %v2323 = vmul.f32 %v2147, %v2301
        %v2324 = vmul.f32 %v2148, %v2302
        %v2325 = vmul.f32 %v2149, %v2303
        %v2326 = vmul.f32 %v2150, %v2304
        %v2327 = vmul.f32 %v2151, %v2305
        %v2328 = vpack.c.bf16 %v2308, %v2306
        %v2329 = vpack.c.bf16 %v2309, %v2307
        %v2330 = vpack.c.bf16 %v2312, %v2310
        %v2331 = vpack.c.bf16 %v2313, %v2311
        %v2332 = vpack.c.bf16 %v2316, %v2314
        %v2333 = vpack.c.bf16 %v2317, %v2315
        %v2334 = vpack.c.bf16 %v2320, %v2318
        %v2335 = vpack.c.bf16 %v2321, %v2319
        %v2336 = vpack.c.bf16 %v2324, %v2322
        %v2337 = vpack.c.bf16 %v2325, %v2323
        %v2338 = vpack.c.bf16 %v2326, %v2326
        %v2339 = vpack.c.bf16 %v2327, %v2327
        %v2340 = vld [vmem:[%s602] sm:$0xf]
        %v2341 = vld [vmem:[%s602 + $0x4] sm:$0xf]
        %v2342 = vld [vmem:[%s602 + $0x8] sm:$0xf]
        %v2343 = vld [vmem:[%s602 + $0xc] sm:$0xf]
        %v2344 = vld [vmem:[%s602 + $0x10] sm:$0xf]
        %v2345 = vld [vmem:[%s602 + $0x14] sm:$0xf]
        %v2346 = vld [vmem:[%s602 + $0x18] sm:$0xf]
        %v2347 = vld [vmem:[%s602 + $0x1c] sm:$0xf]
        %v2348 = vld [vmem:[%s602 + $0x20] sm:$0xf]
        %v2349 = vld [vmem:[%s602 + $0x24] sm:$0xf]
        %v2350 = vld [vmem:[%s602 + $0x28] sm:$0xf]
        %v2351 = vld [vmem:[%s602 + $0x2c] sm:$0xf]
        %v2352 = vld [vmem:[%s602 + $0x30] sm:$0xf]
        %v2353 = vld [vmem:[%s602 + $0x34] sm:$0xf]
        %v2354 = vld [vmem:[%s602 + $0x38] sm:$0xf]
        %v2355 = vld [vmem:[%s602 + $0x3c] sm:$0xf]
        %v2356 = vld [vmem:[%s602 + $0x40] sm:$0xf]
        %v2357 = vld [vmem:[%s602 + $0x44] sm:$0xf]
        %v2358 = vld [vmem:[%s602 + $0x48] sm:$0xf]
        %v2359 = vld [vmem:[%s602 + $0x4c] sm:$0xf]
        %v2360 = vld [vmem:[%s602 + $0x50] sm:$0xf]
        %v2361 = vld [vmem:[%s602 + $0x54] sm:$0xf]
        %v2362 = vld [vmem:[%s602 + $0x58] sm:$0xf]
        %v2363 = vld [vmem:[%s602 + $0x5c] sm:$0xf]
        %v2364 = vld [vmem:[%s602 + $0x60] sm:$0xf]
        %v2365 = vld [vmem:[%s602 + $0x64] sm:$0xf]
        %v2366 = vld [vmem:[%s602 + $0x68] sm:$0xf]
        %v2367 = vld [vmem:[%s602 + $0x6c] sm:$0xf]
        %v2368 = vld [vmem:[%s602 + $0x70] sm:$0xf]
        %v2369 = vld [vmem:[%s602 + $0x74] sm:$0xf]
        %v2370 = vld [vmem:[%s602 + $0x78] sm:$0xf]
        %v2371 = vld [vmem:[%s602 + $0x7c] sm:$0xf]
        %v2372 = vld [vmem:[%s695] sm:$0x1]
        %v2374 = vlaneseq
        %v2375 = vshrl.u32 %v2374, 7
        %v2376 = vsub.s32 0, %v2375
        %v2377 = vrot.slane %v2372, %v2376
        %v2411 = vunpack.c.l.b16 %v2340
        %v2412 = vunpack.c.l.b16 %v2341
        %v2413 = vunpack.c.l.b16 %v2342
        %v2414 = vunpack.c.l.b16 %v2343
        %v2415 = vunpack.c.l.b16 %v2344
        %v2416 = vunpack.c.l.b16 %v2345
        %v2417 = vunpack.c.l.b16 %v2346
        %v2418 = vunpack.c.l.b16 %v2347
        %v2419 = vunpack.c.l.b16 %v2348
        %v2420 = vunpack.c.l.b16 %v2349
        %v2421 = vunpack.c.l.b16 %v2350
        %v2422 = vunpack.c.l.b16 %v2351
        %v2423 = vunpack.c.l.b16 %v2352
        %v2424 = vunpack.c.l.b16 %v2353
        %v2425 = vunpack.c.l.b16 %v2354
        %v2426 = vunpack.c.l.b16 %v2355
        %v2427 = vunpack.c.l.b16 %v2356
        %v2428 = vunpack.c.l.b16 %v2357
        %v2429 = vunpack.c.l.b16 %v2358
        %v2430 = vunpack.c.l.b16 %v2359
        %v2431 = vunpack.c.l.b16 %v2360
        %v2432 = vunpack.c.l.b16 %v2361
        %v2433 = vunpack.c.l.b16 %v2362
        %v2434 = vunpack.c.l.b16 %v2363
        %v2435 = vunpack.c.l.b16 %v2364
        %v2436 = vunpack.c.l.b16 %v2365
        %v2437 = vunpack.c.l.b16 %v2366
        %v2438 = vunpack.c.l.b16 %v2367
        %v2439 = vunpack.c.l.b16 %v2368
        %v2440 = vunpack.c.l.b16 %v2369
        %v2441 = vunpack.c.l.b16 %v2370
        %v2442 = vunpack.c.l.b16 %v2371
        %v2443 = vpack.c.b16 %v2412, %v2411
        %v2444 = vpack.c.b16 %v2414, %v2413
        %v2445 = vpack.c.b16 %v2416, %v2415
        %v2446 = vpack.c.b16 %v2418, %v2417
        %v2447 = vpack.c.b16 %v2420, %v2419
        %v2448 = vpack.c.b16 %v2422, %v2421
        %v2449 = vpack.c.b16 %v2424, %v2423
        %v2450 = vpack.c.b16 %v2426, %v2425
        %v2451 = vpack.c.b16 %v2428, %v2427
        %v2452 = vpack.c.b16 %v2430, %v2429
        %v2453 = vpack.c.b16 %v2432, %v2431
        %v2454 = vpack.c.b16 %v2434, %v2433
        %v2455 = vpack.c.b16 %v2436, %v2435
        %v2456 = vpack.c.b16 %v2438, %v2437
        %v2457 = vpack.c.b16 %v2440, %v2439
        %v2458 = vpack.c.b16 %v2442, %v2441
        %2475 = vmatprep.subr.bf16.mxu0 0
        %2476 = vmatpush1.bf16.msra.mxu0 %v2450
        %2477 = vmatprep.subr.bf16.mxu0 0
        %2478 = vmatpush1.bf16.msra.mxu0 %v2449
        %2479 = vmatprep.subr.bf16.mxu0 0
        %2480 = vmatpush1.bf16.msra.mxu0 %v2448
        %2481 = vmatprep.subr.bf16.mxu0 0
        %2482 = vmatpush1.bf16.msra.mxu0 %v2447
        %2483 = vmatprep.subr.bf16.mxu0 0
        %2484 = vmatpush1.bf16.msra.mxu0 %v2446
        %2485 = vmatprep.subr.bf16.mxu0 0
        %2486 = vmatpush1.bf16.msra.mxu0 %v2445
        %2487 = vmatprep.subr.bf16.mxu0 0
        %2488 = vmatpush1.bf16.msra.mxu0 %v2444
        %2489 = vmatprep.subr.bf16.mxu0 0
        %2490 = vmatpush1.bf16.msra.mxu0 %v2443
        %2491 = vmatprep.subr.bf16.mxu0 0
        %2492 = vmatpush2.bf16.msra.mxu0 %v2458
        %2493 = vmatprep.subr.bf16.mxu0 0
        %2494 = vmatpush2.bf16.msra.mxu0 %v2457
        %2495 = vmatprep.subr.bf16.mxu0 0
        %2496 = vmatpush2.bf16.msra.mxu0 %v2456
        %2497 = vmatprep.subr.bf16.mxu0 0
        %2498 = vmatpush2.bf16.msra.mxu0 %v2455
        %2499 = vmatprep.subr.bf16.mxu0 0
        %2500 = vmatpush2.bf16.msra.mxu0 %v2454
        %2501 = vmatprep.subr.bf16.mxu0 0
        %2502 = vmatpush2.bf16.msra.mxu0 %v2453
        %2503 = vmatprep.subr.bf16.mxu0 0
        %2504 = vmatpush2.bf16.msra.mxu0 %v2452
        %2505 = vmatprep.subr.bf16.mxu0 0
        %2506 = vmatpush2.bf16.msra.mxu0 %v2451
        %2507 = vmatprep.mubr.bf16.mxu0 %v2329
        %2508 = vmatmul.mubr.bf16.gmra.mxu0 %v2328
        %v2509 = vpop.f32.mrf.mxu0
        %v2510 = vadd.f32 %v2377, %v2509
        %v2511 = vpop.f32.mrf.mxu0
        %v2512 = vpop.f32.mrf.mxu0
        %v2513 = vadd.f32 %v2377, %v2512
        %v2514 = vpop.f32.mrf.mxu0
        %2515 = vmatprep.mubr.bf16.mxu0 %v2331
        %2516 = vmatmul.mubr.bf16.gmra.mxu0 %v2330
        %v2517 = vpop.f32.mrf.mxu0
        %v2518 = vadd.f32 %v2377, %v2517
        %v2519 = vpop.f32.mrf.mxu0
        %v2520 = vpop.f32.mrf.mxu0
        %v2521 = vadd.f32 %v2377, %v2520
        %v2522 = vpop.f32.mrf.mxu0
        %2523 = vmatprep.mubr.bf16.mxu0 %v2333
        %2524 = vmatmul.mubr.bf16.gmra.mxu0 %v2332
        %v2525 = vpop.f32.mrf.mxu0
        %v2526 = vadd.f32 %v2377, %v2525
        %v2527 = vpop.f32.mrf.mxu0
        %v2528 = vpop.f32.mrf.mxu0
        %v2529 = vadd.f32 %v2377, %v2528
        %v2530 = vpop.f32.mrf.mxu0
        %2531 = vmatprep.mubr.bf16.mxu0 %v2335
        %2532 = vmatmul.mubr.bf16.gmra.mxu0 %v2334
        %v2533 = vpop.f32.mrf.mxu0
        %v2534 = vadd.f32 %v2377, %v2533
        %v2535 = vpop.f32.mrf.mxu0
        %v2536 = vpop.f32.mrf.mxu0
        %v2537 = vadd.f32 %v2377, %v2536
        %v2538 = vpop.f32.mrf.mxu0
        %2539 = vmatprep.mubr.bf16.mxu0 %v2337
        %2540 = vmatmul.mubr.bf16.gmra.mxu0 %v2336
        %v2541 = vpop.f32.mrf.mxu0
        %v2542 = vadd.f32 %v2377, %v2541
        %v2543 = vpop.f32.mrf.mxu0
        %v2544 = vpop.f32.mrf.mxu0
        %v2545 = vadd.f32 %v2377, %v2544
        %v2546 = vpop.f32.mrf.mxu0
        %2547 = vmatprep.mubr.bf16.mxu0 %v2339
        %2548 = vmatmul.mubr.bf16.gmra.mxu0 %v2338
        %v2549 = vpop.f32.mrf.mxu0
        %v2550 = vadd.f32 %v2377, %v2549
        %v2551 = vpop.f32.mrf.mxu0
        %v2552 = vpop.f32.mrf.mxu0
        %v2553 = vpop.f32.mrf.mxu0
        %2554 = vdwg.mxu0
        %v2555 = vld [vmem:[%s698] sm:$0x1]
        %v2557 = vlaneseq
        %v2558 = vshrl.u32 %v2557, 7
        %v2559 = vsub.s32 0, %v2558
        %v2560 = vrot.slane %v2555, %v2559
        %v2562 = vmul.f32 %v2560, %v2510
        %v2563 = vmul.f32 %v2560, %v2513
        %v2564 = vmul.f32 %v2560, %v2518
        %v2565 = vmul.f32 %v2560, %v2521
        %v2566 = vmul.f32 %v2560, %v2526
        %v2567 = vmul.f32 %v2560, %v2529
        %v2568 = vmul.f32 %v2560, %v2534
        %v2569 = vmul.f32 %v2560, %v2537
        %v2570 = vmul.f32 %v2560, %v2542
        %v2571 = vmul.f32 %v2560, %v2545
        %v2572 = vmul.f32 %v2560, %v2550
        %v2573 = vadd.f32 %v1074, %v2562
        %v2574 = vadd.f32 %v1075, %v2563
        %v2575 = vadd.f32 %v1076, %v2564
        %v2576 = vadd.f32 %v1077, %v2565
        %v2577 = vadd.f32 %v1078, %v2566
        %v2578 = vadd.f32 %v1079, %v2567
        %v2579 = vadd.f32 %v1080, %v2568
        %v2580 = vadd.f32 %v1081, %v2569
        %v2581 = vadd.f32 %v1082, %v2570
        %v2582 = vadd.f32 %v1083, %v2571
        %v2583 = vadd.f32 %v1084, %v2572
        %p2584 = scmp.lt.s32.totalorder %s35, 1
        // Predicated region
        $region101: #{tpu_custom_call.1} parent=87 // pred_check
          %p2585 = pneg %p2584
        $region102: #{tpu_custom_call.1} parent=87 // pred_check_branch
          %2587 = sbr.rel (%p2585) target = $region104
        $region103: #{tpu_custom_call.1} parent=87 // pred_region
          %2588 = vst [vmem:[#allocation7] sm:$0xff] %v2573
          %2589 = vst [vmem:[#allocation7 + $0x8] sm:$0xff] %v2574
          %2590 = vst [vmem:[#allocation7 + $0x10] sm:$0xff] %v2575
          %2591 = vst [vmem:[#allocation7 + $0x18] sm:$0xff] %v2576
          %2592 = vst [vmem:[#allocation7 + $0x20] sm:$0xff] %v2577
          %2593 = vst [vmem:[#allocation7 + $0x28] sm:$0xff] %v2578
          %2594 = vst [vmem:[#allocation7 + $0x30] sm:$0xff] %v2579
          %2595 = vst [vmem:[#allocation7 + $0x38] sm:$0xff] %v2580
          %2596 = vst [vmem:[#allocation7 + $0x40] sm:$0xff] %v2581
          %2597 = vst [vmem:[#allocation7 + $0x48] sm:$0xff] %v2582
          %2598 = vst [vmem:[#allocation7 + $0x50] sm:$0xff] %v2583
        $region104: #{tpu_custom_call.1} parent=87 // pred_fallthru
          _
        %p2599 = scmp.eq.s32.totalorder %s35, 1
        // Predicated region
        $region105: #{tpu_custom_call.1} parent=87 // pred_check
          %p2600 = pneg %p2599
        $region106: #{tpu_custom_call.1} parent=87 // pred_check_branch
          %2602 = sbr.rel (%p2600) target = $region108
        $region107: #{tpu_custom_call.1} parent=87 // pred_region
          %v2603 = vld [vmem:[%s15] sm:$0x1]
          %v2604 = vld [vmem:[%s16] sm:$0x1]
          %2605 = vadd.xlane.f32.xlu0 %v2573
          %v2606 = vpop.xlane.xlu0 %2605
          %2607 = vadd.xlane.f32.xlu0 %v2574
          %v2608 = vpop.xlane.xlu0 %2607
          %2609 = vadd.xlane.f32.xlu0 %v2575
          %v2610 = vpop.xlane.xlu0 %2609
          %2611 = vadd.xlane.f32.xlu0 %v2576
          %v2612 = vpop.xlane.xlu0 %2611
          %2613 = vadd.xlane.f32.xlu0 %v2577
          %v2614 = vpop.xlane.xlu0 %2613
          %2615 = vadd.xlane.f32.xlu0 %v2578
          %v2616 = vpop.xlane.xlu0 %2615
          %2617 = vadd.xlane.f32.xlu0 %v2579
          %v2618 = vpop.xlane.xlu0 %2617
          %2619 = vadd.xlane.f32.xlu0 %v2580
          %v2620 = vpop.xlane.xlu0 %2619
          %2621 = vadd.xlane.f32.xlu0 %v2581
          %v2622 = vpop.xlane.xlu0 %2621
          %2623 = vadd.xlane.f32.xlu0 %v2582
          %v2624 = vpop.xlane.xlu0 %2623
          %2625 = vadd.xlane.f32.xlu0 %v2583
          %v2626 = vpop.xlane.xlu0 %2625
          %v2627 = vmul.f32 %v2606, %v1791
          %v2628 = vmul.f32 %v2608, %v1791
          %v2629 = vmul.f32 %v2610, %v1791
          %v2630 = vmul.f32 %v2612, %v1791
          %v2631 = vmul.f32 %v2614, %v1791
          %v2632 = vmul.f32 %v2616, %v1791
          %v2633 = vmul.f32 %v2618, %v1791
          %v2634 = vmul.f32 %v2620, %v1791
          %v2635 = vmul.f32 %v2622, %v1791
          %v2636 = vmul.f32 %v2624, %v1791
          %v2637 = vmul.f32 %v2626, %v1791
          %v2638 = vsub.f32 %v2573, %v2627
          %v2639 = vsub.f32 %v2574, %v2628
          %v2640 = vsub.f32 %v2575, %v2629
          %v2641 = vsub.f32 %v2576, %v2630
          %v2642 = vsub.f32 %v2577, %v2631
          %v2643 = vsub.f32 %v2578, %v2632
          %v2644 = vsub.f32 %v2579, %v2633
          %v2645 = vsub.f32 %v2580, %v2634
          %v2646 = vsub.f32 %v2581, %v2635
          %v2647 = vsub.f32 %v2582, %v2636
          %v2648 = vsub.f32 %v2583, %v2637
          %v2649 = vmul.f32 %v2638, %v2638
          %v2650 = vmul.f32 %v2639, %v2639
          %v2651 = vmul.f32 %v2640, %v2640
          %v2652 = vmul.f32 %v2641, %v2641
          %v2653 = vmul.f32 %v2642, %v2642
          %v2654 = vmul.f32 %v2643, %v2643
          %v2655 = vmul.f32 %v2644, %v2644
          %v2656 = vmul.f32 %v2645, %v2645
          %v2657 = vmul.f32 %v2646, %v2646
          %v2658 = vmul.f32 %v2647, %v2647
          %v2659 = vmul.f32 %v2648, %v2648
          %2660 = vadd.xlane.f32.xlu0 %v2649
          %v2661 = vpop.xlane.xlu0 %2660
          %2662 = vadd.xlane.f32.xlu0 %v2650
          %v2663 = vpop.xlane.xlu0 %2662
          %2664 = vadd.xlane.f32.xlu0 %v2651
          %v2665 = vpop.xlane.xlu0 %2664
          %2666 = vadd.xlane.f32.xlu0 %v2652
          %v2667 = vpop.xlane.xlu0 %2666
          %2668 = vadd.xlane.f32.xlu0 %v2653
          %v2669 = vpop.xlane.xlu0 %2668
          %2670 = vadd.xlane.f32.xlu0 %v2654
          %v2671 = vpop.xlane.xlu0 %2670
          %2672 = vadd.xlane.f32.xlu0 %v2655
          %v2673 = vpop.xlane.xlu0 %2672
          %2674 = vadd.xlane.f32.xlu0 %v2656
          %v2675 = vpop.xlane.xlu0 %2674
          %2676 = vadd.xlane.f32.xlu0 %v2657
          %v2677 = vpop.xlane.xlu0 %2676
          %2678 = vadd.xlane.f32.xlu0 %v2658
          %v2679 = vpop.xlane.xlu0 %2678
          %2680 = vadd.xlane.f32.xlu0 %v2659
          %v2681 = vpop.xlane.xlu0 %2680
          %v2682 = vmul.f32 %v2661, %v1791
          %v2683 = vmul.f32 %v2663, %v1791
          %v2684 = vmul.f32 %v2665, %v1791
          %v2685 = vmul.f32 %v2667, %v1791
          %v2686 = vmul.f32 %v2669, %v1791
          %v2687 = vmul.f32 %v2671, %v1791
          %v2688 = vmul.f32 %v2673, %v1791
          %v2689 = vmul.f32 %v2675, %v1791
          %v2690 = vmul.f32 %v2677, %v1791
          %v2691 = vmul.f32 %v2679, %v1791
          %v2692 = vmul.f32 %v2681, %v1791
          %v2693 = vadd.f32 %v2682, 1e-06
          %v2694 = vadd.f32 %v2683, 1e-06
          %v2695 = vadd.f32 %v2684, 1e-06
          %v2696 = vadd.f32 %v2685, 1e-06
          %v2697 = vadd.f32 %v2686, 1e-06
          %v2698 = vadd.f32 %v2687, 1e-06
          %v2699 = vadd.f32 %v2688, 1e-06
          %v2700 = vadd.f32 %v2689, 1e-06
          %v2701 = vadd.f32 %v2690, 1e-06
          %v2702 = vadd.f32 %v2691, 1e-06
          %v2703 = vadd.f32 %v2692, 1e-06
          %v2704 = vrsqrt.pop %v2693
          %v2705 = vrsqrt.pop %v2694
          %v2706 = vrsqrt.pop %v2695
          %v2707 = vrsqrt.pop %v2696
          %v2708 = vrsqrt.pop %v2697
          %v2709 = vrsqrt.pop %v2698
          %v2710 = vrsqrt.pop %v2699
          %v2711 = vrsqrt.pop %v2700
          %v2712 = vrsqrt.pop %v2701
          %v2713 = vrsqrt.pop %v2702
          %v2714 = vrsqrt.pop %v2703
          %v2715 = vmul.f32 %v2638, %v2704
          %v2716 = vmul.f32 %v2639, %v2705
          %v2717 = vmul.f32 %v2640, %v2706
          %v2718 = vmul.f32 %v2641, %v2707
          %v2719 = vmul.f32 %v2642, %v2708
          %v2720 = vmul.f32 %v2643, %v2709
          %v2721 = vmul.f32 %v2644, %v2710
          %v2722 = vmul.f32 %v2645, %v2711
          %v2723 = vmul.f32 %v2646, %v2712
          %v2724 = vmul.f32 %v2647, %v2713
          %v2725 = vmul.f32 %v2648, %v2714
          %v2727 = vlaneseq
          %v2728 = vshrl.u32 %v2727, 7
          %v2729 = vsub.s32 0, %v2728
          %v2730 = vrot.slane %v2603, %v2729
          %v2732 = vmul.f32 %v2715, %v2730
          %v2733 = vmul.f32 %v2716, %v2730
          %v2734 = vmul.f32 %v2717, %v2730
          %v2735 = vmul.f32 %v2718, %v2730
          %v2736 = vmul.f32 %v2719, %v2730
          %v2737 = vmul.f32 %v2720, %v2730
          %v2738 = vmul.f32 %v2721, %v2730
          %v2739 = vmul.f32 %v2722, %v2730
          %v2740 = vmul.f32 %v2723, %v2730
          %v2741 = vmul.f32 %v2724, %v2730
          %v2742 = vmul.f32 %v2725, %v2730
          %v2744 = vlaneseq
          %v2745 = vshrl.u32 %v2744, 7
          %v2746 = vsub.s32 0, %v2745
          %v2747 = vrot.slane %v2604, %v2746
          %v2749 = vadd.f32 %v2732, %v2747
          %v2750 = vadd.f32 %v2733, %v2747
          %v2751 = vadd.f32 %v2734, %v2747
          %v2752 = vadd.f32 %v2735, %v2747
          %v2753 = vadd.f32 %v2736, %v2747
          %v2754 = vadd.f32 %v2737, %v2747
          %v2755 = vadd.f32 %v2738, %v2747
          %v2756 = vadd.f32 %v2739, %v2747
          %v2757 = vadd.f32 %v2740, %v2747
          %v2758 = vadd.f32 %v2741, %v2747
          %v2759 = vadd.f32 %v2742, %v2747
          %2760 = vst [vmem:[#allocation7] sm:$0xff] %v2749
          %2761 = vst [vmem:[#allocation7 + $0x8] sm:$0xff] %v2750
          %2762 = vst [vmem:[#allocation7 + $0x10] sm:$0xff] %v2751
          %2763 = vst [vmem:[#allocation7 + $0x18] sm:$0xff] %v2752
          %2764 = vst [vmem:[#allocation7 + $0x20] sm:$0xff] %v2753
          %2765 = vst [vmem:[#allocation7 + $0x28] sm:$0xff] %v2754
          %2766 = vst [vmem:[#allocation7 + $0x30] sm:$0xff] %v2755
          %2767 = vst [vmem:[#allocation7 + $0x38] sm:$0xff] %v2756
          %2768 = vst [vmem:[#allocation7 + $0x40] sm:$0xff] %v2757
          %2769 = vst [vmem:[#allocation7 + $0x48] sm:$0xff] %v2758
          %2770 = vst [vmem:[#allocation7 + $0x50] sm:$0xff] %v2759
        $region108: #{tpu_custom_call.1} parent=87 // pred_fallthru
          _
        // Predicated region
        $region109: #{tpu_custom_call.1} parent=87 // pred_check
          %p2771 = pneg %p450
        $region110: #{tpu_custom_call.1} parent=87 // pred_check_branch
          %2773 = sbr.rel (%p2771) target = $region112
        $region111: #{tpu_custom_call.1} parent=87 // pred_region
          %s2775 = ssub.s32 1408, 1408
          %2776 = vsyncadd [#allocation4], %s2775
          %s2777 = sshll.u32 [#allocation7], 4
          %s2778 = int_to_ptr.vmem [resolvable:$true] %s2777
          %2783 = dma.vmem_to_hbm [thread:$0]  %s2778, 1408, %s17, [#allocation4], 128, 128, 8
        $region112: #{tpu_custom_call.1} parent=87 // pred_fallthru
          _
        // Predicated region
        $region113: #{tpu_custom_call.1} parent=87 // pred_check
          %p2784 = pneg %p450
        $region114: #{tpu_custom_call.1} parent=87 // pred_check_branch
          %2786 = sbr.rel (%p2784) target = $region116
        $region115: #{tpu_custom_call.1} parent=87 // pred_region
          %2787 = dma.done [#allocation4], 1408
        $region116: #{tpu_custom_call.1} parent=87 // pred_fallthru
          _
      $region88: #{tpu_custom_call.1} parent=5 // pred_fallthru
        _
      %p2788 = scmp.le.s32.totalorder 2, %s30
      // Predicated region
      $region117: #{tpu_custom_call.1} parent=5 // pred_check
        %p2789 = pneg %p2788
      $region118: #{tpu_custom_call.1} parent=5 // pred_check_branch
        %2791 = sbr.rel (%p2789) target = $region120
      $region119: #{tpu_custom_call.1} parent=5 // pred_region
        %s2792 = ssub.s32 %s30, 2
      $region120: #{tpu_custom_call.1} parent=5 // pred_fallthru
        _
    $region6: #{tpu_custom_call.1} parent=1 // loop_footer
      %s34 = sadd.s32 1, %s30
    $region7: #{tpu_custom_call.1} parent=1 // loop_footer_branch
      %29 = sbr.rel target = $region3
    $region8: #{tpu_custom_call.1} parent=1 // loop_exit
      _
    %2793 = vsyncpa [#allocation3], 1
    %s2794 = scalar_lea.sflag [#allocation3], 1
    %2795 = vsyncpa %s2794, 1
    %2796 = vsyncpa [#allocation6], 1
    %s2797 = scalar_lea.sflag [#allocation6], 1
    %2798 = vsyncpa %s2797, 1
    %2799 = vsyncpa [#allocation4], 1
    %s2800 = scalar_lea.sflag [#allocation4], 1
    %2801 = vsyncpa %s2800, 1

</llo_original>
